<compile_context>
chip_gen: v7x
topology: tpu7x:2x2x1
jax: 0.10.0
libtpu: 0.0.40
codegen_flags: <defaults>
</compile_context>

<pallas_src>
import jax
import jax.numpy as jnp
import numpy as np
from jax import lax
from jax.experimental import pallas as pl
from jax.experimental.pallas import tpu as pltpu


# ------------------------------ Mish variants -------------------------------
def _mish_ref(x):
    """Exact Mish (reference): x * tanh(softplus(x)), softplus threshold=20."""
    sp = jnp.where(x > 20.0, x, jnp.log1p(jnp.exp(jnp.minimum(x, 20.0))))
    return x * jnp.tanh(sp)


def _mish_fast(x):
    """In-kernel Mish with a single EUP exp + one approx reciprocal.

    tanh(softplus(x)) = ((1+e^x)^2 - 1)/((1+e^x)^2 + 1) = 1 - 2/((1+e^x)^2 + 1)
    Keeps PyTorch's softplus threshold behaviour (returns x for x > 20, where
    tanh(x) == 1 in f32 anyway).
    """
    t = 1.0 + jnp.exp(jnp.minimum(x, 20.0))
    tt = t * t
    tanh_sp = 1.0 - 2.0 * pl.reciprocal(tt + 1.0, approx=True)
    return jnp.where(x > 20.0, x, x * tanh_sp)


# --------------------------------- kernel -----------------------------------
def _resblock_kernel(x_ref, w1_ref, b1_ref, w2_ref, b2_ref, o_ref, hpad_ref):
    # x_ref : (1, H, W, C)  f32
    # w1_ref: (C, Ch)       bf16   (BN1 scale folded in)
    # b1_ref: (1, Ch)       f32
    # w2_ref: (3, 3*Ch, C)  bf16   (BN2 scale folded in; rows = dx*Ch + i)
    # b2_ref: (1, C)        f32
    # hpad_ref: (H+2, W, Ch) f32 scratch, rows 0 and H+1 are the zero halo.
    x = x_ref[0]                                   # (H, W, C) f32
    H, W, C = x.shape
    Ch = w1_ref.shape[1]

    # Zero only the two halo rows. NOTE: done every step (cheap: 2 rows) and
    # not under pl.when(pid == 0), because the batch axis is "parallel" and on
    # multi-TensorCore chips each core has its own scratch instance.
    zrow = jnp.zeros((W, Ch), jnp.float32)
    hpad_ref[0] = zrow
    hpad_ref[H + 1] = zrow

    # ---- BasicConv #1: 1x1 conv (BN scale folded into w1) + bias + Mish ----
    x2d = x.reshape(H * W, C).astype(jnp.bfloat16)
    h = jnp.dot(x2d, w1_ref[...], preferred_element_type=jnp.float32)
    h = _mish_fast(h + b1_ref[...])                # (H*W, Ch) f32

    # Interior write starts at W-offset 0 (H-only padding -> aligned stores).
    hpad_ref[1:H + 1, :, :] = h.reshape(H, W, Ch)

    # ---- BasicConv #2: 3x3 conv as 3 matmuls with K = 3*Ch -----------------
    zcol = jnp.zeros((H, 1, Ch), jnp.float32)
    acc = None
    for dy in range(3):                            # static 3-tap loop
        win = hpad_ref[dy:dy + H, :, :]            # (H, W, Ch), aligned load
        # out[:, c] needs h[:, c-1], h[:, c], h[:, c+1] (zero padded edges)
        w_left = jnp.concatenate([zcol, win[:, :W - 1, :]], axis=1)   # c-1
        w_right = jnp.concatenate([win[:, 1:, :], zcol], axis=1)      # c+1
        cols = jnp.concatenate([w_left, win, w_right], axis=-1)       # (H,W,3Ch)
        cols = cols.reshape(H * W, 3 * Ch).astype(jnp.bfloat16)
        part = jnp.dot(cols, w2_ref[dy],           # only one tap-row live
                       preferred_element_type=jnp.float32)
        acc = part if acc is None else acc + part

    y = _mish_fast(acc + b2_ref[...])              # (H*W, C) f32

    # ---- residual add (kept in f32) ----------------------------------------
    o_ref[0] = x + y.reshape(H, W, C)


# --------------------------------- wrapper ----------------------------------
def resblock_forward(x_nchw, w1_oihw, bn1, w2_oihw, bn2, eps=1e-5):
    """x_nchw: (N, C, H, W) float32. Returns (N, C, H, W) float32."""
    N, C, H, W = x_nchw.shape
    Ch = w1_oihw.shape[0]

    # Fold BatchNorm into per-output-channel scale/bias.
    def fold(bn):
        gamma, beta, mean, var = bn
        scale = gamma / jnp.sqrt(var + eps)
        bias = beta - mean * scale
        return scale, bias

    s1, b1 = fold(bn1)                                   # (Ch,)
    s2, b2 = fold(bn2)                                   # (C,)

    # Layout: NCHW -> NHWC (channels on the lane axis).
    x = jnp.transpose(x_nchw, (0, 2, 3, 1)).astype(jnp.float32)   # (N,H,W,C)

    # Fold BN scales into the conv weights; cast weights to bf16 for the MXU.
    w1 = jnp.transpose(w1_oihw[:, :, 0, 0], (1, 0)) * s1[None, :]   # (C, Ch)
    w1 = w1.astype(jnp.bfloat16)
    w2 = jnp.transpose(w2_oihw, (2, 3, 1, 0)) * s2[None, None, None, :]
    w2 = w2.reshape(3, 3 * Ch, C).astype(jnp.bfloat16)   # (3, 3*Ch, C)

    b1 = b1.reshape(1, Ch).astype(jnp.float32)
    b2 = b2.reshape(1, C).astype(jnp.float32)

    out_nhwc = pl.pallas_call(
        _resblock_kernel,
        out_shape=jax.ShapeDtypeStruct((N, H, W, C), jnp.float32),
        grid_spec=pltpu.PrefetchScalarGridSpec(
            num_scalar_prefetch=0,
            grid=(N,),
            in_specs=[
                pl.BlockSpec((1, H, W, C), lambda n: (n, 0, 0, 0)),
                pl.BlockSpec((C, Ch), lambda n: (0, 0)),
                pl.BlockSpec((1, Ch), lambda n: (0, 0)),
                pl.BlockSpec((3, 3 * Ch, C), lambda n: (0, 0, 0)),
                pl.BlockSpec((1, C), lambda n: (0, 0)),
            ],
            out_specs=pl.BlockSpec((1, H, W, C), lambda n: (n, 0, 0, 0)),
            scratch_shapes=[pltpu.VMEM((H + 2, W, Ch), jnp.float32)],
        ),
        compiler_params=pltpu.CompilerParams(
            dimension_semantics=("parallel",),
            vmem_limit_bytes=48 * 1024 * 1024),
    )(x, w1, b1, w2, b2)

    return jnp.transpose(out_nhwc, (0, 3, 1, 2))         # back to NCHW


# ---------------------------- pure-JAX reference ----------------------------
def _ref_resblock(x, w1, bn1, w2, bn2, eps=1e-5):
    def bn_apply(h, bn):
        gamma, beta, mean, var = bn
        sh = (1, -1, 1, 1)
        return ((h - mean.reshape(sh)) / jnp.sqrt(var.reshape(sh) + eps)
                ) * gamma.reshape(sh) + beta.reshape(sh)

    dn = ('NCHW', 'OIHW', 'NCHW')
    h = lax.conv_general_dilated(x, w1, (1, 1), 'SAME', dimension_numbers=dn)
    h = _mish_ref(bn_apply(h, bn1))
    y = lax.conv_general_dilated(h, w2, (1, 1), 'SAME', dimension_numbers=dn)
    y = _mish_ref(bn_apply(y, bn2))
    return x + y


if __name__ == "__main__":
    N, C, H, W = 2, 4, 16, 16
    Ch = C  # hidden_channels defaults to channels

    key = jax.random.PRNGKey(0)
    k = jax.random.split(key, 10)

    x = jax.random.normal(k[0], (N, C, H, W), jnp.float32)

    # Conv weights (PyTorch OIHW layout), deterministic random init
    w1 = jax.random.normal(k[1], (Ch, C, 1, 1), jnp.float32) * 0.3
    w2 = jax.random.normal(k[2], (C, Ch, 3, 3), jnp.float32) * 0.1

    # BatchNorm params (gamma, beta, running_mean, running_var)
    bn1 = (jax.random.uniform(k[3], (Ch,), minval=0.5, maxval=1.5),
           jax.random.normal(k[4], (Ch,)) * 0.1,
           jax.random.normal(k[5], (Ch,)) * 0.1,
           jax.random.uniform(k[6], (Ch,), minval=0.5, maxval=1.5))
    bn2 = (jax.random.uniform(k[7], (C,), minval=0.5, maxval=1.5),
           jax.random.normal(k[8], (C,)) * 0.1,
           jax.random.normal(k[9], (C,)) * 0.1,
           jax.random.uniform(k[3], (C,), minval=0.5, maxval=1.5))

    out = jax.block_until_ready(resblock_forward(x, w1, bn1, w2, bn2))
    ref = jax.block_until_ready(_ref_resblock(x, w1, bn1, w2, bn2))

    # bf16 matmul operands -> loosened tolerances (accumulation stays f32).
    np.testing.assert_allclose(np.asarray(out), np.asarray(ref),
                               rtol=2e-2, atol=2e-2)

    print("KERNEL_OK")
</pallas_src>

<mosaic_0001>
module attributes {stable_mosaic.version = 11 : i64} {
  func.func @_resblock_kernel(%arg0: i32, %arg1: memref<1x16x16x4xf32, #tpu.memory_space<vmem>>, %arg2: memref<4x4xbf16, #tpu.memory_space<vmem>>, %arg3: memref<1x4xf32, #tpu.memory_space<vmem>>, %arg4: memref<3x12x4xbf16, #tpu.memory_space<vmem>>, %arg5: memref<1x4xf32, #tpu.memory_space<vmem>>, %arg6: memref<1x16x16x4xf32, #tpu.memory_space<vmem>>, %arg7: memref<18x16x4xf32, #tpu.memory_space<vmem>>) attributes {dimension_semantics = [#tpu.dimension_semantics<parallel>], iteration_bounds = array<i64: 2>, scalar_prefetch = 0 : i64, scratch_operands = 1 : i64, tpu.core_type = #tpu.core_type<tc>, window_params = [{transform_indices = @transform_0, window_bounds = array<i64: 1, 16, 16, 4>}, {pipeline_mode = #tpu.pipeline_mode<synchronous>, transform_indices = @transform_1, window_bounds = array<i64: 4, 4>}, {pipeline_mode = #tpu.pipeline_mode<synchronous>, transform_indices = @transform_2, window_bounds = array<i64: 1, 4>}, {pipeline_mode = #tpu.pipeline_mode<synchronous>, transform_indices = @transform_3, window_bounds = array<i64: 3, 12, 4>}, {pipeline_mode = #tpu.pipeline_mode<synchronous>, transform_indices = @transform_4, window_bounds = array<i64: 1, 4>}, {transform_indices = @transform_5, window_bounds = array<i64: 1, 16, 16, 4>}]} {
    %c0 = arith.constant 0 : index
    %c0_0 = arith.constant 0 : index
    %c0_1 = arith.constant 0 : index
    %c0_2 = arith.constant 0 : index
    %0 = vector.load %arg1[%c0, %c0_0, %c0_1, %c0_2] : memref<1x16x16x4xf32, #tpu.memory_space<vmem>>, vector<1x16x16x4xf32>
    %1 = vector.shape_cast %0 : vector<1x16x16x4xf32> to vector<16x16x4xf32>
    %cst = arith.constant 0.000000e+00 : f32
    %2 = vector.broadcast %cst : f32 to vector<16x4xf32>
    %c0_3 = arith.constant 0 : index
    %c0_4 = arith.constant 0 : index
    %c0_5 = arith.constant 0 : index
    %3 = vector.load %arg7[%c0_3, %c0_4, %c0_5] : memref<18x16x4xf32, #tpu.memory_space<vmem>>, vector<1x16x4xf32>
    %4 = vector.shape_cast %3 : vector<1x16x4xf32> to vector<16x4xf32>
    %5 = vector.shape_cast %2 : vector<16x4xf32> to vector<1x16x4xf32>
    tpu.vector_store %arg7[%c0_3, %c0_4, %c0_5], %5 {strides = array<i32>} : memref<18x16x4xf32, #tpu.memory_space<vmem>>, vector<1x16x4xf32>,
    %c17 = arith.constant 17 : index
    %c0_6 = arith.constant 0 : index
    %c0_7 = arith.constant 0 : index
    %6 = vector.load %arg7[%c17, %c0_6, %c0_7] : memref<18x16x4xf32, #tpu.memory_space<vmem>>, vector<1x16x4xf32>
    %7 = vector.shape_cast %6 : vector<1x16x4xf32> to vector<16x4xf32>
    %8 = vector.shape_cast %2 : vector<16x4xf32> to vector<1x16x4xf32>
    tpu.vector_store %arg7[%c17, %c0_6, %c0_7], %8 {strides = array<i32>} : memref<18x16x4xf32, #tpu.memory_space<vmem>>, vector<1x16x4xf32>,
    %9 = vector.shape_cast %1 : vector<16x16x4xf32> to vector<256x4xf32>
    %10 = arith.truncf %9 : vector<256x4xf32> to vector<256x4xbf16>
    %c0_8 = arith.constant 0 : index
    %c0_9 = arith.constant 0 : index
    %11 = vector.load %arg2[%c0_8, %c0_9] : memref<4x4xbf16, #tpu.memory_space<vmem>>, vector<4x4xbf16>
    %cst_10 = arith.constant dense<0.000000e+00> : vector<256x4xf32>
    %12 = tpu.matmul %10, %11, %cst_10 {dimension_numbers = #tpu.dot_dimension_numbers<[1], [0], [0], [1], [0, 0, 1, 1], [], []>} : vector<256x4xbf16>, vector<4x4xbf16>, vector<256x4xf32> -> vector<256x4xf32>
    %c0_11 = arith.constant 0 : index
    %c0_12 = arith.constant 0 : index
    %13 = vector.load %arg3[%c0_11, %c0_12] : memref<1x4xf32, #tpu.memory_space<vmem>>, vector<1x4xf32>
    %14 = vector.broadcast %13 : vector<1x4xf32> to vector<256x4xf32>
    %15 = arith.addf %12, %14 : vector<256x4xf32>
    %cst_13 = arith.constant 2.000000e+01 : f32
    %16 = vector.broadcast %cst_13 : f32 to vector<256x4xf32>
    %17 = arith.minimumf %15, %16 : vector<256x4xf32>
    %18 = math.exp %17 : vector<256x4xf32>
    %cst_14 = arith.constant 1.000000e+00 : f32
    %19 = vector.broadcast %cst_14 : f32 to vector<256x4xf32>
    %20 = arith.addf %19, %18 : vector<256x4xf32>
    %21 = arith.mulf %20, %20 : vector<256x4xf32>
    %cst_15 = arith.constant 1.000000e+00 : f32
    %22 = vector.broadcast %cst_15 : f32 to vector<256x4xf32>
    %23 = arith.addf %21, %22 : vector<256x4xf32>
    %24 = tpu.reciprocal %23 {approx = true} : vector<256x4xf32> -> vector<256x4xf32>
    %cst_16 = arith.constant 2.000000e+00 : f32
    %25 = vector.broadcast %cst_16 : f32 to vector<256x4xf32>
    %26 = arith.mulf %25, %24 : vector<256x4xf32>
    %cst_17 = arith.constant 1.000000e+00 : f32
    %27 = vector.broadcast %cst_17 : f32 to vector<256x4xf32>
    %28 = arith.subf %27, %26 : vector<256x4xf32>
    %cst_18 = arith.constant 2.000000e+01 : f32
    %29 = vector.broadcast %cst_18 : f32 to vector<256x4xf32>
    %30 = arith.cmpf ogt, %15, %29 : vector<256x4xf32>
    %31 = arith.mulf %15, %28 : vector<256x4xf32>
    %32 = arith.select %30, %15, %31 : vector<256x4xi1>, vector<256x4xf32>
    %33 = vector.shape_cast %32 : vector<256x4xf32> to vector<16x16x4xf32>
    %c1 = arith.constant 1 : index
    %c0_19 = arith.constant 0 : index
    %c0_20 = arith.constant 0 : index
    %34 = vector.load %arg7[%c1, %c0_19, %c0_20] : memref<18x16x4xf32, #tpu.memory_space<vmem>>, vector<16x16x4xf32>
    tpu.vector_store %arg7[%c1, %c0_19, %c0_20], %33 {strides = array<i32>} : memref<18x16x4xf32, #tpu.memory_space<vmem>>, vector<16x16x4xf32>,
    %cst_21 = arith.constant 0.000000e+00 : f32
    %35 = vector.broadcast %cst_21 : f32 to vector<16x1x4xf32>
    %c0_22 = arith.constant 0 : index
    %c0_23 = arith.constant 0 : index
    %c0_24 = arith.constant 0 : index
    %36 = vector.load %arg7[%c0_22, %c0_23, %c0_24] : memref<18x16x4xf32, #tpu.memory_space<vmem>>, vector<16x16x4xf32>
    %37 = vector.extract_strided_slice %36 {offsets = [0, 0, 0], sizes = [16, 15, 4], strides = [1, 1, 1]} : vector<16x16x4xf32> to vector<16x15x4xf32>
    %38 = tpu.concatenate %35, %37 in 1 : vector<16x1x4xf32>, vector<16x15x4xf32> -> vector<16x16x4xf32>
    %39 = vector.extract_strided_slice %36 {offsets = [0, 1, 0], sizes = [16, 15, 4], strides = [1, 1, 1]} : vector<16x16x4xf32> to vector<16x15x4xf32>
    %40 = tpu.concatenate %39, %35 in 1 : vector<16x15x4xf32>, vector<16x1x4xf32> -> vector<16x16x4xf32>
    %41 = tpu.concatenate %38, %36, %40 in 2 : vector<16x16x4xf32>, vector<16x16x4xf32>, vector<16x16x4xf32> -> vector<16x16x12xf32>
    %42 = vector.shape_cast %41 : vector<16x16x12xf32> to vector<256x12xf32>
    %43 = arith.truncf %42 : vector<256x12xf32> to vector<256x12xbf16>
    %c0_25 = arith.constant 0 : index
    %c0_26 = arith.constant 0 : index
    %c0_27 = arith.constant 0 : index
    %44 = vector.load %arg4[%c0_25, %c0_26, %c0_27] : memref<3x12x4xbf16, #tpu.memory_space<vmem>>, vector<1x12x4xbf16>
    %45 = vector.shape_cast %44 : vector<1x12x4xbf16> to vector<12x4xbf16>
    %cst_28 = arith.constant dense<0.000000e+00> : vector<256x4xf32>
    %46 = tpu.matmul %43, %45, %cst_28 {dimension_numbers = #tpu.dot_dimension_numbers<[1], [0], [0], [1], [0, 0, 1, 1], [], []>} : vector<256x12xbf16>, vector<12x4xbf16>, vector<256x4xf32> -> vector<256x4xf32>
    %c1_29 = arith.constant 1 : index
    %c0_30 = arith.constant 0 : index
    %c0_31 = arith.constant 0 : index
    %47 = vector.load %arg7[%c1_29, %c0_30, %c0_31] : memref<18x16x4xf32, #tpu.memory_space<vmem>>, vector<16x16x4xf32>
    %48 = vector.extract_strided_slice %47 {offsets = [0, 0, 0], sizes = [16, 15, 4], strides = [1, 1, 1]} : vector<16x16x4xf32> to vector<16x15x4xf32>
    %49 = tpu.concatenate %35, %48 in 1 : vector<16x1x4xf32>, vector<16x15x4xf32> -> vector<16x16x4xf32>
    %50 = vector.extract_strided_slice %47 {offsets = [0, 1, 0], sizes = [16, 15, 4], strides = [1, 1, 1]} : vector<16x16x4xf32> to vector<16x15x4xf32>
    %51 = tpu.concatenate %50, %35 in 1 : vector<16x15x4xf32>, vector<16x1x4xf32> -> vector<16x16x4xf32>
    %52 = tpu.concatenate %49, %47, %51 in 2 : vector<16x16x4xf32>, vector<16x16x4xf32>, vector<16x16x4xf32> -> vector<16x16x12xf32>
    %53 = vector.shape_cast %52 : vector<16x16x12xf32> to vector<256x12xf32>
    %54 = arith.truncf %53 : vector<256x12xf32> to vector<256x12xbf16>
    %c1_32 = arith.constant 1 : index
    %c0_33 = arith.constant 0 : index
    %c0_34 = arith.constant 0 : index
    %55 = vector.load %arg4[%c1_32, %c0_33, %c0_34] : memref<3x12x4xbf16, #tpu.memory_space<vmem>>, vector<1x12x4xbf16>
    %56 = vector.shape_cast %55 : vector<1x12x4xbf16> to vector<12x4xbf16>
    %cst_35 = arith.constant dense<0.000000e+00> : vector<256x4xf32>
    %57 = tpu.matmul %54, %56, %cst_35 {dimension_numbers = #tpu.dot_dimension_numbers<[1], [0], [0], [1], [0, 0, 1, 1], [], []>} : vector<256x12xbf16>, vector<12x4xbf16>, vector<256x4xf32> -> vector<256x4xf32>
    %58 = arith.addf %46, %57 : vector<256x4xf32>
    %c2 = arith.constant 2 : index
    %c0_36 = arith.constant 0 : index
    %c0_37 = arith.constant 0 : index
    %59 = vector.load %arg7[%c2, %c0_36, %c0_37] : memref<18x16x4xf32, #tpu.memory_space<vmem>>, vector<16x16x4xf32>
    %60 = vector.extract_strided_slice %59 {offsets = [0, 0, 0], sizes = [16, 15, 4], strides = [1, 1, 1]} : vector<16x16x4xf32> to vector<16x15x4xf32>
    %61 = tpu.concatenate %35, %60 in 1 : vector<16x1x4xf32>, vector<16x15x4xf32> -> vector<16x16x4xf32>
    %62 = vector.extract_strided_slice %59 {offsets = [0, 1, 0], sizes = [16, 15, 4], strides = [1, 1, 1]} : vector<16x16x4xf32> to vector<16x15x4xf32>
    %63 = tpu.concatenate %62, %35 in 1 : vector<16x15x4xf32>, vector<16x1x4xf32> -> vector<16x16x4xf32>
    %64 = tpu.concatenate %61, %59, %63 in 2 : vector<16x16x4xf32>, vector<16x16x4xf32>, vector<16x16x4xf32> -> vector<16x16x12xf32>
    %65 = vector.shape_cast %64 : vector<16x16x12xf32> to vector<256x12xf32>
    %66 = arith.truncf %65 : vector<256x12xf32> to vector<256x12xbf16>
    %c2_38 = arith.constant 2 : index
    %c0_39 = arith.constant 0 : index
    %c0_40 = arith.constant 0 : index
    %67 = vector.load %arg4[%c2_38, %c0_39, %c0_40] : memref<3x12x4xbf16, #tpu.memory_space<vmem>>, vector<1x12x4xbf16>
    %68 = vector.shape_cast %67 : vector<1x12x4xbf16> to vector<12x4xbf16>
    %cst_41 = arith.constant dense<0.000000e+00> : vector<256x4xf32>
    %69 = tpu.matmul %66, %68, %cst_41 {dimension_numbers = #tpu.dot_dimension_numbers<[1], [0], [0], [1], [0, 0, 1, 1], [], []>} : vector<256x12xbf16>, vector<12x4xbf16>, vector<256x4xf32> -> vector<256x4xf32>
    %70 = arith.addf %58, %69 : vector<256x4xf32>
    %c0_42 = arith.constant 0 : index
    %c0_43 = arith.constant 0 : index
    %71 = vector.load %arg5[%c0_42, %c0_43] : memref<1x4xf32, #tpu.memory_space<vmem>>, vector<1x4xf32>
    %72 = vector.broadcast %71 : vector<1x4xf32> to vector<256x4xf32>
    %73 = arith.addf %70, %72 : vector<256x4xf32>
    %cst_44 = arith.constant 2.000000e+01 : f32
    %74 = vector.broadcast %cst_44 : f32 to vector<256x4xf32>
    %75 = arith.minimumf %73, %74 : vector<256x4xf32>
    %76 = math.exp %75 : vector<256x4xf32>
    %cst_45 = arith.constant 1.000000e+00 : f32
    %77 = vector.broadcast %cst_45 : f32 to vector<256x4xf32>
    %78 = arith.addf %77, %76 : vector<256x4xf32>
    %79 = arith.mulf %78, %78 : vector<256x4xf32>
    %cst_46 = arith.constant 1.000000e+00 : f32
    %80 = vector.broadcast %cst_46 : f32 to vector<256x4xf32>
    %81 = arith.addf %79, %80 : vector<256x4xf32>
    %82 = tpu.reciprocal %81 {approx = true} : vector<256x4xf32> -> vector<256x4xf32>
    %cst_47 = arith.constant 2.000000e+00 : f32
    %83 = vector.broadcast %cst_47 : f32 to vector<256x4xf32>
    %84 = arith.mulf %83, %82 : vector<256x4xf32>
    %cst_48 = arith.constant 1.000000e+00 : f32
    %85 = vector.broadcast %cst_48 : f32 to vector<256x4xf32>
    %86 = arith.subf %85, %84 : vector<256x4xf32>
    %cst_49 = arith.constant 2.000000e+01 : f32
    %87 = vector.broadcast %cst_49 : f32 to vector<256x4xf32>
    %88 = arith.cmpf ogt, %73, %87 : vector<256x4xf32>
    %89 = arith.mulf %73, %86 : vector<256x4xf32>
    %90 = arith.select %88, %73, %89 : vector<256x4xi1>, vector<256x4xf32>
    %91 = vector.shape_cast %90 : vector<256x4xf32> to vector<16x16x4xf32>
    %92 = arith.addf %1, %91 : vector<16x16x4xf32>
    %c0_50 = arith.constant 0 : index
    %c0_51 = arith.constant 0 : index
    %c0_52 = arith.constant 0 : index
    %c0_53 = arith.constant 0 : index
    %93 = vector.load %arg6[%c0_50, %c0_51, %c0_52, %c0_53] : memref<1x16x16x4xf32, #tpu.memory_space<vmem>>, vector<1x16x16x4xf32>
    %94 = vector.shape_cast %93 : vector<1x16x16x4xf32> to vector<16x16x4xf32>
    %95 = vector.shape_cast %92 : vector<16x16x4xf32> to vector<1x16x16x4xf32>
    tpu.vector_store %arg6[%c0_50, %c0_51, %c0_52, %c0_53], %95 {strides = array<i32>} : memref<1x16x16x4xf32, #tpu.memory_space<vmem>>, vector<1x16x16x4xf32>,
    return
  }
  func.func @transform_0(%arg0: i32) -> (i32, i32, i32, i32) {
    %c0_i32 = arith.constant 0 : i32
    %c0_i32_0 = arith.constant 0 : i32
    %c0_i32_1 = arith.constant 0 : i32
    %c0_i32_2 = arith.constant 0 : i32
    return %arg0, %c0_i32, %c0_i32_0, %c0_i32_1 : i32, i32, i32, i32
  }
  func.func @transform_1(%arg0: i32) -> (i32, i32) {
    %c0_i32 = arith.constant 0 : i32
    %c0_i32_0 = arith.constant 0 : i32
    %c0_i32_1 = arith.constant 0 : i32
    return %c0_i32, %c0_i32_0 : i32, i32
  }
  func.func @transform_2(%arg0: i32) -> (i32, i32) {
    %c0_i32 = arith.constant 0 : i32
    %c0_i32_0 = arith.constant 0 : i32
    %c0_i32_1 = arith.constant 0 : i32
    return %c0_i32, %c0_i32_0 : i32, i32
  }
  func.func @transform_3(%arg0: i32) -> (i32, i32, i32) {
    %c0_i32 = arith.constant 0 : i32
    %c0_i32_0 = arith.constant 0 : i32
    %c0_i32_1 = arith.constant 0 : i32
    %c0_i32_2 = arith.constant 0 : i32
    return %c0_i32, %c0_i32_0, %c0_i32_1 : i32, i32, i32
  }
  func.func @transform_4(%arg0: i32) -> (i32, i32) {
    %c0_i32 = arith.constant 0 : i32
    %c0_i32_0 = arith.constant 0 : i32
    %c0_i32_1 = arith.constant 0 : i32
    return %c0_i32, %c0_i32_0 : i32, i32
  }
  func.func @transform_5(%arg0: i32) -> (i32, i32, i32, i32) {
    %c0_i32 = arith.constant 0 : i32
    %c0_i32_0 = arith.constant 0 : i32
    %c0_i32_1 = arith.constant 0 : i32
    %c0_i32_2 = arith.constant 0 : i32
    return %arg0, %c0_i32, %c0_i32_0, %c0_i32_1 : i32, i32, i32, i32
  }
}

</mosaic_0001>

<llo_original>
// kernel: tpu_custom_call.1
$region0: #{tpu_custom_call.1}
  #allocation0 [shape = 'u32[]', space=smem, size = 0x4, offset = 0x4, fixed_abs, tag = 'smem constant byte address 0x4 - core index']
  #allocation1 [shape = 'u32[144,128]{1,0:T(1,128)}', space=vmem, size = 0x12000, scoped, tag = 'internal scratch']
  #allocation2 [shape = 'f32[18,16,4]{2,1,0:T(8,128)}', space=vmem, size = 0x24000, scoped, tag = 'scratch operand']
  %s0 = inlined_call_operand.vmem [shape: f32[2,16,16,4], index: 0, kind: input, shape index: {}]
  %s1 = inlined_call_operand.vmem [shape: bf16[4,4], index: 1, kind: input, shape index: {}]
  %s2 = inlined_call_operand.vmem [shape: f32[1,4], index: 2, kind: input, shape index: {}]
  %s3 = inlined_call_operand.vmem [shape: bf16[3,12,4], index: 3, kind: input, shape index: {}]
  %s4 = inlined_call_operand.vmem [shape: f32[1,4], index: 4, kind: input, shape index: {}]
  %s5 = inlined_call_operand.vmem [shape: f32[2,16,16,4], index: 5, kind: output, shape index: {}]
  %s6 = sld [smem:[#allocation0]]
  $region53: #{tpu_custom_call.1} parent=0
    _
  %s8 = ssub.s32 1, %s6
  %s9 = scalar_select 0, %s8, %s6
  loop: start=0, step=1, limit=4
  $region2: #{tpu_custom_call.1} parent=0 // loop_pre_header
    _
  $region3: #{tpu_custom_call.1} parent=0 // loop_header
    %s11 = sphi 0, %s15
    %p12 = scmp.ge.s32.totalorder %s11, 4
    %s21 = sphi 0, %s23
    %s24 = sphi 0, %s21
    %s25 = sphi 0, %s24
    %s41 = sphi 0, %s25
    %s45 = sphi 0, %s45
    %s47 = sphi 0, %s45
    %s48 = sphi 0, %s47
    %s62 = sphi 0, %s48
    %s66 = sphi 0, %s66
    %s68 = sphi 0, %s66
    %s69 = sphi 0, %s68
    %s83 = sphi 0, %s69
    %s87 = sphi 0, %s87
    %s89 = sphi 0, %s87
    %s90 = sphi 0, %s89
    %s104 = sphi 0, %s90
    %s108 = sphi 0, %s108
    %s110 = sphi 0, %s108
    %s111 = sphi 0, %s110
    %s125 = sphi 0, %s111
    %s131 = sphi 0, %s133
    %s134 = sphi 0, %s131
    %s135 = sphi 0, %s134
    %s151 = sphi 0, %s135
  $region4: #{tpu_custom_call.1} parent=0 // loop_header_branch
    %14 = sbr.rel (%p12) target = $region8
  $region5: #{tpu_custom_call.1} parent=0 // loop_body
    %s16 = ssub.s32 %s11, 1
    %s17 = ssub.s32 %s11, 2
    %s18 = sadd.s32 %s11, 1
    %s19 = ssub.s32 %s11, %s18
    %p20 = scmp.eq.s32.totalorder %s19, 0
    %s22 = sadd.s32 %s21, 1
    %s23 = scalar_select %p20, %s21, %s22
    %p26 = pneg %p20
    %p27 = scmp.eq.s32.totalorder %s11, 1
    %p28 = por %p26, %p27
    %p29 = scmp.ne.s32.totalorder %s21, %s24
    %p30 = scmp.eq.s32.totalorder %s11, 0
    %p31 = por %p29, %p30
    %p32 = scmp.ne.s32.totalorder %s21, %s24
    %p33 = scmp.eq.s32.totalorder %s16, 1
    %p34 = por %p32, %p33
    %p35 = scmp.ne.s32.totalorder %s24, %s25
    %p36 = scmp.eq.s32.totalorder %s16, 0
    %p37 = por %p35, %p36
    %p38 = scmp.ne.s32.totalorder %s24, %s25
    %p39 = scmp.eq.s32.totalorder %s17, 1
    %p40 = por %p38, %p39
    %p42 = scmp.ne.s32.totalorder %s25, %s41
    %p43 = scmp.eq.s32.totalorder %s17, 0
    %p44 = por %p42, %p43
    %s46 = sadd.s32 %s45, 1
    %p49 = scmp.eq.s32.totalorder %s11, 1
    %p50 = scmp.ne.s32.totalorder %s45, %s47
    %p51 = scmp.eq.s32.totalorder %s11, 0
    %p52 = por %p50, %p51
    %p53 = scmp.ne.s32.totalorder %s45, %s47
    %p54 = scmp.eq.s32.totalorder %s16, 1
    %p55 = por %p53, %p54
    %p56 = scmp.ne.s32.totalorder %s47, %s48
    %p57 = scmp.eq.s32.totalorder %s16, 0
    %p58 = por %p56, %p57
    %p59 = scmp.ne.s32.totalorder %s47, %s48
    %p60 = scmp.eq.s32.totalorder %s17, 1
    %p61 = por %p59, %p60
    %p63 = scmp.ne.s32.totalorder %s48, %s62
    %p64 = scmp.eq.s32.totalorder %s17, 0
    %p65 = por %p63, %p64
    %s67 = sadd.s32 %s66, 1
    %p70 = scmp.eq.s32.totalorder %s11, 1
    %p71 = scmp.ne.s32.totalorder %s66, %s68
    %p72 = scmp.eq.s32.totalorder %s11, 0
    %p73 = por %p71, %p72
    %p74 = scmp.ne.s32.totalorder %s66, %s68
    %p75 = scmp.eq.s32.totalorder %s16, 1
    %p76 = por %p74, %p75
    %p77 = scmp.ne.s32.totalorder %s68, %s69
    %p78 = scmp.eq.s32.totalorder %s16, 0
    %p79 = por %p77, %p78
    %p80 = scmp.ne.s32.totalorder %s68, %s69
    %p81 = scmp.eq.s32.totalorder %s17, 1
    %p82 = por %p80, %p81
    %p84 = scmp.ne.s32.totalorder %s69, %s83
    %p85 = scmp.eq.s32.totalorder %s17, 0
    %p86 = por %p84, %p85
    %s88 = sadd.s32 %s87, 1
    %p91 = scmp.eq.s32.totalorder %s11, 1
    %p92 = scmp.ne.s32.totalorder %s87, %s89
    %p93 = scmp.eq.s32.totalorder %s11, 0
    %p94 = por %p92, %p93
    %p95 = scmp.ne.s32.totalorder %s87, %s89
    %p96 = scmp.eq.s32.totalorder %s16, 1
    %p97 = por %p95, %p96
    %p98 = scmp.ne.s32.totalorder %s89, %s90
    %p99 = scmp.eq.s32.totalorder %s16, 0
    %p100 = por %p98, %p99
    %p101 = scmp.ne.s32.totalorder %s89, %s90
    %p102 = scmp.eq.s32.totalorder %s17, 1
    %p103 = por %p101, %p102
    %p105 = scmp.ne.s32.totalorder %s90, %s104
    %p106 = scmp.eq.s32.totalorder %s17, 0
    %p107 = por %p105, %p106
    %s109 = sadd.s32 %s108, 1
    %p112 = scmp.eq.s32.totalorder %s11, 1
    %p113 = scmp.ne.s32.totalorder %s108, %s110
    %p114 = scmp.eq.s32.totalorder %s11, 0
    %p115 = por %p113, %p114
    %p116 = scmp.ne.s32.totalorder %s108, %s110
    %p117 = scmp.eq.s32.totalorder %s16, 1
    %p118 = por %p116, %p117
    %p119 = scmp.ne.s32.totalorder %s110, %s111
    %p120 = scmp.eq.s32.totalorder %s16, 0
    %p121 = por %p119, %p120
    %p122 = scmp.ne.s32.totalorder %s110, %s111
    %p123 = scmp.eq.s32.totalorder %s17, 1
    %p124 = por %p122, %p123
    %p126 = scmp.ne.s32.totalorder %s111, %s125
    %p127 = scmp.eq.s32.totalorder %s17, 0
    %p128 = por %p126, %p127
    %s129 = ssub.s32 %s11, %s18
    %p130 = scmp.eq.s32.totalorder %s129, 0
    %s132 = sadd.s32 %s131, 1
    %s133 = scalar_select %p130, %s131, %s132
    %p136 = pneg %p130
    %p137 = scmp.eq.s32.totalorder %s11, 1
    %p138 = por %p136, %p137
    %p139 = scmp.ne.s32.totalorder %s131, %s134
    %p140 = scmp.eq.s32.totalorder %s11, 0
    %p141 = por %p139, %p140
    %p142 = scmp.ne.s32.totalorder %s131, %s134
    %p143 = scmp.eq.s32.totalorder %s16, 1
    %p144 = por %p142, %p143
    %p145 = scmp.ne.s32.totalorder %s134, %s135
    %p146 = scmp.eq.s32.totalorder %s16, 0
    %p147 = por %p145, %p146
    %p148 = scmp.ne.s32.totalorder %s134, %s135
    %p149 = scmp.eq.s32.totalorder %s17, 1
    %p150 = por %p148, %p149
    %p152 = scmp.ne.s32.totalorder %s135, %s151
    %p153 = scmp.eq.s32.totalorder %s17, 0
    %p154 = por %p152, %p153
    %p155 = scmp.le.s32.totalorder 1, %s11
    %p156 = scmp.lt.s32.totalorder %s11, 3
    %p157 = pnand %p155, %p156
    %p158 = pneg %p157
    // Predicated region
    $region9: #{tpu_custom_call.1} parent=5 // pred_check
      _
    $region10: #{tpu_custom_call.1} parent=5 // pred_check_branch
      %160 = sbr.rel (%p157) target = $region12
    $region11: #{tpu_custom_call.1} parent=5 // pred_region
      %s161 = ssub.s32 %s11, 1
      // Predicated region
      $region13: #{tpu_custom_call.1} parent=11 // pred_check
        %p162 = pneg %p58
      $region14: #{tpu_custom_call.1} parent=11 // pred_check_branch
        %164 = sbr.rel (%p162) target = $region16
      $region15: #{tpu_custom_call.1} parent=11 // pred_region
        _
      $region16: #{tpu_custom_call.1} parent=11 // pred_fallthru
        _
      // Predicated region
      $region17: #{tpu_custom_call.1} parent=11 // pred_check
        %p165 = pneg %p79
      $region18: #{tpu_custom_call.1} parent=11 // pred_check_branch
        %167 = sbr.rel (%p165) target = $region20
      $region19: #{tpu_custom_call.1} parent=11 // pred_region
        _
      $region20: #{tpu_custom_call.1} parent=11 // pred_fallthru
        _
      // Predicated region
      $region21: #{tpu_custom_call.1} parent=11 // pred_check
        %p168 = pneg %p100
      $region22: #{tpu_custom_call.1} parent=11 // pred_check_branch
        %170 = sbr.rel (%p168) target = $region24
      $region23: #{tpu_custom_call.1} parent=11 // pred_region
        _
      $region24: #{tpu_custom_call.1} parent=11 // pred_fallthru
        _
      // Predicated region
      $region25: #{tpu_custom_call.1} parent=11 // pred_check
        %p171 = pneg %p121
      $region26: #{tpu_custom_call.1} parent=11 // pred_check_branch
        %173 = sbr.rel (%p171) target = $region28
      $region27: #{tpu_custom_call.1} parent=11 // pred_region
        _
      $region28: #{tpu_custom_call.1} parent=11 // pred_fallthru
        _
    $region12: #{tpu_custom_call.1} parent=5 // pred_fallthru
      _
    %p174 = scmp.lt.s32.totalorder %s11, 2
    // Predicated region
    $region29: #{tpu_custom_call.1} parent=5 // pred_check
      %p175 = pneg %p174
    $region30: #{tpu_custom_call.1} parent=5 // pred_check_branch
      %177 = sbr.rel (%p175) target = $region32
    $region31: #{tpu_custom_call.1} parent=5 // pred_region
      // Predicated region
      $region33: #{tpu_custom_call.1} parent=31 // pred_check
        %p178 = pneg %p31
      $region34: #{tpu_custom_call.1} parent=31 // pred_check_branch
        %180 = sbr.rel (%p178) target = $region36
      $region35: #{tpu_custom_call.1} parent=31 // pred_region
        %p181 = scmp.lt.s32.totalorder %s11, 1
        %s182 = scalar_select %p181, %s11, 1
        %s183 = smul.addr %s182, 32
        %s184 = smul.addr %s183, 8
        %s185 = scalar_lea.vmem %s0, %s184
      $region36: #{tpu_custom_call.1} parent=31 // pred_fallthru
        _
    $region32: #{tpu_custom_call.1} parent=5 // pred_fallthru
      _
    %p186 = scmp.le.s32.totalorder 1, %s11
    %p187 = scmp.lt.s32.totalorder %s11, 3
    %p188 = pnand %p186, %p187
    %p189 = pneg %p188
    // Predicated region
    $region37: #{tpu_custom_call.1} parent=5 // pred_check
      _
    $region38: #{tpu_custom_call.1} parent=5 // pred_check_branch
      %191 = sbr.rel (%p188) target = $region40
    $region39: #{tpu_custom_call.1} parent=5 // pred_region
      %s192 = ssub.s32 %s11, 1
      %p193 = scmp.lt.s32.totalorder %s16, 1
      %s194 = scalar_select %p193, %s16, 1
      %s195 = smul.addr %s194, 32
      %s196 = smul.addr %s195, 8
      %s197 = scalar_lea.vmem %s0, %s196
      %p198 = pneg %p37
      %p199 = pneg %p34
      %p200 = pneg %p58
      %p201 = pneg %p55
      %p202 = pneg %p79
      %p203 = pneg %p76
      %p204 = pneg %p100
      %p205 = pneg %p97
      %p206 = pneg %p121
      %p207 = pneg %p118
      %p208 = pneg %p147
      %p209 = pneg %p144
      %p210 = scmp.lt.s32.totalorder %s16, 1
      %s211 = scalar_select %p210, %s16, 1
      %s212 = smul.addr %s211, 32
      %s213 = smul.addr %s212, 8
      %s214 = scalar_lea.vmem %s5, %s213
      %p215 = scmp.lt.s32.totalorder %s16, 1
      %s216 = scalar_select %p215, %s16, 1
      %s217 = smul.addr %s216, 32
      %s218 = smul.addr %s217, 8
      %s219 = scalar_lea.vmem %s0, %s218
      %p220 = scmp.lt.s32.totalorder %s16, 1
      %s221 = scalar_select %p220, %s16, 1
      %s222 = smul.addr %s221, 32
      %s223 = smul.addr %s222, 8
      %s224 = scalar_lea.vmem %s5, %s223
      %v226 = vld [vmem:[%s219] sm:$0xff]
      %v227 = vld [vmem:[%s219 + $0x8] sm:$0xff]
      %v228 = vld [vmem:[%s219 + $0x10] sm:$0xff]
      %v229 = vld [vmem:[%s219 + $0x18] sm:$0xff]
      %v230 = vld [vmem:[%s219 + $0x20] sm:$0xff]
      %v231 = vld [vmem:[%s219 + $0x28] sm:$0xff]
      %v232 = vld [vmem:[%s219 + $0x30] sm:$0xff]
      %v233 = vld [vmem:[%s219 + $0x38] sm:$0xff]
      %v234 = vld [vmem:[%s219 + $0x40] sm:$0xff]
      %v235 = vld [vmem:[%s219 + $0x48] sm:$0xff]
      %v236 = vld [vmem:[%s219 + $0x50] sm:$0xff]
      %v237 = vld [vmem:[%s219 + $0x58] sm:$0xff]
      %v238 = vld [vmem:[%s219 + $0x60] sm:$0xff]
      %v239 = vld [vmem:[%s219 + $0x68] sm:$0xff]
      %v240 = vld [vmem:[%s219 + $0x70] sm:$0xff]
      %v241 = vld [vmem:[%s219 + $0x78] sm:$0xff]
      %v242 = vld [vmem:[%s219 + $0x80] sm:$0xff]
      %v243 = vld [vmem:[%s219 + $0x88] sm:$0xff]
      %v244 = vld [vmem:[%s219 + $0x90] sm:$0xff]
      %v245 = vld [vmem:[%s219 + $0x98] sm:$0xff]
      %v246 = vld [vmem:[%s219 + $0xa0] sm:$0xff]
      %v247 = vld [vmem:[%s219 + $0xa8] sm:$0xff]
      %v248 = vld [vmem:[%s219 + $0xb0] sm:$0xff]
      %v249 = vld [vmem:[%s219 + $0xb8] sm:$0xff]
      %v250 = vld [vmem:[%s219 + $0xc0] sm:$0xff]
      %v251 = vld [vmem:[%s219 + $0xc8] sm:$0xff]
      %v252 = vld [vmem:[%s219 + $0xd0] sm:$0xff]
      %v253 = vld [vmem:[%s219 + $0xd8] sm:$0xff]
      %v254 = vld [vmem:[%s219 + $0xe0] sm:$0xff]
      %v255 = vld [vmem:[%s219 + $0xe8] sm:$0xff]
      %v256 = vld [vmem:[%s219 + $0xf0] sm:$0xff]
      %v257 = vld [vmem:[%s219 + $0xf8] sm:$0xff]
      %vm258 = vcmask 31744
      %259 = vst.msk [vmem:[#allocation2] sm:$0xff] %vm258, 0.0
      %260 = vst.msk [vmem:[#allocation2 + $0x8] sm:$0xff] %vm258, 0.0
      %s261 = scalar_lea.vmem [#allocation2], 272
      %262 = vst.msk [vmem:[%s261] sm:$0xff] %vm258, 0.0
      %263 = vst.msk [vmem:[%s261 + $0x8] sm:$0xff] %vm258, 0.0
      %v264 = vpack.c.bf16 %v227, %v226
      %v265 = vpack.c.bf16 %v229, %v228
      %v266 = vpack.c.bf16 %v231, %v230
      %v267 = vpack.c.bf16 %v233, %v232
      %v268 = vpack.c.bf16 %v235, %v234
      %v269 = vpack.c.bf16 %v237, %v236
      %v270 = vpack.c.bf16 %v239, %v238
      %v271 = vpack.c.bf16 %v241, %v240
      %v272 = vpack.c.bf16 %v243, %v242
      %v273 = vpack.c.bf16 %v245, %v244
      %v274 = vpack.c.bf16 %v247, %v246
      %v275 = vpack.c.bf16 %v249, %v248
      %v276 = vpack.c.bf16 %v251, %v250
      %v277 = vpack.c.bf16 %v253, %v252
      %v278 = vpack.c.bf16 %v255, %v254
      %v279 = vpack.c.bf16 %v257, %v256
      %v280 = vld [vmem:[%s1] sm:$0x3]
      %v281 = vld [vmem:[%s2] sm:$0x1]
      %v283 = vlaneseq
      %v284 = vshrl.u32 %v283, 7
      %v285 = vsub.s32 0, %v284
      %v286 = vrot.slane %v281, %v285
      %v289 = vsel %vm258, %v264, 0
      %v292 = vsel %vm258, %v265, 0
      %v295 = vsel %vm258, %v266, 0
      %v298 = vsel %vm258, %v267, 0
      %v301 = vsel %vm258, %v268, 0
      %v304 = vsel %vm258, %v269, 0
      %v307 = vsel %vm258, %v270, 0
      %v310 = vsel %vm258, %v271, 0
      %v313 = vsel %vm258, %v272, 0
      %v316 = vsel %vm258, %v273, 0
      %v319 = vsel %vm258, %v274, 0
      %v322 = vsel %vm258, %v275, 0
      %v325 = vsel %vm258, %v276, 0
      %v328 = vsel %vm258, %v277, 0
      %v331 = vsel %vm258, %v278, 0
      %v334 = vsel %vm258, %v279, 0
      %vm336 = vcmask 1041408
      %v338 = vsel %vm336, %v280, 0
      %340 = vmatprep.subr.bf16.mxu0 0
      %341 = vmatpush1.bf16.msra.mxu0 %v338
      %342 = vmatprep.subr.bf16.mxu0 0
      %343 = vmatpush1.bf16.msra.mxu0 0
      %344 = vmatprep.subr.bf16.mxu0 0
      %345 = vmatpush1.bf16.msra.mxu0 0
      %346 = vmatprep.subr.bf16.mxu0 0
      %347 = vmatpush1.bf16.msra.mxu0 0
      %348 = vmatprep.subr.bf16.mxu0 0
      %349 = vmatpush1.bf16.msra.mxu0 0
      %350 = vmatprep.subr.bf16.mxu0 0
      %351 = vmatpush1.bf16.msra.mxu0 0
      %352 = vmatprep.subr.bf16.mxu0 0
      %353 = vmatpush1.bf16.msra.mxu0 0
      %354 = vmatprep.subr.bf16.mxu0 0
      %355 = vmatpush1.bf16.msra.mxu0 0
      %356 = vmatprep.subr.bf16.mxu0 0
      %357 = vmatpush1.bf16.msra.mxu0 0
      %358 = vmatprep.subr.bf16.mxu0 0
      %359 = vmatpush1.bf16.msra.mxu0 0
      %360 = vmatprep.subr.bf16.mxu0 0
      %361 = vmatpush1.bf16.msra.mxu0 0
      %362 = vmatprep.subr.bf16.mxu0 0
      %363 = vmatpush1.bf16.msra.mxu0 0
      %364 = vmatprep.subr.bf16.mxu0 0
      %365 = vmatpush1.bf16.msra.mxu0 0
      %366 = vmatprep.subr.bf16.mxu0 0
      %367 = vmatpush1.bf16.msra.mxu0 0
      %368 = vmatprep.subr.bf16.mxu0 0
      %369 = vmatpush1.bf16.msra.mxu0 0
      %370 = vmatprep.subr.bf16.mxu0 0
      %371 = vmatpush1.bf16.msra.mxu0 0
      %372 = vmatprep.mubr.bf16.mxu0 0
      %373 = vmatmul.mubr.bf16.gmra.mrb[0].mxu0 %v289
      %v374 = vpop.f32.mrb[0].mxu0
      %v375 = vadd.f32 %v286, %v374
      %v376 = vpop.f32.mrb[0].mxu0
      %v377 = vpop.f32.mrb[0].mxu0
      %v378 = vadd.f32 %v286, %v377
      %v379 = vpop.f32.mrb[0].mxu0
      %380 = vmatprep.mubr.bf16.mxu0 0
      %381 = vmatmul.mubr.bf16.gmra.mrb[0].mxu0 %v292
      %v382 = vpop.f32.mrb[0].mxu0
      %v383 = vadd.f32 %v286, %v382
      %v384 = vpop.f32.mrb[0].mxu0
      %v385 = vpop.f32.mrb[0].mxu0
      %v386 = vadd.f32 %v286, %v385
      %v387 = vpop.f32.mrb[0].mxu0
      %388 = vmatprep.mubr.bf16.mxu0 0
      %389 = vmatmul.mubr.bf16.gmra.mrb[0].mxu0 %v295
      %v390 = vpop.f32.mrb[0].mxu0
      %v391 = vadd.f32 %v286, %v390
      %v392 = vpop.f32.mrb[0].mxu0
      %v393 = vpop.f32.mrb[0].mxu0
      %v394 = vadd.f32 %v286, %v393
      %v395 = vpop.f32.mrb[0].mxu0
      %396 = vmatprep.mubr.bf16.mxu0 0
      %397 = vmatmul.mubr.bf16.gmra.mrb[0].mxu0 %v298
      %v398 = vpop.f32.mrb[0].mxu0
      %v399 = vadd.f32 %v286, %v398
      %v400 = vpop.f32.mrb[0].mxu0
      %v401 = vpop.f32.mrb[0].mxu0
      %v402 = vadd.f32 %v286, %v401
      %v403 = vpop.f32.mrb[0].mxu0
      %404 = vmatprep.mubr.bf16.mxu0 0
      %405 = vmatmul.mubr.bf16.gmra.mrb[0].mxu0 %v301
      %v406 = vpop.f32.mrb[0].mxu0
      %v407 = vadd.f32 %v286, %v406
      %v408 = vpop.f32.mrb[0].mxu0
      %v409 = vpop.f32.mrb[0].mxu0
      %v410 = vadd.f32 %v286, %v409
      %v411 = vpop.f32.mrb[0].mxu0
      %412 = vmatprep.mubr.bf16.mxu0 0
      %413 = vmatmul.mubr.bf16.gmra.mrb[0].mxu0 %v304
      %v414 = vpop.f32.mrb[0].mxu0
      %v415 = vadd.f32 %v286, %v414
      %v416 = vpop.f32.mrb[0].mxu0
      %v417 = vpop.f32.mrb[0].mxu0
      %v418 = vadd.f32 %v286, %v417
      %v419 = vpop.f32.mrb[0].mxu0
      %420 = vmatprep.mubr.bf16.mxu0 0
      %421 = vmatmul.mubr.bf16.gmra.mrb[0].mxu0 %v307
      %v422 = vpop.f32.mrb[0].mxu0
      %v423 = vadd.f32 %v286, %v422
      %v424 = vpop.f32.mrb[0].mxu0
      %v425 = vpop.f32.mrb[0].mxu0
      %v426 = vadd.f32 %v286, %v425
      %v427 = vpop.f32.mrb[0].mxu0
      %428 = vmatprep.mubr.bf16.mxu0 0
      %429 = vmatmul.mubr.bf16.gmra.mrb[0].mxu0 %v310
      %v430 = vpop.f32.mrb[0].mxu0
      %v431 = vadd.f32 %v286, %v430
      %v432 = vpop.f32.mrb[0].mxu0
      %v433 = vpop.f32.mrb[0].mxu0
      %v434 = vadd.f32 %v286, %v433
      %v435 = vpop.f32.mrb[0].mxu0
      %436 = vmatprep.mubr.bf16.mxu0 0
      %437 = vmatmul.mubr.bf16.gmra.mrb[0].mxu0 %v313
      %v438 = vpop.f32.mrb[0].mxu0
      %v439 = vadd.f32 %v286, %v438
      %v440 = vpop.f32.mrb[0].mxu0
      %v441 = vpop.f32.mrb[0].mxu0
      %v442 = vadd.f32 %v286, %v441
      %v443 = vpop.f32.mrb[0].mxu0
      %444 = vmatprep.mubr.bf16.mxu0 0
      %445 = vmatmul.mubr.bf16.gmra.mrb[0].mxu0 %v316
      %v446 = vpop.f32.mrb[0].mxu0
      %v447 = vadd.f32 %v286, %v446
      %v448 = vpop.f32.mrb[0].mxu0
      %v449 = vpop.f32.mrb[0].mxu0
      %v450 = vadd.f32 %v286, %v449
      %v451 = vpop.f32.mrb[0].mxu0
      %452 = vmatprep.mubr.bf16.mxu0 0
      %453 = vmatmul.mubr.bf16.gmra.mrb[0].mxu0 %v319
      %v454 = vpop.f32.mrb[0].mxu0
      %v455 = vadd.f32 %v286, %v454
      %v456 = vpop.f32.mrb[0].mxu0
      %v457 = vpop.f32.mrb[0].mxu0
      %v458 = vadd.f32 %v286, %v457
      %v459 = vpop.f32.mrb[0].mxu0
      %460 = vmatprep.mubr.bf16.mxu0 0
      %461 = vmatmul.mubr.bf16.gmra.mrb[0].mxu0 %v322
      %v462 = vpop.f32.mrb[0].mxu0
      %v463 = vadd.f32 %v286, %v462
      %v464 = vpop.f32.mrb[0].mxu0
      %v465 = vpop.f32.mrb[0].mxu0
      %v466 = vadd.f32 %v286, %v465
      %v467 = vpop.f32.mrb[0].mxu0
      %468 = vmatprep.mubr.bf16.mxu0 0
      %469 = vmatmul.mubr.bf16.gmra.mrb[0].mxu0 %v325
      %v470 = vpop.f32.mrb[0].mxu0
      %v471 = vadd.f32 %v286, %v470
      %v472 = vpop.f32.mrb[0].mxu0
      %v473 = vpop.f32.mrb[0].mxu0
      %v474 = vadd.f32 %v286, %v473
      %v475 = vpop.f32.mrb[0].mxu0
      %476 = vmatprep.mubr.bf16.mxu0 0
      %477 = vmatmul.mubr.bf16.gmra.mrb[0].mxu0 %v328
      %v478 = vpop.f32.mrb[0].mxu0
      %v479 = vadd.f32 %v286, %v478
      %v480 = vpop.f32.mrb[0].mxu0
      %v481 = vpop.f32.mrb[0].mxu0
      %v482 = vadd.f32 %v286, %v481
      %v483 = vpop.f32.mrb[0].mxu0
      %484 = vmatprep.mubr.bf16.mxu0 0
      %485 = vmatmul.mubr.bf16.gmra.mrb[0].mxu0 %v331
      %v486 = vpop.f32.mrb[0].mxu0
      %v487 = vadd.f32 %v286, %v486
      %v488 = vpop.f32.mrb[0].mxu0
      %v489 = vpop.f32.mrb[0].mxu0
      %v490 = vadd.f32 %v286, %v489
      %v491 = vpop.f32.mrb[0].mxu0
      %492 = vmatprep.mubr.bf16.mxu0 0
      %493 = vmatmul.mubr.bf16.gmra.mrb[0].mxu0 %v334
      %v494 = vpop.f32.mrb[0].mxu0
      %v495 = vadd.f32 %v286, %v494
      %v496 = vpop.f32.mrb[0].mxu0
      %v497 = vpop.f32.mrb[0].mxu0
      %v498 = vadd.f32 %v286, %v497
      %v499 = vpop.f32.mrb[0].mxu0
      %500 = vdwg.mxu0
      %v501 = vmin.f32 %v375, 20.0
      %v502 = vmin.f32 %v378, 20.0
      %v503 = vmin.f32 %v383, 20.0
      %v504 = vmin.f32 %v386, 20.0
      %v505 = vmin.f32 %v391, 20.0
      %v506 = vmin.f32 %v394, 20.0
      %v507 = vmin.f32 %v399, 20.0
      %v508 = vmin.f32 %v402, 20.0
      %v509 = vmin.f32 %v407, 20.0
      %v510 = vmin.f32 %v410, 20.0
      %v511 = vmin.f32 %v415, 20.0
      %v512 = vmin.f32 %v418, 20.0
      %v513 = vmin.f32 %v423, 20.0
      %v514 = vmin.f32 %v426, 20.0
      %v515 = vmin.f32 %v431, 20.0
      %v516 = vmin.f32 %v434, 20.0
      %v517 = vmin.f32 %v439, 20.0
      %v518 = vmin.f32 %v442, 20.0
      %v519 = vmin.f32 %v447, 20.0
      %v520 = vmin.f32 %v450, 20.0
      %v521 = vmin.f32 %v455, 20.0
      %v522 = vmin.f32 %v458, 20.0
      %v523 = vmin.f32 %v463, 20.0
      %v524 = vmin.f32 %v466, 20.0
      %v525 = vmin.f32 %v471, 20.0
      %v526 = vmin.f32 %v474, 20.0
      %v527 = vmin.f32 %v479, 20.0
      %v528 = vmin.f32 %v482, 20.0
      %v529 = vmin.f32 %v487, 20.0
      %v530 = vmin.f32 %v490, 20.0
      %v531 = vmin.f32 %v495, 20.0
      %v532 = vmin.f32 %v498, 20.0
      %v533 = vmul.f32 %v501, 1.442695
      %v534 = vpow.pop %v533
      %v535 = vmul.f32 %v502, 1.442695
      %v536 = vpow.pop %v535
      %v537 = vmul.f32 %v503, 1.442695
      %v538 = vpow.pop %v537
      %v539 = vmul.f32 %v504, 1.442695
      %v540 = vpow.pop %v539
      %v541 = vmul.f32 %v505, 1.442695
      %v542 = vpow.pop %v541
      %v543 = vmul.f32 %v506, 1.442695
      %v544 = vpow.pop %v543
      %v545 = vmul.f32 %v507, 1.442695
      %v546 = vpow.pop %v545
      %v547 = vmul.f32 %v508, 1.442695
      %v548 = vpow.pop %v547
      %v549 = vmul.f32 %v509, 1.442695
      %v550 = vpow.pop %v549
      %v551 = vmul.f32 %v510, 1.442695
      %v552 = vpow.pop %v551
      %v553 = vmul.f32 %v511, 1.442695
      %v554 = vpow.pop %v553
      %v555 = vmul.f32 %v512, 1.442695
      %v556 = vpow.pop %v555
      %v557 = vmul.f32 %v513, 1.442695
      %v558 = vpow.pop %v557
      %v559 = vmul.f32 %v514, 1.442695
      %v560 = vpow.pop %v559
      %v561 = vmul.f32 %v515, 1.442695
      %v562 = vpow.pop %v561
      %v563 = vmul.f32 %v516, 1.442695
      %v564 = vpow.pop %v563
      %v565 = vmul.f32 %v517, 1.442695
      %v566 = vpow.pop %v565
      %v567 = vmul.f32 %v518, 1.442695
      %v568 = vpow.pop %v567
      %v569 = vmul.f32 %v519, 1.442695
      %v570 = vpow.pop %v569
      %v571 = vmul.f32 %v520, 1.442695
      %v572 = vpow.pop %v571
      %v573 = vmul.f32 %v521, 1.442695
      %v574 = vpow.pop %v573
      %v575 = vmul.f32 %v522, 1.442695
      %v576 = vpow.pop %v575
      %v577 = vmul.f32 %v523, 1.442695
      %v578 = vpow.pop %v577
      %v579 = vmul.f32 %v524, 1.442695
      %v580 = vpow.pop %v579
      %v581 = vmul.f32 %v525, 1.442695
      %v582 = vpow.pop %v581
      %v583 = vmul.f32 %v526, 1.442695
      %v584 = vpow.pop %v583
      %v585 = vmul.f32 %v527, 1.442695
      %v586 = vpow.pop %v585
      %v587 = vmul.f32 %v528, 1.442695
      %v588 = vpow.pop %v587
      %v589 = vmul.f32 %v529, 1.442695
      %v590 = vpow.pop %v589
      %v591 = vmul.f32 %v530, 1.442695
      %v592 = vpow.pop %v591
      %v593 = vmul.f32 %v531, 1.442695
      %v594 = vpow.pop %v593
      %v595 = vmul.f32 %v532, 1.442695
      %v596 = vpow.pop %v595
      %v597 = vadd.f32 %v534, 1.0
      %v598 = vadd.f32 %v536, 1.0
      %v599 = vadd.f32 %v538, 1.0
      %v600 = vadd.f32 %v540, 1.0
      %v601 = vadd.f32 %v542, 1.0
      %v602 = vadd.f32 %v544, 1.0
      %v603 = vadd.f32 %v546, 1.0
      %v604 = vadd.f32 %v548, 1.0
      %v605 = vadd.f32 %v550, 1.0
      %v606 = vadd.f32 %v552, 1.0
      %v607 = vadd.f32 %v554, 1.0
      %v608 = vadd.f32 %v556, 1.0
      %v609 = vadd.f32 %v558, 1.0
      %v610 = vadd.f32 %v560, 1.0
      %v611 = vadd.f32 %v562, 1.0
      %v612 = vadd.f32 %v564, 1.0
      %v613 = vadd.f32 %v566, 1.0
      %v614 = vadd.f32 %v568, 1.0
      %v615 = vadd.f32 %v570, 1.0
      %v616 = vadd.f32 %v572, 1.0
      %v617 = vadd.f32 %v574, 1.0
      %v618 = vadd.f32 %v576, 1.0
      %v619 = vadd.f32 %v578, 1.0
      %v620 = vadd.f32 %v580, 1.0
      %v621 = vadd.f32 %v582, 1.0
      %v622 = vadd.f32 %v584, 1.0
      %v623 = vadd.f32 %v586, 1.0
      %v624 = vadd.f32 %v588, 1.0
      %v625 = vadd.f32 %v590, 1.0
      %v626 = vadd.f32 %v592, 1.0
      %v627 = vadd.f32 %v594, 1.0
      %v628 = vadd.f32 %v596, 1.0
      %v629 = vmul.f32 %v597, %v597
      %v630 = vmul.f32 %v598, %v598
      %v631 = vmul.f32 %v599, %v599
      %v632 = vmul.f32 %v600, %v600
      %v633 = vmul.f32 %v601, %v601
      %v634 = vmul.f32 %v602, %v602
      %v635 = vmul.f32 %v603, %v603
      %v636 = vmul.f32 %v604, %v604
      %v637 = vmul.f32 %v605, %v605
      %v638 = vmul.f32 %v606, %v606
      %v639 = vmul.f32 %v607, %v607
      %v640 = vmul.f32 %v608, %v608
      %v641 = vmul.f32 %v609, %v609
      %v642 = vmul.f32 %v610, %v610
      %v643 = vmul.f32 %v611, %v611
      %v644 = vmul.f32 %v612, %v612
      %v645 = vmul.f32 %v613, %v613
      %v646 = vmul.f32 %v614, %v614
      %v647 = vmul.f32 %v615, %v615
      %v648 = vmul.f32 %v616, %v616
      %v649 = vmul.f32 %v617, %v617
      %v650 = vmul.f32 %v618, %v618
      %v651 = vmul.f32 %v619, %v619
      %v652 = vmul.f32 %v620, %v620
      %v653 = vmul.f32 %v621, %v621
      %v654 = vmul.f32 %v622, %v622
      %v655 = vmul.f32 %v623, %v623
      %v656 = vmul.f32 %v624, %v624
      %v657 = vmul.f32 %v625, %v625
      %v658 = vmul.f32 %v626, %v626
      %v659 = vmul.f32 %v627, %v627
      %v660 = vmul.f32 %v628, %v628
      %v661 = vadd.f32 %v629, 1.0
      %v662 = vadd.f32 %v630, 1.0
      %v663 = vadd.f32 %v631, 1.0
      %v664 = vadd.f32 %v632, 1.0
      %v665 = vadd.f32 %v633, 1.0
      %v666 = vadd.f32 %v634, 1.0
      %v667 = vadd.f32 %v635, 1.0
      %v668 = vadd.f32 %v636, 1.0
      %v669 = vadd.f32 %v637, 1.0
      %v670 = vadd.f32 %v638, 1.0
      %v671 = vadd.f32 %v639, 1.0
      %v672 = vadd.f32 %v640, 1.0
      %v673 = vadd.f32 %v641, 1.0
      %v674 = vadd.f32 %v642, 1.0
      %v675 = vadd.f32 %v643, 1.0
      %v676 = vadd.f32 %v644, 1.0
      %v677 = vadd.f32 %v645, 1.0
      %v678 = vadd.f32 %v646, 1.0
      %v679 = vadd.f32 %v647, 1.0
      %v680 = vadd.f32 %v648, 1.0
      %v681 = vadd.f32 %v649, 1.0
      %v682 = vadd.f32 %v650, 1.0
      %v683 = vadd.f32 %v651, 1.0
      %v684 = vadd.f32 %v652, 1.0
      %v685 = vadd.f32 %v653, 1.0
      %v686 = vadd.f32 %v654, 1.0
      %v687 = vadd.f32 %v655, 1.0
      %v688 = vadd.f32 %v656, 1.0
      %v689 = vadd.f32 %v657, 1.0
      %v690 = vadd.f32 %v658, 1.0
      %v691 = vadd.f32 %v659, 1.0
      %v692 = vadd.f32 %v660, 1.0
      %v693 = vrcp.pop %v661
      %v694 = vrcp.pop %v662
      %v695 = vrcp.pop %v663
      %v696 = vrcp.pop %v664
      %v697 = vrcp.pop %v665
      %v698 = vrcp.pop %v666
      %v699 = vrcp.pop %v667
      %v700 = vrcp.pop %v668
      %v701 = vrcp.pop %v669
      %v702 = vrcp.pop %v670
      %v703 = vrcp.pop %v671
      %v704 = vrcp.pop %v672
      %v705 = vrcp.pop %v673
      %v706 = vrcp.pop %v674
      %v707 = vrcp.pop %v675
      %v708 = vrcp.pop %v676
      %v709 = vrcp.pop %v677
      %v710 = vrcp.pop %v678
      %v711 = vrcp.pop %v679
      %v712 = vrcp.pop %v680
      %v713 = vrcp.pop %v681
      %v714 = vrcp.pop %v682
      %v715 = vrcp.pop %v683
      %v716 = vrcp.pop %v684
      %v717 = vrcp.pop %v685
      %v718 = vrcp.pop %v686
      %v719 = vrcp.pop %v687
      %v720 = vrcp.pop %v688
      %v721 = vrcp.pop %v689
      %v722 = vrcp.pop %v690
      %v723 = vrcp.pop %v691
      %v724 = vrcp.pop %v692
      %v725 = vmul.f32 %v693, 2.0
      %v726 = vmul.f32 %v694, 2.0
      %v727 = vmul.f32 %v695, 2.0
      %v728 = vmul.f32 %v696, 2.0
      %v729 = vmul.f32 %v697, 2.0
      %v730 = vmul.f32 %v698, 2.0
      %v731 = vmul.f32 %v699, 2.0
      %v732 = vmul.f32 %v700, 2.0
      %v733 = vmul.f32 %v701, 2.0
      %v734 = vmul.f32 %v702, 2.0
      %v735 = vmul.f32 %v703, 2.0
      %v736 = vmul.f32 %v704, 2.0
      %v737 = vmul.f32 %v705, 2.0
      %v738 = vmul.f32 %v706, 2.0
      %v739 = vmul.f32 %v707, 2.0
      %v740 = vmul.f32 %v708, 2.0
      %v741 = vmul.f32 %v709, 2.0
      %v742 = vmul.f32 %v710, 2.0
      %v743 = vmul.f32 %v711, 2.0
      %v744 = vmul.f32 %v712, 2.0
      %v745 = vmul.f32 %v713, 2.0
      %v746 = vmul.f32 %v714, 2.0
      %v747 = vmul.f32 %v715, 2.0
      %v748 = vmul.f32 %v716, 2.0
      %v749 = vmul.f32 %v717, 2.0
      %v750 = vmul.f32 %v718, 2.0
      %v751 = vmul.f32 %v719, 2.0
      %v752 = vmul.f32 %v720, 2.0
      %v753 = vmul.f32 %v721, 2.0
      %v754 = vmul.f32 %v722, 2.0
      %v755 = vmul.f32 %v723, 2.0
      %v756 = vmul.f32 %v724, 2.0
      %v757 = vsub.f32 1.0, %v725
      %v758 = vsub.f32 1.0, %v726
      %v759 = vsub.f32 1.0, %v727
      %v760 = vsub.f32 1.0, %v728
      %v761 = vsub.f32 1.0, %v729
      %v762 = vsub.f32 1.0, %v730
      %v763 = vsub.f32 1.0, %v731
      %v764 = vsub.f32 1.0, %v732
      %v765 = vsub.f32 1.0, %v733
      %v766 = vsub.f32 1.0, %v734
      %v767 = vsub.f32 1.0, %v735
      %v768 = vsub.f32 1.0, %v736
      %v769 = vsub.f32 1.0, %v737
      %v770 = vsub.f32 1.0, %v738
      %v771 = vsub.f32 1.0, %v739
      %v772 = vsub.f32 1.0, %v740
      %v773 = vsub.f32 1.0, %v741
      %v774 = vsub.f32 1.0, %v742
      %v775 = vsub.f32 1.0, %v743
      %v776 = vsub.f32 1.0, %v744
      %v777 = vsub.f32 1.0, %v745
      %v778 = vsub.f32 1.0, %v746
      %v779 = vsub.f32 1.0, %v747
      %v780 = vsub.f32 1.0, %v748
      %v781 = vsub.f32 1.0, %v749
      %v782 = vsub.f32 1.0, %v750
      %v783 = vsub.f32 1.0, %v751
      %v784 = vsub.f32 1.0, %v752
      %v785 = vsub.f32 1.0, %v753
      %v786 = vsub.f32 1.0, %v754
      %v787 = vsub.f32 1.0, %v755
      %v788 = vsub.f32 1.0, %v756
      %vm789 = vcmp.gt.f32.partialorder %v375, 20.0
      %vm790 = vcmp.gt.f32.partialorder %v378, 20.0
      %vm791 = vcmp.gt.f32.partialorder %v383, 20.0
      %vm792 = vcmp.gt.f32.partialorder %v386, 20.0
      %vm793 = vcmp.gt.f32.partialorder %v391, 20.0
      %vm794 = vcmp.gt.f32.partialorder %v394, 20.0
      %vm795 = vcmp.gt.f32.partialorder %v399, 20.0
      %vm796 = vcmp.gt.f32.partialorder %v402, 20.0
      %vm797 = vcmp.gt.f32.partialorder %v407, 20.0
      %vm798 = vcmp.gt.f32.partialorder %v410, 20.0
      %vm799 = vcmp.gt.f32.partialorder %v415, 20.0
      %vm800 = vcmp.gt.f32.partialorder %v418, 20.0
      %vm801 = vcmp.gt.f32.partialorder %v423, 20.0
      %vm802 = vcmp.gt.f32.partialorder %v426, 20.0
      %vm803 = vcmp.gt.f32.partialorder %v431, 20.0
      %vm804 = vcmp.gt.f32.partialorder %v434, 20.0
      %vm805 = vcmp.gt.f32.partialorder %v439, 20.0
      %vm806 = vcmp.gt.f32.partialorder %v442, 20.0
      %vm807 = vcmp.gt.f32.partialorder %v447, 20.0
      %vm808 = vcmp.gt.f32.partialorder %v450, 20.0
      %vm809 = vcmp.gt.f32.partialorder %v455, 20.0
      %vm810 = vcmp.gt.f32.partialorder %v458, 20.0
      %vm811 = vcmp.gt.f32.partialorder %v463, 20.0
      %vm812 = vcmp.gt.f32.partialorder %v466, 20.0
      %vm813 = vcmp.gt.f32.partialorder %v471, 20.0
      %vm814 = vcmp.gt.f32.partialorder %v474, 20.0
      %vm815 = vcmp.gt.f32.partialorder %v479, 20.0
      %vm816 = vcmp.gt.f32.partialorder %v482, 20.0
      %vm817 = vcmp.gt.f32.partialorder %v487, 20.0
      %vm818 = vcmp.gt.f32.partialorder %v490, 20.0
      %vm819 = vcmp.gt.f32.partialorder %v495, 20.0
      %vm820 = vcmp.gt.f32.partialorder %v498, 20.0
      %v821 = vmul.f32 %v375, %v757
      %v822 = vmul.f32 %v378, %v758
      %v823 = vmul.f32 %v383, %v759
      %v824 = vmul.f32 %v386, %v760
      %v825 = vmul.f32 %v391, %v761
      %v826 = vmul.f32 %v394, %v762
      %v827 = vmul.f32 %v399, %v763
      %v828 = vmul.f32 %v402, %v764
      %v829 = vmul.f32 %v407, %v765
      %v830 = vmul.f32 %v410, %v766
      %v831 = vmul.f32 %v415, %v767
      %v832 = vmul.f32 %v418, %v768
      %v833 = vmul.f32 %v423, %v769
      %v834 = vmul.f32 %v426, %v770
      %v835 = vmul.f32 %v431, %v771
      %v836 = vmul.f32 %v434, %v772
      %v837 = vmul.f32 %v439, %v773
      %v838 = vmul.f32 %v442, %v774
      %v839 = vmul.f32 %v447, %v775
      %v840 = vmul.f32 %v450, %v776
      %v841 = vmul.f32 %v455, %v777
      %v842 = vmul.f32 %v458, %v778
      %v843 = vmul.f32 %v463, %v779
      %v844 = vmul.f32 %v466, %v780
      %v845 = vmul.f32 %v471, %v781
      %v846 = vmul.f32 %v474, %v782
      %v847 = vmul.f32 %v479, %v783
      %v848 = vmul.f32 %v482, %v784
      %v849 = vmul.f32 %v487, %v785
      %v850 = vmul.f32 %v490, %v786
      %v851 = vmul.f32 %v495, %v787
      %v852 = vmul.f32 %v498, %v788
      %v853 = vsel %vm789, %v375, %v821
      %v854 = vsel %vm790, %v378, %v822
      %v855 = vsel %vm791, %v383, %v823
      %v856 = vsel %vm792, %v386, %v824
      %v857 = vsel %vm793, %v391, %v825
      %v858 = vsel %vm794, %v394, %v826
      %v859 = vsel %vm795, %v399, %v827
      %v860 = vsel %vm796, %v402, %v828
      %v861 = vsel %vm797, %v407, %v829
      %v862 = vsel %vm798, %v410, %v830
      %v863 = vsel %vm799, %v415, %v831
      %v864 = vsel %vm800, %v418, %v832
      %v865 = vsel %vm801, %v423, %v833
      %v866 = vsel %vm802, %v426, %v834
      %v867 = vsel %vm803, %v431, %v835
      %v868 = vsel %vm804, %v434, %v836
      %v869 = vsel %vm805, %v439, %v837
      %v870 = vsel %vm806, %v442, %v838
      %v871 = vsel %vm807, %v447, %v839
      %v872 = vsel %vm808, %v450, %v840
      %v873 = vsel %vm809, %v455, %v841
      %v874 = vsel %vm810, %v458, %v842
      %v875 = vsel %vm811, %v463, %v843
      %v876 = vsel %vm812, %v466, %v844
      %v877 = vsel %vm813, %v471, %v845
      %v878 = vsel %vm814, %v474, %v846
      %v879 = vsel %vm815, %v479, %v847
      %v880 = vsel %vm816, %v482, %v848
      %v881 = vsel %vm817, %v487, %v849
      %v882 = vsel %vm818, %v490, %v850
      %v883 = vsel %vm819, %v495, %v851
      %v884 = vsel %vm820, %v498, %v852
      %s885 = scalar_lea.vmem [#allocation2], 16
      %886 = vst.msk [vmem:[%s885] sm:$0xff] %vm258, %v853
      %887 = vst.msk [vmem:[%s885 + $0x8] sm:$0xff] %vm258, %v854
      %888 = vst.msk [vmem:[%s885 + $0x10] sm:$0xff] %vm258, %v855
      %889 = vst.msk [vmem:[%s885 + $0x18] sm:$0xff] %vm258, %v856
      %890 = vst.msk [vmem:[%s885 + $0x20] sm:$0xff] %vm258, %v857
      %891 = vst.msk [vmem:[%s885 + $0x28] sm:$0xff] %vm258, %v858
      %892 = vst.msk [vmem:[%s885 + $0x30] sm:$0xff] %vm258, %v859
      %893 = vst.msk [vmem:[%s885 + $0x38] sm:$0xff] %vm258, %v860
      %894 = vst.msk [vmem:[%s885 + $0x40] sm:$0xff] %vm258, %v861
      %895 = vst.msk [vmem:[%s885 + $0x48] sm:$0xff] %vm258, %v862
      %896 = vst.msk [vmem:[%s885 + $0x50] sm:$0xff] %vm258, %v863
      %897 = vst.msk [vmem:[%s885 + $0x58] sm:$0xff] %vm258, %v864
      %898 = vst.msk [vmem:[%s885 + $0x60] sm:$0xff] %vm258, %v865
      %899 = vst.msk [vmem:[%s885 + $0x68] sm:$0xff] %vm258, %v866
      %900 = vst.msk [vmem:[%s885 + $0x70] sm:$0xff] %vm258, %v867
      %901 = vst.msk [vmem:[%s885 + $0x78] sm:$0xff] %vm258, %v868
      %902 = vst.msk [vmem:[%s885 + $0x80] sm:$0xff] %vm258, %v869
      %903 = vst.msk [vmem:[%s885 + $0x88] sm:$0xff] %vm258, %v870
      %904 = vst.msk [vmem:[%s885 + $0x90] sm:$0xff] %vm258, %v871
      %905 = vst.msk [vmem:[%s885 + $0x98] sm:$0xff] %vm258, %v872
      %906 = vst.msk [vmem:[%s885 + $0xa0] sm:$0xff] %vm258, %v873
      %907 = vst.msk [vmem:[%s885 + $0xa8] sm:$0xff] %vm258, %v874
      %908 = vst.msk [vmem:[%s885 + $0xb0] sm:$0xff] %vm258, %v875
      %909 = vst.msk [vmem:[%s885 + $0xb8] sm:$0xff] %vm258, %v876
      %910 = vst.msk [vmem:[%s885 + $0xc0] sm:$0xff] %vm258, %v877
      %911 = vst.msk [vmem:[%s885 + $0xc8] sm:$0xff] %vm258, %v878
      %912 = vst.msk [vmem:[%s885 + $0xd0] sm:$0xff] %vm258, %v879
      %913 = vst.msk [vmem:[%s885 + $0xd8] sm:$0xff] %vm258, %v880
      %914 = vst.msk [vmem:[%s885 + $0xe0] sm:$0xff] %vm258, %v881
      %915 = vst.msk [vmem:[%s885 + $0xe8] sm:$0xff] %vm258, %v882
      %916 = vst.msk [vmem:[%s885 + $0xf0] sm:$0xff] %vm258, %v883
      %917 = vst.msk [vmem:[%s885 + $0xf8] sm:$0xff] %vm258, %v884
      %v918 = vld [vmem:[#allocation2] sm:$0xff]
      %v919 = vld [vmem:[#allocation2 + $0x8] sm:$0xff]
      %v920 = vld [vmem:[#allocation2 + $0x10] sm:$0xff]
      %v921 = vld [vmem:[#allocation2 + $0x18] sm:$0xff]
      %v922 = vld [vmem:[#allocation2 + $0x20] sm:$0xff]
      %v923 = vld [vmem:[#allocation2 + $0x28] sm:$0xff]
      %v924 = vld [vmem:[#allocation2 + $0x30] sm:$0xff]
      %v925 = vld [vmem:[#allocation2 + $0x38] sm:$0xff]
      %v926 = vld [vmem:[#allocation2 + $0x40] sm:$0xff]
      %v927 = vld [vmem:[#allocation2 + $0x48] sm:$0xff]
      %v928 = vld [vmem:[#allocation2 + $0x50] sm:$0xff]
      %v929 = vld [vmem:[#allocation2 + $0x58] sm:$0xff]
      %v930 = vld [vmem:[#allocation2 + $0x60] sm:$0xff]
      %v931 = vld [vmem:[#allocation2 + $0x68] sm:$0xff]
      %v932 = vld [vmem:[#allocation2 + $0x70] sm:$0xff]
      %v933 = vld [vmem:[#allocation2 + $0x78] sm:$0xff]
      %v934 = vld [vmem:[#allocation2 + $0x80] sm:$0xff]
      %v935 = vld [vmem:[#allocation2 + $0x88] sm:$0xff]
      %v936 = vld [vmem:[#allocation2 + $0x90] sm:$0xff]
      %v937 = vld [vmem:[#allocation2 + $0x98] sm:$0xff]
      %v938 = vld [vmem:[#allocation2 + $0xa0] sm:$0xff]
      %v939 = vld [vmem:[#allocation2 + $0xa8] sm:$0xff]
      %v940 = vld [vmem:[#allocation2 + $0xb0] sm:$0xff]
      %v941 = vld [vmem:[#allocation2 + $0xb8] sm:$0xff]
      %v942 = vld [vmem:[#allocation2 + $0xc0] sm:$0xff]
      %v943 = vld [vmem:[#allocation2 + $0xc8] sm:$0xff]
      %v944 = vld [vmem:[#allocation2 + $0xd0] sm:$0xff]
      %v945 = vld [vmem:[#allocation2 + $0xd8] sm:$0xff]
      %v946 = vld [vmem:[#allocation2 + $0xe0] sm:$0xff]
      %v947 = vld [vmem:[#allocation2 + $0xe8] sm:$0xff]
      %v948 = vld [vmem:[#allocation2 + $0xf0] sm:$0xff]
      %v949 = vld [vmem:[#allocation2 + $0xf8] sm:$0xff]
      %vm982 = vcmask 1040384
      %v983 = vrot.slane %v918, 7
      %v984 = vrot.slane %v919, 7
      %v985 = vsel %vm982, %v983, %v984
      %v986 = vrot.slane %v920, 7
      %v987 = vrot.slane %v921, 7
      %v988 = vsel %vm982, %v986, %v987
      %v989 = vrot.slane %v922, 7
      %v990 = vrot.slane %v923, 7
      %v991 = vsel %vm982, %v989, %v990
      %v992 = vrot.slane %v924, 7
      %v993 = vrot.slane %v925, 7
      %v994 = vsel %vm982, %v992, %v993
      %v995 = vrot.slane %v926, 7
      %v996 = vrot.slane %v927, 7
      %v997 = vsel %vm982, %v995, %v996
      %v998 = vrot.slane %v928, 7
      %v999 = vrot.slane %v929, 7
      %v1000 = vsel %vm982, %v998, %v999
      %v1001 = vrot.slane %v930, 7
      %v1002 = vrot.slane %v931, 7
      %v1003 = vsel %vm982, %v1001, %v1002
      %v1004 = vrot.slane %v932, 7
      %v1005 = vrot.slane %v933, 7
      %v1006 = vsel %vm982, %v1004, %v1005
      %v1007 = vrot.slane %v934, 7
      %v1008 = vrot.slane %v935, 7
      %v1009 = vsel %vm982, %v1007, %v1008
      %v1010 = vrot.slane %v936, 7
      %v1011 = vrot.slane %v937, 7
      %v1012 = vsel %vm982, %v1010, %v1011
      %v1013 = vrot.slane %v938, 7
      %v1014 = vrot.slane %v939, 7
      %v1015 = vsel %vm982, %v1013, %v1014
      %v1016 = vrot.slane %v940, 7
      %v1017 = vrot.slane %v941, 7
      %v1018 = vsel %vm982, %v1016, %v1017
      %v1019 = vrot.slane %v942, 7
      %v1020 = vrot.slane %v943, 7
      %v1021 = vsel %vm982, %v1019, %v1020
      %v1022 = vrot.slane %v944, 7
      %v1023 = vrot.slane %v945, 7
      %v1024 = vsel %vm982, %v1022, %v1023
      %v1025 = vrot.slane %v946, 7
      %v1026 = vrot.slane %v947, 7
      %v1027 = vsel %vm982, %v1025, %v1026
      %v1028 = vrot.slane %v948, 7
      %v1029 = vrot.slane %v949, 7
      %v1030 = vsel %vm982, %v1028, %v1029
      %v1063 = vsel %vm982, 0.0, %v983
      %v1064 = vsel %vm982, 0.0, %v986
      %v1065 = vsel %vm982, 0.0, %v989
      %v1066 = vsel %vm982, 0.0, %v992
      %v1067 = vsel %vm982, 0.0, %v995
      %v1068 = vsel %vm982, 0.0, %v998
      %v1069 = vsel %vm982, 0.0, %v1001
      %v1070 = vsel %vm982, 0.0, %v1004
      %v1071 = vsel %vm982, 0.0, %v1007
      %v1072 = vsel %vm982, 0.0, %v1010
      %v1073 = vsel %vm982, 0.0, %v1013
      %v1074 = vsel %vm982, 0.0, %v1016
      %v1075 = vsel %vm982, 0.0, %v1019
      %v1076 = vsel %vm982, 0.0, %v1022
      %v1077 = vsel %vm982, 0.0, %v1025
      %v1078 = vsel %vm982, 0.0, %v1028
      %vm1079 = vcmask 1046528
      %v1080 = vrot.slane %v918, 1
      %v1081 = vrot.slane %v919, 1
      %v1082 = vsel %vm1079, %v1080, %v1081
      %v1083 = vrot.slane %v920, 1
      %v1084 = vrot.slane %v921, 1
      %v1085 = vsel %vm1079, %v1083, %v1084
      %v1086 = vrot.slane %v922, 1
      %v1087 = vrot.slane %v923, 1
      %v1088 = vsel %vm1079, %v1086, %v1087
      %v1089 = vrot.slane %v924, 1
      %v1090 = vrot.slane %v925, 1
      %v1091 = vsel %vm1079, %v1089, %v1090
      %v1092 = vrot.slane %v926, 1
      %v1093 = vrot.slane %v927, 1
      %v1094 = vsel %vm1079, %v1092, %v1093
      %v1095 = vrot.slane %v928, 1
      %v1096 = vrot.slane %v929, 1
      %v1097 = vsel %vm1079, %v1095, %v1096
      %v1098 = vrot.slane %v930, 1
      %v1099 = vrot.slane %v931, 1
      %v1100 = vsel %vm1079, %v1098, %v1099
      %v1101 = vrot.slane %v932, 1
      %v1102 = vrot.slane %v933, 1
      %v1103 = vsel %vm1079, %v1101, %v1102
      %v1104 = vrot.slane %v934, 1
      %v1105 = vrot.slane %v935, 1
      %v1106 = vsel %vm1079, %v1104, %v1105
      %v1107 = vrot.slane %v936, 1
      %v1108 = vrot.slane %v937, 1
      %v1109 = vsel %vm1079, %v1107, %v1108
      %v1110 = vrot.slane %v938, 1
      %v1111 = vrot.slane %v939, 1
      %v1112 = vsel %vm1079, %v1110, %v1111
      %v1113 = vrot.slane %v940, 1
      %v1114 = vrot.slane %v941, 1
      %v1115 = vsel %vm1079, %v1113, %v1114
      %v1116 = vrot.slane %v942, 1
      %v1117 = vrot.slane %v943, 1
      %v1118 = vsel %vm1079, %v1116, %v1117
      %v1119 = vrot.slane %v944, 1
      %v1120 = vrot.slane %v945, 1
      %v1121 = vsel %vm1079, %v1119, %v1120
      %v1122 = vrot.slane %v946, 1
      %v1123 = vrot.slane %v947, 1
      %v1124 = vsel %vm1079, %v1122, %v1123
      %v1125 = vrot.slane %v948, 1
      %v1126 = vrot.slane %v949, 1
      %v1127 = vsel %vm1079, %v1125, %v1126
      %v1144 = vsel %vm1079, %v1081, 0.0
      %v1145 = vsel %vm1079, %v1084, 0.0
      %v1146 = vsel %vm1079, %v1087, 0.0
      %v1147 = vsel %vm1079, %v1090, 0.0
      %v1148 = vsel %vm1079, %v1093, 0.0
      %v1149 = vsel %vm1079, %v1096, 0.0
      %v1150 = vsel %vm1079, %v1099, 0.0
      %v1151 = vsel %vm1079, %v1102, 0.0
      %v1152 = vsel %vm1079, %v1105, 0.0
      %v1153 = vsel %vm1079, %v1108, 0.0
      %v1154 = vsel %vm1079, %v1111, 0.0
      %v1155 = vsel %vm1079, %v1114, 0.0
      %v1156 = vsel %vm1079, %v1117, 0.0
      %v1157 = vsel %vm1079, %v1120, 0.0
      %v1158 = vsel %vm1079, %v1123, 0.0
      %v1159 = vsel %vm1079, %v1126, 0.0
      %1160 = vrot.lane.b32.xlu0 %v918, 4
      %v1161 = vpop.permute.xlu0 %1160
      %1162 = vrot.lane.b32.xlu0 %v919, 4
      %v1163 = vpop.permute.xlu0 %1162
      %1164 = vrot.lane.b32.xlu0 %v920, 4
      %v1165 = vpop.permute.xlu0 %1164
      %1166 = vrot.lane.b32.xlu0 %v921, 4
      %v1167 = vpop.permute.xlu0 %1166
      %1168 = vrot.lane.b32.xlu0 %v922, 4
      %v1169 = vpop.permute.xlu0 %1168
      %1170 = vrot.lane.b32.xlu0 %v923, 4
      %v1171 = vpop.permute.xlu0 %1170
      %1172 = vrot.lane.b32.xlu0 %v924, 4
      %v1173 = vpop.permute.xlu0 %1172
      %1174 = vrot.lane.b32.xlu0 %v925, 4
      %v1175 = vpop.permute.xlu0 %1174
      %1176 = vrot.lane.b32.xlu0 %v926, 4
      %v1177 = vpop.permute.xlu0 %1176
      %1178 = vrot.lane.b32.xlu0 %v927, 4
      %v1179 = vpop.permute.xlu0 %1178
      %1180 = vrot.lane.b32.xlu0 %v928, 4
      %v1181 = vpop.permute.xlu0 %1180
      %1182 = vrot.lane.b32.xlu0 %v929, 4
      %v1183 = vpop.permute.xlu0 %1182
      %1184 = vrot.lane.b32.xlu0 %v930, 4
      %v1185 = vpop.permute.xlu0 %1184
      %1186 = vrot.lane.b32.xlu0 %v931, 4
      %v1187 = vpop.permute.xlu0 %1186
      %1188 = vrot.lane.b32.xlu0 %v932, 4
      %v1189 = vpop.permute.xlu0 %1188
      %1190 = vrot.lane.b32.xlu0 %v933, 4
      %v1191 = vpop.permute.xlu0 %1190
      %1192 = vrot.lane.b32.xlu0 %v934, 4
      %v1193 = vpop.permute.xlu0 %1192
      %1194 = vrot.lane.b32.xlu0 %v935, 4
      %v1195 = vpop.permute.xlu0 %1194
      %1196 = vrot.lane.b32.xlu0 %v936, 4
      %v1197 = vpop.permute.xlu0 %1196
      %1198 = vrot.lane.b32.xlu0 %v937, 4
      %v1199 = vpop.permute.xlu0 %1198
      %1200 = vrot.lane.b32.xlu0 %v938, 4
      %v1201 = vpop.permute.xlu0 %1200
      %1202 = vrot.lane.b32.xlu0 %v939, 4
      %v1203 = vpop.permute.xlu0 %1202
      %1204 = vrot.lane.b32.xlu0 %v940, 4
      %v1205 = vpop.permute.xlu0 %1204
      %1206 = vrot.lane.b32.xlu0 %v941, 4
      %v1207 = vpop.permute.xlu0 %1206
      %1208 = vrot.lane.b32.xlu0 %v942, 4
      %v1209 = vpop.permute.xlu0 %1208
      %1210 = vrot.lane.b32.xlu0 %v943, 4
      %v1211 = vpop.permute.xlu0 %1210
      %1212 = vrot.lane.b32.xlu0 %v944, 4
      %v1213 = vpop.permute.xlu0 %1212
      %1214 = vrot.lane.b32.xlu0 %v945, 4
      %v1215 = vpop.permute.xlu0 %1214
      %1216 = vrot.lane.b32.xlu0 %v946, 4
      %v1217 = vpop.permute.xlu0 %1216
      %1218 = vrot.lane.b32.xlu0 %v947, 4
      %v1219 = vpop.permute.xlu0 %1218
      %1220 = vrot.lane.b32.xlu0 %v948, 4
      %v1221 = vpop.permute.xlu0 %1220
      %1222 = vrot.lane.b32.xlu0 %v949, 4
      %v1223 = vpop.permute.xlu0 %1222
      %1272 = vrot.lane.b32.xlu0 %v1082, 8
      %v1273 = vpop.permute.xlu0 %1272
      %1274 = vrot.lane.b32.xlu0 %v1144, 8
      %v1275 = vpop.permute.xlu0 %1274
      %1276 = vrot.lane.b32.xlu0 %v1085, 8
      %v1277 = vpop.permute.xlu0 %1276
      %1278 = vrot.lane.b32.xlu0 %v1145, 8
      %v1279 = vpop.permute.xlu0 %1278
      %1280 = vrot.lane.b32.xlu0 %v1088, 8
      %v1281 = vpop.permute.xlu0 %1280
      %1282 = vrot.lane.b32.xlu0 %v1146, 8
      %v1283 = vpop.permute.xlu0 %1282
      %1284 = vrot.lane.b32.xlu0 %v1091, 8
      %v1285 = vpop.permute.xlu0 %1284
      %1286 = vrot.lane.b32.xlu0 %v1147, 8
      %v1287 = vpop.permute.xlu0 %1286
      %1288 = vrot.lane.b32.xlu0 %v1094, 8
      %v1289 = vpop.permute.xlu0 %1288
      %1290 = vrot.lane.b32.xlu0 %v1148, 8
      %v1291 = vpop.permute.xlu0 %1290
      %1292 = vrot.lane.b32.xlu0 %v1097, 8
      %v1293 = vpop.permute.xlu0 %1292
      %1294 = vrot.lane.b32.xlu0 %v1149, 8
      %v1295 = vpop.permute.xlu0 %1294
      %1296 = vrot.lane.b32.xlu0 %v1100, 8
      %v1297 = vpop.permute.xlu0 %1296
      %1298 = vrot.lane.b32.xlu0 %v1150, 8
      %v1299 = vpop.permute.xlu0 %1298
      %1300 = vrot.lane.b32.xlu0 %v1103, 8
      %v1301 = vpop.permute.xlu0 %1300
      %1302 = vrot.lane.b32.xlu0 %v1151, 8
      %v1303 = vpop.permute.xlu0 %1302
      %1304 = vrot.lane.b32.xlu0 %v1106, 8
      %v1305 = vpop.permute.xlu0 %1304
      %1306 = vrot.lane.b32.xlu0 %v1152, 8
      %v1307 = vpop.permute.xlu0 %1306
      %1308 = vrot.lane.b32.xlu0 %v1109, 8
      %v1309 = vpop.permute.xlu0 %1308
      %1310 = vrot.lane.b32.xlu0 %v1153, 8
      %v1311 = vpop.permute.xlu0 %1310
      %1312 = vrot.lane.b32.xlu0 %v1112, 8
      %v1313 = vpop.permute.xlu0 %1312
      %1314 = vrot.lane.b32.xlu0 %v1154, 8
      %v1315 = vpop.permute.xlu0 %1314
      %1316 = vrot.lane.b32.xlu0 %v1115, 8
      %v1317 = vpop.permute.xlu0 %1316
      %1318 = vrot.lane.b32.xlu0 %v1155, 8
      %v1319 = vpop.permute.xlu0 %1318
      %1320 = vrot.lane.b32.xlu0 %v1118, 8
      %v1321 = vpop.permute.xlu0 %1320
      %1322 = vrot.lane.b32.xlu0 %v1156, 8
      %v1323 = vpop.permute.xlu0 %1322
      %1324 = vrot.lane.b32.xlu0 %v1121, 8
      %v1325 = vpop.permute.xlu0 %1324
      %1326 = vrot.lane.b32.xlu0 %v1157, 8
      %v1327 = vpop.permute.xlu0 %1326
      %1328 = vrot.lane.b32.xlu0 %v1124, 8
      %v1329 = vpop.permute.xlu0 %1328
      %1330 = vrot.lane.b32.xlu0 %v1158, 8
      %v1331 = vpop.permute.xlu0 %1330
      %1332 = vrot.lane.b32.xlu0 %v1127, 8
      %v1333 = vpop.permute.xlu0 %1332
      %1334 = vrot.lane.b32.xlu0 %v1159, 8
      %v1335 = vpop.permute.xlu0 %1334
      %v1368 = vsel %vm258, %v1063, %v1161
      %v1369 = vsel %vm258, %v985, %v1163
      %v1370 = vsel %vm258, %v1064, %v1165
      %v1371 = vsel %vm258, %v988, %v1167
      %v1372 = vsel %vm258, %v1065, %v1169
      %v1373 = vsel %vm258, %v991, %v1171
      %v1374 = vsel %vm258, %v1066, %v1173
      %v1375 = vsel %vm258, %v994, %v1175
      %v1376 = vsel %vm258, %v1067, %v1177
      %v1377 = vsel %vm258, %v997, %v1179
      %v1378 = vsel %vm258, %v1068, %v1181
      %v1379 = vsel %vm258, %v1000, %v1183
      %v1380 = vsel %vm258, %v1069, %v1185
      %v1381 = vsel %vm258, %v1003, %v1187
      %v1382 = vsel %vm258, %v1070, %v1189
      %v1383 = vsel %vm258, %v1006, %v1191
      %v1384 = vsel %vm258, %v1071, %v1193
      %v1385 = vsel %vm258, %v1009, %v1195
      %v1386 = vsel %vm258, %v1072, %v1197
      %v1387 = vsel %vm258, %v1012, %v1199
      %v1388 = vsel %vm258, %v1073, %v1201
      %v1389 = vsel %vm258, %v1015, %v1203
      %v1390 = vsel %vm258, %v1074, %v1205
      %v1391 = vsel %vm258, %v1018, %v1207
      %v1392 = vsel %vm258, %v1075, %v1209
      %v1393 = vsel %vm258, %v1021, %v1211
      %v1394 = vsel %vm258, %v1076, %v1213
      %v1395 = vsel %vm258, %v1024, %v1215
      %v1396 = vsel %vm258, %v1077, %v1217
      %v1397 = vsel %vm258, %v1027, %v1219
      %v1398 = vsel %vm258, %v1078, %v1221
      %v1399 = vsel %vm258, %v1030, %v1223
      %vm1400 = vcmask 64512
      %v1401 = vsel %vm1400, %v1368, %v1273
      %v1402 = vsel %vm1400, %v1369, %v1275
      %v1403 = vsel %vm1400, %v1370, %v1277
      %v1404 = vsel %vm1400, %v1371, %v1279
      %v1405 = vsel %vm1400, %v1372, %v1281
      %v1406 = vsel %vm1400, %v1373, %v1283
      %v1407 = vsel %vm1400, %v1374, %v1285
      %v1408 = vsel %vm1400, %v1375, %v1287
      %v1409 = vsel %vm1400, %v1376, %v1289
      %v1410 = vsel %vm1400, %v1377, %v1291
      %v1411 = vsel %vm1400, %v1378, %v1293
      %v1412 = vsel %vm1400, %v1379, %v1295
      %v1413 = vsel %vm1400, %v1380, %v1297
      %v1414 = vsel %vm1400, %v1381, %v1299
      %v1415 = vsel %vm1400, %v1382, %v1301
      %v1416 = vsel %vm1400, %v1383, %v1303
      %v1417 = vsel %vm1400, %v1384, %v1305
      %v1418 = vsel %vm1400, %v1385, %v1307
      %v1419 = vsel %vm1400, %v1386, %v1309
      %v1420 = vsel %vm1400, %v1387, %v1311
      %v1421 = vsel %vm1400, %v1388, %v1313
      %v1422 = vsel %vm1400, %v1389, %v1315
      %v1423 = vsel %vm1400, %v1390, %v1317
      %v1424 = vsel %vm1400, %v1391, %v1319
      %v1425 = vsel %vm1400, %v1392, %v1321
      %v1426 = vsel %vm1400, %v1393, %v1323
      %v1427 = vsel %vm1400, %v1394, %v1325
      %v1428 = vsel %vm1400, %v1395, %v1327
      %v1429 = vsel %vm1400, %v1396, %v1329
      %v1430 = vsel %vm1400, %v1397, %v1331
      %v1431 = vsel %vm1400, %v1398, %v1333
      %v1432 = vsel %vm1400, %v1399, %v1335
      %v1433 = vpack.c.bf16 %v1402, %v1401
      %v1434 = vpack.c.bf16 %v1404, %v1403
      %v1435 = vpack.c.bf16 %v1406, %v1405
      %v1436 = vpack.c.bf16 %v1408, %v1407
      %v1437 = vpack.c.bf16 %v1410, %v1409
      %v1438 = vpack.c.bf16 %v1412, %v1411
      %v1439 = vpack.c.bf16 %v1414, %v1413
      %v1440 = vpack.c.bf16 %v1416, %v1415
      %v1441 = vpack.c.bf16 %v1418, %v1417
      %v1442 = vpack.c.bf16 %v1420, %v1419
      %v1443 = vpack.c.bf16 %v1422, %v1421
      %v1444 = vpack.c.bf16 %v1424, %v1423
      %v1445 = vpack.c.bf16 %v1426, %v1425
      %v1446 = vpack.c.bf16 %v1428, %v1427
      %v1447 = vpack.c.bf16 %v1430, %v1429
      %v1448 = vpack.c.bf16 %v1432, %v1431
      %v1449 = vld [vmem:[%s3] sm:$0xf]
      %v1450 = vld [vmem:[%s3 + $0x4] sm:$0x3]
      %v1451 = vld [vmem:[%s885] sm:$0xff]
      %v1452 = vld [vmem:[%s885 + $0x8] sm:$0xff]
      %v1453 = vld [vmem:[%s885 + $0x10] sm:$0xff]
      %v1454 = vld [vmem:[%s885 + $0x18] sm:$0xff]
      %v1455 = vld [vmem:[%s885 + $0x20] sm:$0xff]
      %v1456 = vld [vmem:[%s885 + $0x28] sm:$0xff]
      %v1457 = vld [vmem:[%s885 + $0x30] sm:$0xff]
      %v1458 = vld [vmem:[%s885 + $0x38] sm:$0xff]
      %v1459 = vld [vmem:[%s885 + $0x40] sm:$0xff]
      %v1460 = vld [vmem:[%s885 + $0x48] sm:$0xff]
      %v1461 = vld [vmem:[%s885 + $0x50] sm:$0xff]
      %v1462 = vld [vmem:[%s885 + $0x58] sm:$0xff]
      %v1463 = vld [vmem:[%s885 + $0x60] sm:$0xff]
      %v1464 = vld [vmem:[%s885 + $0x68] sm:$0xff]
      %v1465 = vld [vmem:[%s885 + $0x70] sm:$0xff]
      %v1466 = vld [vmem:[%s885 + $0x78] sm:$0xff]
      %v1467 = vld [vmem:[%s885 + $0x80] sm:$0xff]
      %v1468 = vld [vmem:[%s885 + $0x88] sm:$0xff]
      %v1469 = vld [vmem:[%s885 + $0x90] sm:$0xff]
      %v1470 = vld [vmem:[%s885 + $0x98] sm:$0xff]
      %v1471 = vld [vmem:[%s885 + $0xa0] sm:$0xff]
      %v1472 = vld [vmem:[%s885 + $0xa8] sm:$0xff]
      %v1473 = vld [vmem:[%s885 + $0xb0] sm:$0xff]
      %v1474 = vld [vmem:[%s885 + $0xb8] sm:$0xff]
      %v1475 = vld [vmem:[%s885 + $0xc0] sm:$0xff]
      %v1476 = vld [vmem:[%s885 + $0xc8] sm:$0xff]
      %v1477 = vld [vmem:[%s885 + $0xd0] sm:$0xff]
      %v1478 = vld [vmem:[%s885 + $0xd8] sm:$0xff]
      %v1479 = vld [vmem:[%s885 + $0xe0] sm:$0xff]
      %v1480 = vld [vmem:[%s885 + $0xe8] sm:$0xff]
      %v1481 = vld [vmem:[%s885 + $0xf0] sm:$0xff]
      %v1482 = vld [vmem:[%s885 + $0xf8] sm:$0xff]
      %v1515 = vrot.slane %v1451, 7
      %v1516 = vrot.slane %v1452, 7
      %v1517 = vsel %vm982, %v1515, %v1516
      %v1518 = vrot.slane %v1453, 7
      %v1519 = vrot.slane %v1454, 7
      %v1520 = vsel %vm982, %v1518, %v1519
      %v1521 = vrot.slane %v1455, 7
      %v1522 = vrot.slane %v1456, 7
      %v1523 = vsel %vm982, %v1521, %v1522
      %v1524 = vrot.slane %v1457, 7
      %v1525 = vrot.slane %v1458, 7
      %v1526 = vsel %vm982, %v1524, %v1525
      %v1527 = vrot.slane %v1459, 7
      %v1528 = vrot.slane %v1460, 7
      %v1529 = vsel %vm982, %v1527, %v1528
      %v1530 = vrot.slane %v1461, 7
      %v1531 = vrot.slane %v1462, 7
      %v1532 = vsel %vm982, %v1530, %v1531
      %v1533 = vrot.slane %v1463, 7
      %v1534 = vrot.slane %v1464, 7
      %v1535 = vsel %vm982, %v1533, %v1534
      %v1536 = vrot.slane %v1465, 7
      %v1537 = vrot.slane %v1466, 7
      %v1538 = vsel %vm982, %v1536, %v1537
      %v1539 = vrot.slane %v1467, 7
      %v1540 = vrot.slane %v1468, 7
      %v1541 = vsel %vm982, %v1539, %v1540
      %v1542 = vrot.slane %v1469, 7
      %v1543 = vrot.slane %v1470, 7
      %v1544 = vsel %vm982, %v1542, %v1543
      %v1545 = vrot.slane %v1471, 7
      %v1546 = vrot.slane %v1472, 7
      %v1547 = vsel %vm982, %v1545, %v1546
      %v1548 = vrot.slane %v1473, 7
      %v1549 = vrot.slane %v1474, 7
      %v1550 = vsel %vm982, %v1548, %v1549
      %v1551 = vrot.slane %v1475, 7
      %v1552 = vrot.slane %v1476, 7
      %v1553 = vsel %vm982, %v1551, %v1552
      %v1554 = vrot.slane %v1477, 7
      %v1555 = vrot.slane %v1478, 7
      %v1556 = vsel %vm982, %v1554, %v1555
      %v1557 = vrot.slane %v1479, 7
      %v1558 = vrot.slane %v1480, 7
      %v1559 = vsel %vm982, %v1557, %v1558
      %v1560 = vrot.slane %v1481, 7
      %v1561 = vrot.slane %v1482, 7
      %v1562 = vsel %vm982, %v1560, %v1561
      %v1595 = vsel %vm982, 0.0, %v1515
      %v1596 = vsel %vm982, 0.0, %v1518
      %v1597 = vsel %vm982, 0.0, %v1521
      %v1598 = vsel %vm982, 0.0, %v1524
      %v1599 = vsel %vm982, 0.0, %v1527
      %v1600 = vsel %vm982, 0.0, %v1530
      %v1601 = vsel %vm982, 0.0, %v1533
      %v1602 = vsel %vm982, 0.0, %v1536
      %v1603 = vsel %vm982, 0.0, %v1539
      %v1604 = vsel %vm982, 0.0, %v1542
      %v1605 = vsel %vm982, 0.0, %v1545
      %v1606 = vsel %vm982, 0.0, %v1548
      %v1607 = vsel %vm982, 0.0, %v1551
      %v1608 = vsel %vm982, 0.0, %v1554
      %v1609 = vsel %vm982, 0.0, %v1557
      %v1610 = vsel %vm982, 0.0, %v1560
      %v1611 = vrot.slane %v1451, 1
      %v1612 = vrot.slane %v1452, 1
      %v1613 = vsel %vm1079, %v1611, %v1612
      %v1614 = vrot.slane %v1453, 1
      %v1615 = vrot.slane %v1454, 1
      %v1616 = vsel %vm1079, %v1614, %v1615
      %v1617 = vrot.slane %v1455, 1
      %v1618 = vrot.slane %v1456, 1
      %v1619 = vsel %vm1079, %v1617, %v1618
      %v1620 = vrot.slane %v1457, 1
      %v1621 = vrot.slane %v1458, 1
      %v1622 = vsel %vm1079, %v1620, %v1621
      %v1623 = vrot.slane %v1459, 1
      %v1624 = vrot.slane %v1460, 1
      %v1625 = vsel %vm1079, %v1623, %v1624
      %v1626 = vrot.slane %v1461, 1
      %v1627 = vrot.slane %v1462, 1
      %v1628 = vsel %vm1079, %v1626, %v1627
      %v1629 = vrot.slane %v1463, 1
      %v1630 = vrot.slane %v1464, 1
      %v1631 = vsel %vm1079, %v1629, %v1630
      %v1632 = vrot.slane %v1465, 1
      %v1633 = vrot.slane %v1466, 1
      %v1634 = vsel %vm1079, %v1632, %v1633
      %v1635 = vrot.slane %v1467, 1
      %v1636 = vrot.slane %v1468, 1
      %v1637 = vsel %vm1079, %v1635, %v1636
      %v1638 = vrot.slane %v1469, 1
      %v1639 = vrot.slane %v1470, 1
      %v1640 = vsel %vm1079, %v1638, %v1639
      %v1641 = vrot.slane %v1471, 1
      %v1642 = vrot.slane %v1472, 1
      %v1643 = vsel %vm1079, %v1641, %v1642
      %v1644 = vrot.slane %v1473, 1
      %v1645 = vrot.slane %v1474, 1
      %v1646 = vsel %vm1079, %v1644, %v1645
      %v1647 = vrot.slane %v1475, 1
      %v1648 = vrot.slane %v1476, 1
      %v1649 = vsel %vm1079, %v1647, %v1648
      %v1650 = vrot.slane %v1477, 1
      %v1651 = vrot.slane %v1478, 1
      %v1652 = vsel %vm1079, %v1650, %v1651
      %v1653 = vrot.slane %v1479, 1
      %v1654 = vrot.slane %v1480, 1
      %v1655 = vsel %vm1079, %v1653, %v1654
      %v1656 = vrot.slane %v1481, 1
      %v1657 = vrot.slane %v1482, 1
      %v1658 = vsel %vm1079, %v1656, %v1657
      %v1675 = vsel %vm1079, %v1612, 0.0
      %v1676 = vsel %vm1079, %v1615, 0.0
      %v1677 = vsel %vm1079, %v1618, 0.0
      %v1678 = vsel %vm1079, %v1621, 0.0
      %v1679 = vsel %vm1079, %v1624, 0.0
      %v1680 = vsel %vm1079, %v1627, 0.0
      %v1681 = vsel %vm1079, %v1630, 0.0
      %v1682 = vsel %vm1079, %v1633, 0.0
      %v1683 = vsel %vm1079, %v1636, 0.0
      %v1684 = vsel %vm1079, %v1639, 0.0
      %v1685 = vsel %vm1079, %v1642, 0.0
      %v1686 = vsel %vm1079, %v1645, 0.0
      %v1687 = vsel %vm1079, %v1648, 0.0
      %v1688 = vsel %vm1079, %v1651, 0.0
      %v1689 = vsel %vm1079, %v1654, 0.0
      %v1690 = vsel %vm1079, %v1657, 0.0
      %1691 = vrot.lane.b32.xlu0 %v1451, 4
      %v1692 = vpop.permute.xlu0 %1691
      %1693 = vrot.lane.b32.xlu0 %v1452, 4
      %v1694 = vpop.permute.xlu0 %1693
      %1695 = vrot.lane.b32.xlu0 %v1453, 4
      %v1696 = vpop.permute.xlu0 %1695
      %1697 = vrot.lane.b32.xlu0 %v1454, 4
      %v1698 = vpop.permute.xlu0 %1697
      %1699 = vrot.lane.b32.xlu0 %v1455, 4
      %v1700 = vpop.permute.xlu0 %1699
      %1701 = vrot.lane.b32.xlu0 %v1456, 4
      %v1702 = vpop.permute.xlu0 %1701
      %1703 = vrot.lane.b32.xlu0 %v1457, 4
      %v1704 = vpop.permute.xlu0 %1703
      %1705 = vrot.lane.b32.xlu0 %v1458, 4
      %v1706 = vpop.permute.xlu0 %1705
      %1707 = vrot.lane.b32.xlu0 %v1459, 4
      %v1708 = vpop.permute.xlu0 %1707
      %1709 = vrot.lane.b32.xlu0 %v1460, 4
      %v1710 = vpop.permute.xlu0 %1709
      %1711 = vrot.lane.b32.xlu0 %v1461, 4
      %v1712 = vpop.permute.xlu0 %1711
      %1713 = vrot.lane.b32.xlu0 %v1462, 4
      %v1714 = vpop.permute.xlu0 %1713
      %1715 = vrot.lane.b32.xlu0 %v1463, 4
      %v1716 = vpop.permute.xlu0 %1715
      %1717 = vrot.lane.b32.xlu0 %v1464, 4
      %v1718 = vpop.permute.xlu0 %1717
      %1719 = vrot.lane.b32.xlu0 %v1465, 4
      %v1720 = vpop.permute.xlu0 %1719
      %1721 = vrot.lane.b32.xlu0 %v1466, 4
      %v1722 = vpop.permute.xlu0 %1721
      %1723 = vrot.lane.b32.xlu0 %v1467, 4
      %v1724 = vpop.permute.xlu0 %1723
      %1725 = vrot.lane.b32.xlu0 %v1468, 4
      %v1726 = vpop.permute.xlu0 %1725
      %1727 = vrot.lane.b32.xlu0 %v1469, 4
      %v1728 = vpop.permute.xlu0 %1727
      %1729 = vrot.lane.b32.xlu0 %v1470, 4
      %v1730 = vpop.permute.xlu0 %1729
      %1731 = vrot.lane.b32.xlu0 %v1471, 4
      %v1732 = vpop.permute.xlu0 %1731
      %1733 = vrot.lane.b32.xlu0 %v1472, 4
      %v1734 = vpop.permute.xlu0 %1733
      %1735 = vrot.lane.b32.xlu0 %v1473, 4
      %v1736 = vpop.permute.xlu0 %1735
      %1737 = vrot.lane.b32.xlu0 %v1474, 4
      %v1738 = vpop.permute.xlu0 %1737
      %1739 = vrot.lane.b32.xlu0 %v1475, 4
      %v1740 = vpop.permute.xlu0 %1739
      %1741 = vrot.lane.b32.xlu0 %v1476, 4
      %v1742 = vpop.permute.xlu0 %1741
      %1743 = vrot.lane.b32.xlu0 %v1477, 4
      %v1744 = vpop.permute.xlu0 %1743
      %1745 = vrot.lane.b32.xlu0 %v1478, 4
      %v1746 = vpop.permute.xlu0 %1745
      %1747 = vrot.lane.b32.xlu0 %v1479, 4
      %v1748 = vpop.permute.xlu0 %1747
      %1749 = vrot.lane.b32.xlu0 %v1480, 4
      %v1750 = vpop.permute.xlu0 %1749
      %1751 = vrot.lane.b32.xlu0 %v1481, 4
      %v1752 = vpop.permute.xlu0 %1751
      %1753 = vrot.lane.b32.xlu0 %v1482, 4
      %v1754 = vpop.permute.xlu0 %1753
      %1803 = vrot.lane.b32.xlu0 %v1613, 8
      %v1804 = vpop.permute.xlu0 %1803
      %1805 = vrot.lane.b32.xlu0 %v1675, 8
      %v1806 = vpop.permute.xlu0 %1805
      %1807 = vrot.lane.b32.xlu0 %v1616, 8
      %v1808 = vpop.permute.xlu0 %1807
      %1809 = vrot.lane.b32.xlu0 %v1676, 8
      %v1810 = vpop.permute.xlu0 %1809
      %1811 = vrot.lane.b32.xlu0 %v1619, 8
      %v1812 = vpop.permute.xlu0 %1811
      %1813 = vrot.lane.b32.xlu0 %v1677, 8
      %v1814 = vpop.permute.xlu0 %1813
      %1815 = vrot.lane.b32.xlu0 %v1622, 8
      %v1816 = vpop.permute.xlu0 %1815
      %1817 = vrot.lane.b32.xlu0 %v1678, 8
      %v1818 = vpop.permute.xlu0 %1817
      %1819 = vrot.lane.b32.xlu0 %v1625, 8
      %v1820 = vpop.permute.xlu0 %1819
      %1821 = vrot.lane.b32.xlu0 %v1679, 8
      %v1822 = vpop.permute.xlu0 %1821
      %1823 = vrot.lane.b32.xlu0 %v1628, 8
      %v1824 = vpop.permute.xlu0 %1823
      %1825 = vrot.lane.b32.xlu0 %v1680, 8
      %v1826 = vpop.permute.xlu0 %1825
      %1827 = vrot.lane.b32.xlu0 %v1631, 8
      %v1828 = vpop.permute.xlu0 %1827
      %1829 = vrot.lane.b32.xlu0 %v1681, 8
      %v1830 = vpop.permute.xlu0 %1829
      %1831 = vrot.lane.b32.xlu0 %v1634, 8
      %v1832 = vpop.permute.xlu0 %1831
      %1833 = vrot.lane.b32.xlu0 %v1682, 8
      %v1834 = vpop.permute.xlu0 %1833
      %1835 = vrot.lane.b32.xlu0 %v1637, 8
      %v1836 = vpop.permute.xlu0 %1835
      %1837 = vrot.lane.b32.xlu0 %v1683, 8
      %v1838 = vpop.permute.xlu0 %1837
      %1839 = vrot.lane.b32.xlu0 %v1640, 8
      %v1840 = vpop.permute.xlu0 %1839
      %1841 = vrot.lane.b32.xlu0 %v1684, 8
      %v1842 = vpop.permute.xlu0 %1841
      %1843 = vrot.lane.b32.xlu0 %v1643, 8
      %v1844 = vpop.permute.xlu0 %1843
      %1845 = vrot.lane.b32.xlu0 %v1685, 8
      %v1846 = vpop.permute.xlu0 %1845
      %1847 = vrot.lane.b32.xlu0 %v1646, 8
      %v1848 = vpop.permute.xlu0 %1847
      %1849 = vrot.lane.b32.xlu0 %v1686, 8
      %v1850 = vpop.permute.xlu0 %1849
      %1851 = vrot.lane.b32.xlu0 %v1649, 8
      %v1852 = vpop.permute.xlu0 %1851
      %1853 = vrot.lane.b32.xlu0 %v1687, 8
      %v1854 = vpop.permute.xlu0 %1853
      %1855 = vrot.lane.b32.xlu0 %v1652, 8
      %v1856 = vpop.permute.xlu0 %1855
      %1857 = vrot.lane.b32.xlu0 %v1688, 8
      %v1858 = vpop.permute.xlu0 %1857
      %1859 = vrot.lane.b32.xlu0 %v1655, 8
      %v1860 = vpop.permute.xlu0 %1859
      %1861 = vrot.lane.b32.xlu0 %v1689, 8
      %v1862 = vpop.permute.xlu0 %1861
      %1863 = vrot.lane.b32.xlu0 %v1658, 8
      %v1864 = vpop.permute.xlu0 %1863
      %1865 = vrot.lane.b32.xlu0 %v1690, 8
      %v1866 = vpop.permute.xlu0 %1865
      %v1899 = vsel %vm258, %v1595, %v1692
      %v1900 = vsel %vm258, %v1517, %v1694
      %v1901 = vsel %vm258, %v1596, %v1696
      %v1902 = vsel %vm258, %v1520, %v1698
      %v1903 = vsel %vm258, %v1597, %v1700
      %v1904 = vsel %vm258, %v1523, %v1702
      %v1905 = vsel %vm258, %v1598, %v1704
      %v1906 = vsel %vm258, %v1526, %v1706
      %v1907 = vsel %vm258, %v1599, %v1708
      %v1908 = vsel %vm258, %v1529, %v1710
      %v1909 = vsel %vm258, %v1600, %v1712
      %v1910 = vsel %vm258, %v1532, %v1714
      %v1911 = vsel %vm258, %v1601, %v1716
      %v1912 = vsel %vm258, %v1535, %v1718
      %v1913 = vsel %vm258, %v1602, %v1720
      %v1914 = vsel %vm258, %v1538, %v1722
      %v1915 = vsel %vm258, %v1603, %v1724
      %v1916 = vsel %vm258, %v1541, %v1726
      %v1917 = vsel %vm258, %v1604, %v1728
      %v1918 = vsel %vm258, %v1544, %v1730
      %v1919 = vsel %vm258, %v1605, %v1732
      %v1920 = vsel %vm258, %v1547, %v1734
      %v1921 = vsel %vm258, %v1606, %v1736
      %v1922 = vsel %vm258, %v1550, %v1738
      %v1923 = vsel %vm258, %v1607, %v1740
      %v1924 = vsel %vm258, %v1553, %v1742
      %v1925 = vsel %vm258, %v1608, %v1744
      %v1926 = vsel %vm258, %v1556, %v1746
      %v1927 = vsel %vm258, %v1609, %v1748
      %v1928 = vsel %vm258, %v1559, %v1750
      %v1929 = vsel %vm258, %v1610, %v1752
      %v1930 = vsel %vm258, %v1562, %v1754
      %v1931 = vsel %vm1400, %v1899, %v1804
      %v1932 = vsel %vm1400, %v1900, %v1806
      %v1933 = vsel %vm1400, %v1901, %v1808
      %v1934 = vsel %vm1400, %v1902, %v1810
      %v1935 = vsel %vm1400, %v1903, %v1812
      %v1936 = vsel %vm1400, %v1904, %v1814
      %v1937 = vsel %vm1400, %v1905, %v1816
      %v1938 = vsel %vm1400, %v1906, %v1818
      %v1939 = vsel %vm1400, %v1907, %v1820
      %v1940 = vsel %vm1400, %v1908, %v1822
      %v1941 = vsel %vm1400, %v1909, %v1824
      %v1942 = vsel %vm1400, %v1910, %v1826
      %v1943 = vsel %vm1400, %v1911, %v1828
      %v1944 = vsel %vm1400, %v1912, %v1830
      %v1945 = vsel %vm1400, %v1913, %v1832
      %v1946 = vsel %vm1400, %v1914, %v1834
      %v1947 = vsel %vm1400, %v1915, %v1836
      %v1948 = vsel %vm1400, %v1916, %v1838
      %v1949 = vsel %vm1400, %v1917, %v1840
      %v1950 = vsel %vm1400, %v1918, %v1842
      %v1951 = vsel %vm1400, %v1919, %v1844
      %v1952 = vsel %vm1400, %v1920, %v1846
      %v1953 = vsel %vm1400, %v1921, %v1848
      %v1954 = vsel %vm1400, %v1922, %v1850
      %v1955 = vsel %vm1400, %v1923, %v1852
      %v1956 = vsel %vm1400, %v1924, %v1854
      %v1957 = vsel %vm1400, %v1925, %v1856
      %v1958 = vsel %vm1400, %v1926, %v1858
      %v1959 = vsel %vm1400, %v1927, %v1860
      %v1960 = vsel %vm1400, %v1928, %v1862
      %v1961 = vsel %vm1400, %v1929, %v1864
      %v1962 = vsel %vm1400, %v1930, %v1866
      %v1963 = vpack.c.bf16 %v1932, %v1931
      %v1964 = vpack.c.bf16 %v1934, %v1933
      %v1965 = vpack.c.bf16 %v1936, %v1935
      %v1966 = vpack.c.bf16 %v1938, %v1937
      %v1967 = vpack.c.bf16 %v1940, %v1939
      %v1968 = vpack.c.bf16 %v1942, %v1941
      %v1969 = vpack.c.bf16 %v1944, %v1943
      %v1970 = vpack.c.bf16 %v1946, %v1945
      %v1971 = vpack.c.bf16 %v1948, %v1947
      %v1972 = vpack.c.bf16 %v1950, %v1949
      %v1973 = vpack.c.bf16 %v1952, %v1951
      %v1974 = vpack.c.bf16 %v1954, %v1953
      %v1975 = vpack.c.bf16 %v1956, %v1955
      %v1976 = vpack.c.bf16 %v1958, %v1957
      %v1977 = vpack.c.bf16 %v1960, %v1959
      %v1978 = vpack.c.bf16 %v1962, %v1961
      %s1979 = scalar_lea.vmem %s3, 8
      %v1980 = vld [vmem:[%s1979] sm:$0xf]
      %v1981 = vld [vmem:[%s1979 + $0x4] sm:$0x3]
      %v1984 = vunpack.c.l.b16 %v1980
      %v1985 = vunpack.c.l.b16 %v1981
      %v1986 = vpack.c.b16 %v1985, %v1984
      %vm1987 = vcmask 97280
      %v1989 = vsel %vm1987, %v1963, 0
      %v1992 = vsel %vm1987, %v1964, 0
      %v1995 = vsel %vm1987, %v1965, 0
      %v1998 = vsel %vm1987, %v1966, 0
      %v2001 = vsel %vm1987, %v1967, 0
      %v2004 = vsel %vm1987, %v1968, 0
      %v2007 = vsel %vm1987, %v1969, 0
      %v2010 = vsel %vm1987, %v1970, 0
      %v2013 = vsel %vm1987, %v1971, 0
      %v2016 = vsel %vm1987, %v1972, 0
      %v2019 = vsel %vm1987, %v1973, 0
      %v2022 = vsel %vm1987, %v1974, 0
      %v2025 = vsel %vm1987, %v1975, 0
      %v2028 = vsel %vm1987, %v1976, 0
      %v2031 = vsel %vm1987, %v1977, 0
      %v2034 = vsel %vm1987, %v1978, 0
      %vm2036 = vcmask 1045504
      %v2038 = vsel %vm2036, %v1986, 0
      %2040 = vmatprep.subr.bf16.mxu0 0
      %2041 = vmatpush1.bf16.msra.mxu0 %v2038
      %2042 = vmatprep.subr.bf16.mxu0 0
      %2043 = vmatpush1.bf16.msra.mxu0 0
      %2044 = vmatprep.subr.bf16.mxu0 0
      %2045 = vmatpush1.bf16.msra.mxu0 0
      %2046 = vmatprep.subr.bf16.mxu0 0
      %2047 = vmatpush1.bf16.msra.mxu0 0
      %2048 = vmatprep.subr.bf16.mxu0 0
      %2049 = vmatpush1.bf16.msra.mxu0 0
      %2050 = vmatprep.subr.bf16.mxu0 0
      %2051 = vmatpush1.bf16.msra.mxu0 0
      %2052 = vmatprep.subr.bf16.mxu0 0
      %2053 = vmatpush1.bf16.msra.mxu0 0
      %2054 = vmatprep.subr.bf16.mxu0 0
      %2055 = vmatpush1.bf16.msra.mxu0 0
      %2056 = vmatprep.subr.bf16.mxu0 0
      %2057 = vmatpush1.bf16.msra.mxu0 0
      %2058 = vmatprep.subr.bf16.mxu0 0
      %2059 = vmatpush1.bf16.msra.mxu0 0
      %2060 = vmatprep.subr.bf16.mxu0 0
      %2061 = vmatpush1.bf16.msra.mxu0 0
      %2062 = vmatprep.subr.bf16.mxu0 0
      %2063 = vmatpush1.bf16.msra.mxu0 0
      %2064 = vmatprep.subr.bf16.mxu0 0
      %2065 = vmatpush1.bf16.msra.mxu0 0
      %2066 = vmatprep.subr.bf16.mxu0 0
      %2067 = vmatpush1.bf16.msra.mxu0 0
      %2068 = vmatprep.subr.bf16.mxu0 0
      %2069 = vmatpush1.bf16.msra.mxu0 0
      %2070 = vmatprep.subr.bf16.mxu0 0
      %2071 = vmatpush1.bf16.msra.mxu0 0
      %2072 = vmatprep.mubr.bf16.mxu0 0
      %2073 = vmatmul.mubr.bf16.gmra.mrb[0].mxu0 %v1989
      %v2074 = vpop.f32.mrb[0].mxu0
      %v2075 = vadd.f32 0.0, %v2074
      %v2076 = vpop.f32.mrb[0].mxu0
      %v2077 = vpop.f32.mrb[0].mxu0
      %v2078 = vadd.f32 0.0, %v2077
      %v2079 = vpop.f32.mrb[0].mxu0
      %2080 = vmatprep.mubr.bf16.mxu0 0
      %2081 = vmatmul.mubr.bf16.gmra.mrb[0].mxu0 %v1992
      %v2082 = vpop.f32.mrb[0].mxu0
      %v2083 = vadd.f32 0.0, %v2082
      %v2084 = vpop.f32.mrb[0].mxu0
      %v2085 = vpop.f32.mrb[0].mxu0
      %v2086 = vadd.f32 0.0, %v2085
      %v2087 = vpop.f32.mrb[0].mxu0
      %2088 = vmatprep.mubr.bf16.mxu0 0
      %2089 = vmatmul.mubr.bf16.gmra.mrb[0].mxu0 %v1995
      %v2090 = vpop.f32.mrb[0].mxu0
      %v2091 = vadd.f32 0.0, %v2090
      %v2092 = vpop.f32.mrb[0].mxu0
      %v2093 = vpop.f32.mrb[0].mxu0
      %v2094 = vadd.f32 0.0, %v2093
      %v2095 = vpop.f32.mrb[0].mxu0
      %2096 = vmatprep.mubr.bf16.mxu0 0
      %2097 = vmatmul.mubr.bf16.gmra.mrb[0].mxu0 %v1998
      %v2098 = vpop.f32.mrb[0].mxu0
      %v2099 = vadd.f32 0.0, %v2098
      %v2100 = vpop.f32.mrb[0].mxu0
      %v2101 = vpop.f32.mrb[0].mxu0
      %v2102 = vadd.f32 0.0, %v2101
      %v2103 = vpop.f32.mrb[0].mxu0
      %2104 = vmatprep.mubr.bf16.mxu0 0
      %2105 = vmatmul.mubr.bf16.gmra.mrb[0].mxu0 %v2001
      %v2106 = vpop.f32.mrb[0].mxu0
      %v2107 = vadd.f32 0.0, %v2106
      %v2108 = vpop.f32.mrb[0].mxu0
      %v2109 = vpop.f32.mrb[0].mxu0
      %v2110 = vadd.f32 0.0, %v2109
      %v2111 = vpop.f32.mrb[0].mxu0
      %2112 = vmatprep.mubr.bf16.mxu0 0
      %2113 = vmatmul.mubr.bf16.gmra.mrb[0].mxu0 %v2004
      %v2114 = vpop.f32.mrb[0].mxu0
      %v2115 = vadd.f32 0.0, %v2114
      %v2116 = vpop.f32.mrb[0].mxu0
      %v2117 = vpop.f32.mrb[0].mxu0
      %v2118 = vadd.f32 0.0, %v2117
      %v2119 = vpop.f32.mrb[0].mxu0
      %2120 = vmatprep.mubr.bf16.mxu0 0
      %2121 = vmatmul.mubr.bf16.gmra.mrb[0].mxu0 %v2007
      %v2122 = vpop.f32.mrb[0].mxu0
      %v2123 = vadd.f32 0.0, %v2122
      %v2124 = vpop.f32.mrb[0].mxu0
      %v2125 = vpop.f32.mrb[0].mxu0
      %v2126 = vadd.f32 0.0, %v2125
      %v2127 = vpop.f32.mrb[0].mxu0
      %2128 = vmatprep.mubr.bf16.mxu0 0
      %2129 = vmatmul.mubr.bf16.gmra.mrb[0].mxu0 %v2010
      %v2130 = vpop.f32.mrb[0].mxu0
      %v2131 = vadd.f32 0.0, %v2130
      %v2132 = vpop.f32.mrb[0].mxu0
      %v2133 = vpop.f32.mrb[0].mxu0
      %v2134 = vadd.f32 0.0, %v2133
      %v2135 = vpop.f32.mrb[0].mxu0
      %2136 = vmatprep.mubr.bf16.mxu0 0
      %2137 = vmatmul.mubr.bf16.gmra.mrb[0].mxu0 %v2013
      %v2138 = vpop.f32.mrb[0].mxu0
      %v2139 = vadd.f32 0.0, %v2138
      %v2140 = vpop.f32.mrb[0].mxu0
      %v2141 = vpop.f32.mrb[0].mxu0
      %v2142 = vadd.f32 0.0, %v2141
      %v2143 = vpop.f32.mrb[0].mxu0
      %2144 = vmatprep.mubr.bf16.mxu0 0
      %2145 = vmatmul.mubr.bf16.gmra.mrb[0].mxu0 %v2016
      %v2146 = vpop.f32.mrb[0].mxu0
      %v2147 = vadd.f32 0.0, %v2146
      %v2148 = vpop.f32.mrb[0].mxu0
      %v2149 = vpop.f32.mrb[0].mxu0
      %v2150 = vadd.f32 0.0, %v2149
      %v2151 = vpop.f32.mrb[0].mxu0
      %2152 = vmatprep.mubr.bf16.mxu0 0
      %2153 = vmatmul.mubr.bf16.gmra.mrb[0].mxu0 %v2019
      %v2154 = vpop.f32.mrb[0].mxu0
      %v2155 = vadd.f32 0.0, %v2154
      %v2156 = vpop.f32.mrb[0].mxu0
      %v2157 = vpop.f32.mrb[0].mxu0
      %v2158 = vadd.f32 0.0, %v2157
      %v2159 = vpop.f32.mrb[0].mxu0
      %2160 = vmatprep.mubr.bf16.mxu0 0
      %2161 = vmatmul.mubr.bf16.gmra.mrb[0].mxu0 %v2022
      %v2162 = vpop.f32.mrb[0].mxu0
      %v2163 = vadd.f32 0.0, %v2162
      %v2164 = vpop.f32.mrb[0].mxu0
      %v2165 = vpop.f32.mrb[0].mxu0
      %v2166 = vadd.f32 0.0, %v2165
      %v2167 = vpop.f32.mrb[0].mxu0
      %2168 = vmatprep.mubr.bf16.mxu0 0
      %2169 = vmatmul.mubr.bf16.gmra.mrb[0].mxu0 %v2025
      %v2170 = vpop.f32.mrb[0].mxu0
      %v2171 = vadd.f32 0.0, %v2170
      %v2172 = vpop.f32.mrb[0].mxu0
      %v2173 = vpop.f32.mrb[0].mxu0
      %v2174 = vadd.f32 0.0, %v2173
      %v2175 = vpop.f32.mrb[0].mxu0
      %2176 = vmatprep.mubr.bf16.mxu0 0
      %2177 = vmatmul.mubr.bf16.gmra.mrb[0].mxu0 %v2028
      %v2178 = vpop.f32.mrb[0].mxu0
      %v2179 = vadd.f32 0.0, %v2178
      %v2180 = vpop.f32.mrb[0].mxu0
      %v2181 = vpop.f32.mrb[0].mxu0
      %v2182 = vadd.f32 0.0, %v2181
      %v2183 = vpop.f32.mrb[0].mxu0
      %2184 = vmatprep.mubr.bf16.mxu0 0
      %2185 = vmatmul.mubr.bf16.gmra.mrb[0].mxu0 %v2031
      %v2186 = vpop.f32.mrb[0].mxu0
      %v2187 = vadd.f32 0.0, %v2186
      %v2188 = vpop.f32.mrb[0].mxu0
      %v2189 = vpop.f32.mrb[0].mxu0
      %v2190 = vadd.f32 0.0, %v2189
      %v2191 = vpop.f32.mrb[0].mxu0
      %2192 = vmatprep.mubr.bf16.mxu0 0
      %2193 = vmatmul.mubr.bf16.gmra.mrb[0].mxu0 %v2034
      %v2194 = vpop.f32.mrb[0].mxu0
      %v2195 = vadd.f32 0.0, %v2194
      %v2196 = vpop.f32.mrb[0].mxu0
      %v2197 = vpop.f32.mrb[0].mxu0
      %v2198 = vadd.f32 0.0, %v2197
      %v2199 = vpop.f32.mrb[0].mxu0
      %2200 = vdwg.mxu0
      %v2203 = vunpack.c.l.b16 %v1449
      %v2204 = vunpack.c.l.b16 %v1450
      %v2205 = vpack.c.b16 %v2204, %v2203
      %v2207 = vsel %vm1987, %v1433, 0
      %v2210 = vsel %vm1987, %v1434, 0
      %v2213 = vsel %vm1987, %v1435, 0
      %v2216 = vsel %vm1987, %v1436, 0
      %v2219 = vsel %vm1987, %v1437, 0
      %v2222 = vsel %vm1987, %v1438, 0
      %v2225 = vsel %vm1987, %v1439, 0
      %v2228 = vsel %vm1987, %v1440, 0
      %v2231 = vsel %vm1987, %v1441, 0
      %v2234 = vsel %vm1987, %v1442, 0
      %v2237 = vsel %vm1987, %v1443, 0
      %v2240 = vsel %vm1987, %v1444, 0
      %v2243 = vsel %vm1987, %v1445, 0
      %v2246 = vsel %vm1987, %v1446, 0
      %v2249 = vsel %vm1987, %v1447, 0
      %v2252 = vsel %vm1987, %v1448, 0
      %v2255 = vsel %vm2036, %v2205, 0
      %2257 = vmatprep.subr.bf16.mxu0 0
      %2258 = vmatpush1.bf16.msra.mxu0 %v2255
      %2259 = vmatprep.subr.bf16.mxu0 0
      %2260 = vmatpush1.bf16.msra.mxu0 0
      %2261 = vmatprep.subr.bf16.mxu0 0
      %2262 = vmatpush1.bf16.msra.mxu0 0
      %2263 = vmatprep.subr.bf16.mxu0 0
      %2264 = vmatpush1.bf16.msra.mxu0 0
      %2265 = vmatprep.subr.bf16.mxu0 0
      %2266 = vmatpush1.bf16.msra.mxu0 0
      %2267 = vmatprep.subr.bf16.mxu0 0
      %2268 = vmatpush1.bf16.msra.mxu0 0
      %2269 = vmatprep.subr.bf16.mxu0 0
      %2270 = vmatpush1.bf16.msra.mxu0 0
      %2271 = vmatprep.subr.bf16.mxu0 0
      %2272 = vmatpush1.bf16.msra.mxu0 0
      %2273 = vmatprep.subr.bf16.mxu0 0
      %2274 = vmatpush1.bf16.msra.mxu0 0
      %2275 = vmatprep.subr.bf16.mxu0 0
      %2276 = vmatpush1.bf16.msra.mxu0 0
      %2277 = vmatprep.subr.bf16.mxu0 0
      %2278 = vmatpush1.bf16.msra.mxu0 0
      %2279 = vmatprep.subr.bf16.mxu0 0
      %2280 = vmatpush1.bf16.msra.mxu0 0
      %2281 = vmatprep.subr.bf16.mxu0 0
      %2282 = vmatpush1.bf16.msra.mxu0 0
      %2283 = vmatprep.subr.bf16.mxu0 0
      %2284 = vmatpush1.bf16.msra.mxu0 0
      %2285 = vmatprep.subr.bf16.mxu0 0
      %2286 = vmatpush1.bf16.msra.mxu0 0
      %2287 = vmatprep.subr.bf16.mxu0 0
      %2288 = vmatpush1.bf16.msra.mxu0 0
      %2289 = vmatprep.mubr.bf16.mxu0 0
      %2290 = vmatmul.mubr.bf16.gmra.mrb[0].mxu0 %v2207
      %v2291 = vpop.f32.mrb[0].mxu0
      %v2292 = vadd.f32 %v2075, %v2291
      %v2293 = vpop.f32.mrb[0].mxu0
      %v2294 = vpop.f32.mrb[0].mxu0
      %v2295 = vadd.f32 %v2078, %v2294
      %v2296 = vpop.f32.mrb[0].mxu0
      %2297 = vmatprep.mubr.bf16.mxu0 0
      %2298 = vmatmul.mubr.bf16.gmra.mrb[0].mxu0 %v2210
      %v2299 = vpop.f32.mrb[0].mxu0
      %v2300 = vadd.f32 %v2083, %v2299
      %v2301 = vpop.f32.mrb[0].mxu0
      %v2302 = vpop.f32.mrb[0].mxu0
      %v2303 = vadd.f32 %v2086, %v2302
      %v2304 = vpop.f32.mrb[0].mxu0
      %2305 = vmatprep.mubr.bf16.mxu0 0
      %2306 = vmatmul.mubr.bf16.gmra.mrb[0].mxu0 %v2213
      %v2307 = vpop.f32.mrb[0].mxu0
      %v2308 = vadd.f32 %v2091, %v2307
      %v2309 = vpop.f32.mrb[0].mxu0
      %v2310 = vpop.f32.mrb[0].mxu0
      %v2311 = vadd.f32 %v2094, %v2310
      %v2312 = vpop.f32.mrb[0].mxu0
      %2313 = vmatprep.mubr.bf16.mxu0 0
      %2314 = vmatmul.mubr.bf16.gmra.mrb[0].mxu0 %v2216
      %v2315 = vpop.f32.mrb[0].mxu0
      %v2316 = vadd.f32 %v2099, %v2315
      %v2317 = vpop.f32.mrb[0].mxu0
      %v2318 = vpop.f32.mrb[0].mxu0
      %v2319 = vadd.f32 %v2102, %v2318
      %v2320 = vpop.f32.mrb[0].mxu0
      %2321 = vmatprep.mubr.bf16.mxu0 0
      %2322 = vmatmul.mubr.bf16.gmra.mrb[0].mxu0 %v2219
      %v2323 = vpop.f32.mrb[0].mxu0
      %v2324 = vadd.f32 %v2107, %v2323
      %v2325 = vpop.f32.mrb[0].mxu0
      %v2326 = vpop.f32.mrb[0].mxu0
      %v2327 = vadd.f32 %v2110, %v2326
      %v2328 = vpop.f32.mrb[0].mxu0
      %2329 = vmatprep.mubr.bf16.mxu0 0
      %2330 = vmatmul.mubr.bf16.gmra.mrb[0].mxu0 %v2222
      %v2331 = vpop.f32.mrb[0].mxu0
      %v2332 = vadd.f32 %v2115, %v2331
      %v2333 = vpop.f32.mrb[0].mxu0
      %v2334 = vpop.f32.mrb[0].mxu0
      %v2335 = vadd.f32 %v2118, %v2334
      %v2336 = vpop.f32.mrb[0].mxu0
      %2337 = vmatprep.mubr.bf16.mxu0 0
      %2338 = vmatmul.mubr.bf16.gmra.mrb[0].mxu0 %v2225
      %v2339 = vpop.f32.mrb[0].mxu0
      %v2340 = vadd.f32 %v2123, %v2339
      %v2341 = vpop.f32.mrb[0].mxu0
      %v2342 = vpop.f32.mrb[0].mxu0
      %v2343 = vadd.f32 %v2126, %v2342
      %v2344 = vpop.f32.mrb[0].mxu0
      %2345 = vmatprep.mubr.bf16.mxu0 0
      %2346 = vmatmul.mubr.bf16.gmra.mrb[0].mxu0 %v2228
      %v2347 = vpop.f32.mrb[0].mxu0
      %v2348 = vadd.f32 %v2131, %v2347
      %v2349 = vpop.f32.mrb[0].mxu0
      %v2350 = vpop.f32.mrb[0].mxu0
      %v2351 = vadd.f32 %v2134, %v2350
      %v2352 = vpop.f32.mrb[0].mxu0
      %2353 = vmatprep.mubr.bf16.mxu0 0
      %2354 = vmatmul.mubr.bf16.gmra.mrb[0].mxu0 %v2231
      %v2355 = vpop.f32.mrb[0].mxu0
      %v2356 = vadd.f32 %v2139, %v2355
      %v2357 = vpop.f32.mrb[0].mxu0
      %v2358 = vpop.f32.mrb[0].mxu0
      %v2359 = vadd.f32 %v2142, %v2358
      %v2360 = vpop.f32.mrb[0].mxu0
      %2361 = vmatprep.mubr.bf16.mxu0 0
      %2362 = vmatmul.mubr.bf16.gmra.mrb[0].mxu0 %v2234
      %v2363 = vpop.f32.mrb[0].mxu0
      %v2364 = vadd.f32 %v2147, %v2363
      %v2365 = vpop.f32.mrb[0].mxu0
      %v2366 = vpop.f32.mrb[0].mxu0
      %v2367 = vadd.f32 %v2150, %v2366
      %v2368 = vpop.f32.mrb[0].mxu0
      %2369 = vmatprep.mubr.bf16.mxu0 0
      %2370 = vmatmul.mubr.bf16.gmra.mrb[0].mxu0 %v2237
      %v2371 = vpop.f32.mrb[0].mxu0
      %v2372 = vadd.f32 %v2155, %v2371
      %v2373 = vpop.f32.mrb[0].mxu0
      %v2374 = vpop.f32.mrb[0].mxu0
      %v2375 = vadd.f32 %v2158, %v2374
      %v2376 = vpop.f32.mrb[0].mxu0
      %2377 = vmatprep.mubr.bf16.mxu0 0
      %2378 = vmatmul.mubr.bf16.gmra.mrb[0].mxu0 %v2240
      %v2379 = vpop.f32.mrb[0].mxu0
      %v2380 = vadd.f32 %v2163, %v2379
      %v2381 = vpop.f32.mrb[0].mxu0
      %v2382 = vpop.f32.mrb[0].mxu0
      %v2383 = vadd.f32 %v2166, %v2382
      %v2384 = vpop.f32.mrb[0].mxu0
      %2385 = vmatprep.mubr.bf16.mxu0 0
      %2386 = vmatmul.mubr.bf16.gmra.mrb[0].mxu0 %v2243
      %v2387 = vpop.f32.mrb[0].mxu0
      %v2388 = vadd.f32 %v2171, %v2387
      %v2389 = vpop.f32.mrb[0].mxu0
      %v2390 = vpop.f32.mrb[0].mxu0
      %v2391 = vadd.f32 %v2174, %v2390
      %v2392 = vpop.f32.mrb[0].mxu0
      %2393 = vmatprep.mubr.bf16.mxu0 0
      %2394 = vmatmul.mubr.bf16.gmra.mrb[0].mxu0 %v2246
      %v2395 = vpop.f32.mrb[0].mxu0
      %v2396 = vadd.f32 %v2179, %v2395
      %v2397 = vpop.f32.mrb[0].mxu0
      %v2398 = vpop.f32.mrb[0].mxu0
      %v2399 = vadd.f32 %v2182, %v2398
      %v2400 = vpop.f32.mrb[0].mxu0
      %2401 = vmatprep.mubr.bf16.mxu0 0
      %2402 = vmatmul.mubr.bf16.gmra.mrb[0].mxu0 %v2249
      %v2403 = vpop.f32.mrb[0].mxu0
      %v2404 = vadd.f32 %v2187, %v2403
      %v2405 = vpop.f32.mrb[0].mxu0
      %v2406 = vpop.f32.mrb[0].mxu0
      %v2407 = vadd.f32 %v2190, %v2406
      %v2408 = vpop.f32.mrb[0].mxu0
      %2409 = vmatprep.mubr.bf16.mxu0 0
      %2410 = vmatmul.mubr.bf16.gmra.mrb[0].mxu0 %v2252
      %v2411 = vpop.f32.mrb[0].mxu0
      %v2412 = vadd.f32 %v2195, %v2411
      %v2413 = vpop.f32.mrb[0].mxu0
      %v2414 = vpop.f32.mrb[0].mxu0
      %v2415 = vadd.f32 %v2198, %v2414
      %v2416 = vpop.f32.mrb[0].mxu0
      %2417 = vdwg.mxu0
      %s2418 = scalar_lea.vmem [#allocation2], 32
      %v2419 = vld [vmem:[%s2418] sm:$0xff]
      %v2420 = vld [vmem:[%s2418 + $0x8] sm:$0xff]
      %v2421 = vld [vmem:[%s2418 + $0x10] sm:$0xff]
      %v2422 = vld [vmem:[%s2418 + $0x18] sm:$0xff]
      %v2423 = vld [vmem:[%s2418 + $0x20] sm:$0xff]
      %v2424 = vld [vmem:[%s2418 + $0x28] sm:$0xff]
      %v2425 = vld [vmem:[%s2418 + $0x30] sm:$0xff]
      %v2426 = vld [vmem:[%s2418 + $0x38] sm:$0xff]
      %v2427 = vld [vmem:[%s2418 + $0x40] sm:$0xff]
      %v2428 = vld [vmem:[%s2418 + $0x48] sm:$0xff]
      %v2429 = vld [vmem:[%s2418 + $0x50] sm:$0xff]
      %v2430 = vld [vmem:[%s2418 + $0x58] sm:$0xff]
      %v2431 = vld [vmem:[%s2418 + $0x60] sm:$0xff]
      %v2432 = vld [vmem:[%s2418 + $0x68] sm:$0xff]
      %v2433 = vld [vmem:[%s2418 + $0x70] sm:$0xff]
      %v2434 = vld [vmem:[%s2418 + $0x78] sm:$0xff]
      %v2435 = vld [vmem:[%s2418 + $0x80] sm:$0xff]
      %v2436 = vld [vmem:[%s2418 + $0x88] sm:$0xff]
      %v2437 = vld [vmem:[%s2418 + $0x90] sm:$0xff]
      %v2438 = vld [vmem:[%s2418 + $0x98] sm:$0xff]
      %v2439 = vld [vmem:[%s2418 + $0xa0] sm:$0xff]
      %v2440 = vld [vmem:[%s2418 + $0xa8] sm:$0xff]
      %v2441 = vld [vmem:[%s2418 + $0xb0] sm:$0xff]
      %v2442 = vld [vmem:[%s2418 + $0xb8] sm:$0xff]
      %v2443 = vld [vmem:[%s2418 + $0xc0] sm:$0xff]
      %v2444 = vld [vmem:[%s2418 + $0xc8] sm:$0xff]
      %v2445 = vld [vmem:[%s2418 + $0xd0] sm:$0xff]
      %v2446 = vld [vmem:[%s2418 + $0xd8] sm:$0xff]
      %v2447 = vld [vmem:[%s2418 + $0xe0] sm:$0xff]
      %v2448 = vld [vmem:[%s2418 + $0xe8] sm:$0xff]
      %v2449 = vld [vmem:[%s2418 + $0xf0] sm:$0xff]
      %v2450 = vld [vmem:[%s2418 + $0xf8] sm:$0xff]
      %v2483 = vrot.slane %v2419, 7
      %v2484 = vrot.slane %v2420, 7
      %v2485 = vsel %vm982, %v2483, %v2484
      %v2486 = vrot.slane %v2421, 7
      %v2487 = vrot.slane %v2422, 7
      %v2488 = vsel %vm982, %v2486, %v2487
      %v2489 = vrot.slane %v2423, 7
      %v2490 = vrot.slane %v2424, 7
      %v2491 = vsel %vm982, %v2489, %v2490
      %v2492 = vrot.slane %v2425, 7
      %v2493 = vrot.slane %v2426, 7
      %v2494 = vsel %vm982, %v2492, %v2493
      %v2495 = vrot.slane %v2427, 7
      %v2496 = vrot.slane %v2428, 7
      %v2497 = vsel %vm982, %v2495, %v2496
      %v2498 = vrot.slane %v2429, 7
      %v2499 = vrot.slane %v2430, 7
      %v2500 = vsel %vm982, %v2498, %v2499
      %v2501 = vrot.slane %v2431, 7
      %v2502 = vrot.slane %v2432, 7
      %v2503 = vsel %vm982, %v2501, %v2502
      %v2504 = vrot.slane %v2433, 7
      %v2505 = vrot.slane %v2434, 7
      %v2506 = vsel %vm982, %v2504, %v2505
      %v2507 = vrot.slane %v2435, 7
      %v2508 = vrot.slane %v2436, 7
      %v2509 = vsel %vm982, %v2507, %v2508
      %v2510 = vrot.slane %v2437, 7
      %v2511 = vrot.slane %v2438, 7
      %v2512 = vsel %vm982, %v2510, %v2511
      %v2513 = vrot.slane %v2439, 7
      %v2514 = vrot.slane %v2440, 7
      %v2515 = vsel %vm982, %v2513, %v2514
      %v2516 = vrot.slane %v2441, 7
      %v2517 = vrot.slane %v2442, 7
      %v2518 = vsel %vm982, %v2516, %v2517
      %v2519 = vrot.slane %v2443, 7
      %v2520 = vrot.slane %v2444, 7
      %v2521 = vsel %vm982, %v2519, %v2520
      %v2522 = vrot.slane %v2445, 7
      %v2523 = vrot.slane %v2446, 7
      %v2524 = vsel %vm982, %v2522, %v2523
      %v2525 = vrot.slane %v2447, 7
      %v2526 = vrot.slane %v2448, 7
      %v2527 = vsel %vm982, %v2525, %v2526
      %v2528 = vrot.slane %v2449, 7
      %v2529 = vrot.slane %v2450, 7
      %v2530 = vsel %vm982, %v2528, %v2529
      %v2563 = vsel %vm982, 0.0, %v2483
      %v2564 = vsel %vm982, 0.0, %v2486
      %v2565 = vsel %vm982, 0.0, %v2489
      %v2566 = vsel %vm982, 0.0, %v2492
      %v2567 = vsel %vm982, 0.0, %v2495
      %v2568 = vsel %vm982, 0.0, %v2498
      %v2569 = vsel %vm982, 0.0, %v2501
      %v2570 = vsel %vm982, 0.0, %v2504
      %v2571 = vsel %vm982, 0.0, %v2507
      %v2572 = vsel %vm982, 0.0, %v2510
      %v2573 = vsel %vm982, 0.0, %v2513
      %v2574 = vsel %vm982, 0.0, %v2516
      %v2575 = vsel %vm982, 0.0, %v2519
      %v2576 = vsel %vm982, 0.0, %v2522
      %v2577 = vsel %vm982, 0.0, %v2525
      %v2578 = vsel %vm982, 0.0, %v2528
      %v2579 = vrot.slane %v2419, 1
      %v2580 = vrot.slane %v2420, 1
      %v2581 = vsel %vm1079, %v2579, %v2580
      %v2582 = vrot.slane %v2421, 1
      %v2583 = vrot.slane %v2422, 1
      %v2584 = vsel %vm1079, %v2582, %v2583
      %v2585 = vrot.slane %v2423, 1
      %v2586 = vrot.slane %v2424, 1
      %v2587 = vsel %vm1079, %v2585, %v2586
      %v2588 = vrot.slane %v2425, 1
      %v2589 = vrot.slane %v2426, 1
      %v2590 = vsel %vm1079, %v2588, %v2589
      %v2591 = vrot.slane %v2427, 1
      %v2592 = vrot.slane %v2428, 1
      %v2593 = vsel %vm1079, %v2591, %v2592
      %v2594 = vrot.slane %v2429, 1
      %v2595 = vrot.slane %v2430, 1
      %v2596 = vsel %vm1079, %v2594, %v2595
      %v2597 = vrot.slane %v2431, 1
      %v2598 = vrot.slane %v2432, 1
      %v2599 = vsel %vm1079, %v2597, %v2598
      %v2600 = vrot.slane %v2433, 1
      %v2601 = vrot.slane %v2434, 1
      %v2602 = vsel %vm1079, %v2600, %v2601
      %v2603 = vrot.slane %v2435, 1
      %v2604 = vrot.slane %v2436, 1
      %v2605 = vsel %vm1079, %v2603, %v2604
      %v2606 = vrot.slane %v2437, 1
      %v2607 = vrot.slane %v2438, 1
      %v2608 = vsel %vm1079, %v2606, %v2607
      %v2609 = vrot.slane %v2439, 1
      %v2610 = vrot.slane %v2440, 1
      %v2611 = vsel %vm1079, %v2609, %v2610
      %v2612 = vrot.slane %v2441, 1
      %v2613 = vrot.slane %v2442, 1
      %v2614 = vsel %vm1079, %v2612, %v2613
      %v2615 = vrot.slane %v2443, 1
      %v2616 = vrot.slane %v2444, 1
      %v2617 = vsel %vm1079, %v2615, %v2616
      %v2618 = vrot.slane %v2445, 1
      %v2619 = vrot.slane %v2446, 1
      %v2620 = vsel %vm1079, %v2618, %v2619
      %v2621 = vrot.slane %v2447, 1
      %v2622 = vrot.slane %v2448, 1
      %v2623 = vsel %vm1079, %v2621, %v2622
      %v2624 = vrot.slane %v2449, 1
      %v2625 = vrot.slane %v2450, 1
      %v2626 = vsel %vm1079, %v2624, %v2625
      %v2643 = vsel %vm1079, %v2580, 0.0
      %v2644 = vsel %vm1079, %v2583, 0.0
      %v2645 = vsel %vm1079, %v2586, 0.0
      %v2646 = vsel %vm1079, %v2589, 0.0
      %v2647 = vsel %vm1079, %v2592, 0.0
      %v2648 = vsel %vm1079, %v2595, 0.0
      %v2649 = vsel %vm1079, %v2598, 0.0
      %v2650 = vsel %vm1079, %v2601, 0.0
      %v2651 = vsel %vm1079, %v2604, 0.0
      %v2652 = vsel %vm1079, %v2607, 0.0
      %v2653 = vsel %vm1079, %v2610, 0.0
      %v2654 = vsel %vm1079, %v2613, 0.0
      %v2655 = vsel %vm1079, %v2616, 0.0
      %v2656 = vsel %vm1079, %v2619, 0.0
      %v2657 = vsel %vm1079, %v2622, 0.0
      %v2658 = vsel %vm1079, %v2625, 0.0
      %2659 = vrot.lane.b32.xlu0 %v2419, 4
      %v2660 = vpop.permute.xlu0 %2659
      %2661 = vrot.lane.b32.xlu0 %v2420, 4
      %v2662 = vpop.permute.xlu0 %2661
      %2663 = vrot.lane.b32.xlu0 %v2421, 4
      %v2664 = vpop.permute.xlu0 %2663
      %2665 = vrot.lane.b32.xlu0 %v2422, 4
      %v2666 = vpop.permute.xlu0 %2665
      %2667 = vrot.lane.b32.xlu0 %v2423, 4
      %v2668 = vpop.permute.xlu0 %2667
      %2669 = vrot.lane.b32.xlu0 %v2424, 4
      %v2670 = vpop.permute.xlu0 %2669
      %2671 = vrot.lane.b32.xlu0 %v2425, 4
      %v2672 = vpop.permute.xlu0 %2671
      %2673 = vrot.lane.b32.xlu0 %v2426, 4
      %v2674 = vpop.permute.xlu0 %2673
      %2675 = vrot.lane.b32.xlu0 %v2427, 4
      %v2676 = vpop.permute.xlu0 %2675
      %2677 = vrot.lane.b32.xlu0 %v2428, 4
      %v2678 = vpop.permute.xlu0 %2677
      %2679 = vrot.lane.b32.xlu0 %v2429, 4
      %v2680 = vpop.permute.xlu0 %2679
      %2681 = vrot.lane.b32.xlu0 %v2430, 4
      %v2682 = vpop.permute.xlu0 %2681
      %2683 = vrot.lane.b32.xlu0 %v2431, 4
      %v2684 = vpop.permute.xlu0 %2683
      %2685 = vrot.lane.b32.xlu0 %v2432, 4
      %v2686 = vpop.permute.xlu0 %2685
      %2687 = vrot.lane.b32.xlu0 %v2433, 4
      %v2688 = vpop.permute.xlu0 %2687
      %2689 = vrot.lane.b32.xlu0 %v2434, 4
      %v2690 = vpop.permute.xlu0 %2689
      %2691 = vrot.lane.b32.xlu0 %v2435, 4
      %v2692 = vpop.permute.xlu0 %2691
      %2693 = vrot.lane.b32.xlu0 %v2436, 4
      %v2694 = vpop.permute.xlu0 %2693
      %2695 = vrot.lane.b32.xlu0 %v2437, 4
      %v2696 = vpop.permute.xlu0 %2695
      %2697 = vrot.lane.b32.xlu0 %v2438, 4
      %v2698 = vpop.permute.xlu0 %2697
      %2699 = vrot.lane.b32.xlu0 %v2439, 4
      %v2700 = vpop.permute.xlu0 %2699
      %2701 = vrot.lane.b32.xlu0 %v2440, 4
      %v2702 = vpop.permute.xlu0 %2701
      %2703 = vrot.lane.b32.xlu0 %v2441, 4
      %v2704 = vpop.permute.xlu0 %2703
      %2705 = vrot.lane.b32.xlu0 %v2442, 4
      %v2706 = vpop.permute.xlu0 %2705
      %2707 = vrot.lane.b32.xlu0 %v2443, 4
      %v2708 = vpop.permute.xlu0 %2707
      %2709 = vrot.lane.b32.xlu0 %v2444, 4
      %v2710 = vpop.permute.xlu0 %2709
      %2711 = vrot.lane.b32.xlu0 %v2445, 4
      %v2712 = vpop.permute.xlu0 %2711
      %2713 = vrot.lane.b32.xlu0 %v2446, 4
      %v2714 = vpop.permute.xlu0 %2713
      %2715 = vrot.lane.b32.xlu0 %v2447, 4
      %v2716 = vpop.permute.xlu0 %2715
      %2717 = vrot.lane.b32.xlu0 %v2448, 4
      %v2718 = vpop.permute.xlu0 %2717
      %2719 = vrot.lane.b32.xlu0 %v2449, 4
      %v2720 = vpop.permute.xlu0 %2719
      %2721 = vrot.lane.b32.xlu0 %v2450, 4
      %v2722 = vpop.permute.xlu0 %2721
      %2771 = vrot.lane.b32.xlu0 %v2581, 8
      %v2772 = vpop.permute.xlu0 %2771
      %2773 = vrot.lane.b32.xlu0 %v2643, 8
      %v2774 = vpop.permute.xlu0 %2773
      %2775 = vrot.lane.b32.xlu0 %v2584, 8
      %v2776 = vpop.permute.xlu0 %2775
      %2777 = vrot.lane.b32.xlu0 %v2644, 8
      %v2778 = vpop.permute.xlu0 %2777
      %2779 = vrot.lane.b32.xlu0 %v2587, 8
      %v2780 = vpop.permute.xlu0 %2779
      %2781 = vrot.lane.b32.xlu0 %v2645, 8
      %v2782 = vpop.permute.xlu0 %2781
      %2783 = vrot.lane.b32.xlu0 %v2590, 8
      %v2784 = vpop.permute.xlu0 %2783
      %2785 = vrot.lane.b32.xlu0 %v2646, 8
      %v2786 = vpop.permute.xlu0 %2785
      %2787 = vrot.lane.b32.xlu0 %v2593, 8
      %v2788 = vpop.permute.xlu0 %2787
      %2789 = vrot.lane.b32.xlu0 %v2647, 8
      %v2790 = vpop.permute.xlu0 %2789
      %2791 = vrot.lane.b32.xlu0 %v2596, 8
      %v2792 = vpop.permute.xlu0 %2791
      %2793 = vrot.lane.b32.xlu0 %v2648, 8
      %v2794 = vpop.permute.xlu0 %2793
      %2795 = vrot.lane.b32.xlu0 %v2599, 8
      %v2796 = vpop.permute.xlu0 %2795
      %2797 = vrot.lane.b32.xlu0 %v2649, 8
      %v2798 = vpop.permute.xlu0 %2797
      %2799 = vrot.lane.b32.xlu0 %v2602, 8
      %v2800 = vpop.permute.xlu0 %2799
      %2801 = vrot.lane.b32.xlu0 %v2650, 8
      %v2802 = vpop.permute.xlu0 %2801
      %2803 = vrot.lane.b32.xlu0 %v2605, 8
      %v2804 = vpop.permute.xlu0 %2803
      %2805 = vrot.lane.b32.xlu0 %v2651, 8
      %v2806 = vpop.permute.xlu0 %2805
      %2807 = vrot.lane.b32.xlu0 %v2608, 8
      %v2808 = vpop.permute.xlu0 %2807
      %2809 = vrot.lane.b32.xlu0 %v2652, 8
      %v2810 = vpop.permute.xlu0 %2809
      %2811 = vrot.lane.b32.xlu0 %v2611, 8
      %v2812 = vpop.permute.xlu0 %2811
      %2813 = vrot.lane.b32.xlu0 %v2653, 8
      %v2814 = vpop.permute.xlu0 %2813
      %2815 = vrot.lane.b32.xlu0 %v2614, 8
      %v2816 = vpop.permute.xlu0 %2815
      %2817 = vrot.lane.b32.xlu0 %v2654, 8
      %v2818 = vpop.permute.xlu0 %2817
      %2819 = vrot.lane.b32.xlu0 %v2617, 8
      %v2820 = vpop.permute.xlu0 %2819
      %2821 = vrot.lane.b32.xlu0 %v2655, 8
      %v2822 = vpop.permute.xlu0 %2821
      %2823 = vrot.lane.b32.xlu0 %v2620, 8
      %v2824 = vpop.permute.xlu0 %2823
      %2825 = vrot.lane.b32.xlu0 %v2656, 8
      %v2826 = vpop.permute.xlu0 %2825
      %2827 = vrot.lane.b32.xlu0 %v2623, 8
      %v2828 = vpop.permute.xlu0 %2827
      %2829 = vrot.lane.b32.xlu0 %v2657, 8
      %v2830 = vpop.permute.xlu0 %2829
      %2831 = vrot.lane.b32.xlu0 %v2626, 8
      %v2832 = vpop.permute.xlu0 %2831
      %2833 = vrot.lane.b32.xlu0 %v2658, 8
      %v2834 = vpop.permute.xlu0 %2833
      %v2867 = vsel %vm258, %v2563, %v2660
      %v2868 = vsel %vm258, %v2485, %v2662
      %v2869 = vsel %vm258, %v2564, %v2664
      %v2870 = vsel %vm258, %v2488, %v2666
      %v2871 = vsel %vm258, %v2565, %v2668
      %v2872 = vsel %vm258, %v2491, %v2670
      %v2873 = vsel %vm258, %v2566, %v2672
      %v2874 = vsel %vm258, %v2494, %v2674
      %v2875 = vsel %vm258, %v2567, %v2676
      %v2876 = vsel %vm258, %v2497, %v2678
      %v2877 = vsel %vm258, %v2568, %v2680
      %v2878 = vsel %vm258, %v2500, %v2682
      %v2879 = vsel %vm258, %v2569, %v2684
      %v2880 = vsel %vm258, %v2503, %v2686
      %v2881 = vsel %vm258, %v2570, %v2688
      %v2882 = vsel %vm258, %v2506, %v2690
      %v2883 = vsel %vm258, %v2571, %v2692
      %v2884 = vsel %vm258, %v2509, %v2694
      %v2885 = vsel %vm258, %v2572, %v2696
      %v2886 = vsel %vm258, %v2512, %v2698
      %v2887 = vsel %vm258, %v2573, %v2700
      %v2888 = vsel %vm258, %v2515, %v2702
      %v2889 = vsel %vm258, %v2574, %v2704
      %v2890 = vsel %vm258, %v2518, %v2706
      %v2891 = vsel %vm258, %v2575, %v2708
      %v2892 = vsel %vm258, %v2521, %v2710
      %v2893 = vsel %vm258, %v2576, %v2712
      %v2894 = vsel %vm258, %v2524, %v2714
      %v2895 = vsel %vm258, %v2577, %v2716
      %v2896 = vsel %vm258, %v2527, %v2718
      %v2897 = vsel %vm258, %v2578, %v2720
      %v2898 = vsel %vm258, %v2530, %v2722
      %v2899 = vsel %vm1400, %v2867, %v2772
      %v2900 = vsel %vm1400, %v2868, %v2774
      %v2901 = vsel %vm1400, %v2869, %v2776
      %v2902 = vsel %vm1400, %v2870, %v2778
      %v2903 = vsel %vm1400, %v2871, %v2780
      %v2904 = vsel %vm1400, %v2872, %v2782
      %v2905 = vsel %vm1400, %v2873, %v2784
      %v2906 = vsel %vm1400, %v2874, %v2786
      %v2907 = vsel %vm1400, %v2875, %v2788
      %v2908 = vsel %vm1400, %v2876, %v2790
      %v2909 = vsel %vm1400, %v2877, %v2792
      %v2910 = vsel %vm1400, %v2878, %v2794
      %v2911 = vsel %vm1400, %v2879, %v2796
      %v2912 = vsel %vm1400, %v2880, %v2798
      %v2913 = vsel %vm1400, %v2881, %v2800
      %v2914 = vsel %vm1400, %v2882, %v2802
      %v2915 = vsel %vm1400, %v2883, %v2804
      %v2916 = vsel %vm1400, %v2884, %v2806
      %v2917 = vsel %vm1400, %v2885, %v2808
      %v2918 = vsel %vm1400, %v2886, %v2810
      %v2919 = vsel %vm1400, %v2887, %v2812
      %v2920 = vsel %vm1400, %v2888, %v2814
      %v2921 = vsel %vm1400, %v2889, %v2816
      %v2922 = vsel %vm1400, %v2890, %v2818
      %v2923 = vsel %vm1400, %v2891, %v2820
      %v2924 = vsel %vm1400, %v2892, %v2822
      %v2925 = vsel %vm1400, %v2893, %v2824
      %v2926 = vsel %vm1400, %v2894, %v2826
      %v2927 = vsel %vm1400, %v2895, %v2828
      %v2928 = vsel %vm1400, %v2896, %v2830
      %v2929 = vsel %vm1400, %v2897, %v2832
      %v2930 = vsel %vm1400, %v2898, %v2834
      %v2931 = vpack.c.bf16 %v2900, %v2899
      %v2932 = vpack.c.bf16 %v2902, %v2901
      %v2933 = vpack.c.bf16 %v2904, %v2903
      %v2934 = vpack.c.bf16 %v2906, %v2905
      %v2935 = vpack.c.bf16 %v2908, %v2907
      %v2936 = vpack.c.bf16 %v2910, %v2909
      %v2937 = vpack.c.bf16 %v2912, %v2911
      %v2938 = vpack.c.bf16 %v2914, %v2913
      %v2939 = vpack.c.bf16 %v2916, %v2915
      %v2940 = vpack.c.bf16 %v2918, %v2917
      %v2941 = vpack.c.bf16 %v2920, %v2919
      %v2942 = vpack.c.bf16 %v2922, %v2921
      %v2943 = vpack.c.bf16 %v2924, %v2923
      %v2944 = vpack.c.bf16 %v2926, %v2925
      %v2945 = vpack.c.bf16 %v2928, %v2927
      %v2946 = vpack.c.bf16 %v2930, %v2929
      %s2947 = scalar_lea.vmem %s3, 16
      %v2948 = vld [vmem:[%s2947] sm:$0xf]
      %v2949 = vld [vmem:[%s2947 + $0x4] sm:$0x3]
      %v2952 = vunpack.c.l.b16 %v2948
      %v2953 = vunpack.c.l.b16 %v2949
      %v2954 = vpack.c.b16 %v2953, %v2952
      %v2956 = vsel %vm1987, %v2931, 0
      %v2959 = vsel %vm1987, %v2932, 0
      %v2962 = vsel %vm1987, %v2933, 0
      %v2965 = vsel %vm1987, %v2934, 0
      %v2968 = vsel %vm1987, %v2935, 0
      %v2971 = vsel %vm1987, %v2936, 0
      %v2974 = vsel %vm1987, %v2937, 0
      %v2977 = vsel %vm1987, %v2938, 0
      %v2980 = vsel %vm1987, %v2939, 0
      %v2983 = vsel %vm1987, %v2940, 0
      %v2986 = vsel %vm1987, %v2941, 0
      %v2989 = vsel %vm1987, %v2942, 0
      %v2992 = vsel %vm1987, %v2943, 0
      %v2995 = vsel %vm1987, %v2944, 0
      %v2998 = vsel %vm1987, %v2945, 0
      %v3001 = vsel %vm1987, %v2946, 0
      %v3004 = vsel %vm2036, %v2954, 0
      %3006 = vmatprep.subr.bf16.mxu0 0
      %3007 = vmatpush1.bf16.msra.mxu0 %v3004
      %3008 = vmatprep.subr.bf16.mxu0 0
      %3009 = vmatpush1.bf16.msra.mxu0 0
      %3010 = vmatprep.subr.bf16.mxu0 0
      %3011 = vmatpush1.bf16.msra.mxu0 0
      %3012 = vmatprep.subr.bf16.mxu0 0
      %3013 = vmatpush1.bf16.msra.mxu0 0
      %3014 = vmatprep.subr.bf16.mxu0 0
      %3015 = vmatpush1.bf16.msra.mxu0 0
      %3016 = vmatprep.subr.bf16.mxu0 0
      %3017 = vmatpush1.bf16.msra.mxu0 0
      %3018 = vmatprep.subr.bf16.mxu0 0
      %3019 = vmatpush1.bf16.msra.mxu0 0
      %3020 = vmatprep.subr.bf16.mxu0 0
      %3021 = vmatpush1.bf16.msra.mxu0 0
      %3022 = vmatprep.subr.bf16.mxu0 0
      %3023 = vmatpush1.bf16.msra.mxu0 0
      %3024 = vmatprep.subr.bf16.mxu0 0
      %3025 = vmatpush1.bf16.msra.mxu0 0
      %3026 = vmatprep.subr.bf16.mxu0 0
      %3027 = vmatpush1.bf16.msra.mxu0 0
      %3028 = vmatprep.subr.bf16.mxu0 0
      %3029 = vmatpush1.bf16.msra.mxu0 0
      %3030 = vmatprep.subr.bf16.mxu0 0
      %3031 = vmatpush1.bf16.msra.mxu0 0
      %3032 = vmatprep.subr.bf16.mxu0 0
      %3033 = vmatpush1.bf16.msra.mxu0 0
      %3034 = vmatprep.subr.bf16.mxu0 0
      %3035 = vmatpush1.bf16.msra.mxu0 0
      %3036 = vmatprep.subr.bf16.mxu0 0
      %3037 = vmatpush1.bf16.msra.mxu0 0
      %3038 = vmatprep.mubr.bf16.mxu0 0
      %3039 = vmatmul.mubr.bf16.gmra.mrb[0].mxu0 %v2956
      %v3040 = vpop.f32.mrb[0].mxu0
      %v3041 = vadd.f32 0.0, %v3040
      %v3042 = vpop.f32.mrb[0].mxu0
      %v3043 = vpop.f32.mrb[0].mxu0
      %v3044 = vadd.f32 0.0, %v3043
      %v3045 = vpop.f32.mrb[0].mxu0
      %3046 = vmatprep.mubr.bf16.mxu0 0
      %3047 = vmatmul.mubr.bf16.gmra.mrb[0].mxu0 %v2959
      %v3048 = vpop.f32.mrb[0].mxu0
      %v3049 = vadd.f32 0.0, %v3048
      %v3050 = vpop.f32.mrb[0].mxu0
      %v3051 = vpop.f32.mrb[0].mxu0
      %v3052 = vadd.f32 0.0, %v3051
      %v3053 = vpop.f32.mrb[0].mxu0
      %3054 = vmatprep.mubr.bf16.mxu0 0
      %3055 = vmatmul.mubr.bf16.gmra.mrb[0].mxu0 %v2962
      %v3056 = vpop.f32.mrb[0].mxu0
      %v3057 = vadd.f32 0.0, %v3056
      %v3058 = vpop.f32.mrb[0].mxu0
      %v3059 = vpop.f32.mrb[0].mxu0
      %v3060 = vadd.f32 0.0, %v3059
      %v3061 = vpop.f32.mrb[0].mxu0
      %3062 = vmatprep.mubr.bf16.mxu0 0
      %3063 = vmatmul.mubr.bf16.gmra.mrb[0].mxu0 %v2965
      %v3064 = vpop.f32.mrb[0].mxu0
      %v3065 = vadd.f32 0.0, %v3064
      %v3066 = vpop.f32.mrb[0].mxu0
      %v3067 = vpop.f32.mrb[0].mxu0
      %v3068 = vadd.f32 0.0, %v3067
      %v3069 = vpop.f32.mrb[0].mxu0
      %3070 = vmatprep.mubr.bf16.mxu0 0
      %3071 = vmatmul.mubr.bf16.gmra.mrb[0].mxu0 %v2968
      %v3072 = vpop.f32.mrb[0].mxu0
      %v3073 = vadd.f32 0.0, %v3072
      %v3074 = vpop.f32.mrb[0].mxu0
      %v3075 = vpop.f32.mrb[0].mxu0
      %v3076 = vadd.f32 0.0, %v3075
      %v3077 = vpop.f32.mrb[0].mxu0
      %3078 = vmatprep.mubr.bf16.mxu0 0
      %3079 = vmatmul.mubr.bf16.gmra.mrb[0].mxu0 %v2971
      %v3080 = vpop.f32.mrb[0].mxu0
      %v3081 = vadd.f32 0.0, %v3080
      %v3082 = vpop.f32.mrb[0].mxu0
      %v3083 = vpop.f32.mrb[0].mxu0
      %v3084 = vadd.f32 0.0, %v3083
      %v3085 = vpop.f32.mrb[0].mxu0
      %3086 = vmatprep.mubr.bf16.mxu0 0
      %3087 = vmatmul.mubr.bf16.gmra.mrb[0].mxu0 %v2974
      %v3088 = vpop.f32.mrb[0].mxu0
      %v3089 = vadd.f32 0.0, %v3088
      %v3090 = vpop.f32.mrb[0].mxu0
      %v3091 = vpop.f32.mrb[0].mxu0
      %v3092 = vadd.f32 0.0, %v3091
      %v3093 = vpop.f32.mrb[0].mxu0
      %3094 = vmatprep.mubr.bf16.mxu0 0
      %3095 = vmatmul.mubr.bf16.gmra.mrb[0].mxu0 %v2977
      %v3096 = vpop.f32.mrb[0].mxu0
      %v3097 = vadd.f32 0.0, %v3096
      %v3098 = vpop.f32.mrb[0].mxu0
      %v3099 = vpop.f32.mrb[0].mxu0
      %v3100 = vadd.f32 0.0, %v3099
      %v3101 = vpop.f32.mrb[0].mxu0
      %3102 = vmatprep.mubr.bf16.mxu0 0
      %3103 = vmatmul.mubr.bf16.gmra.mrb[0].mxu0 %v2980
      %v3104 = vpop.f32.mrb[0].mxu0
      %v3105 = vadd.f32 0.0, %v3104
      %v3106 = vpop.f32.mrb[0].mxu0
      %v3107 = vpop.f32.mrb[0].mxu0
      %v3108 = vadd.f32 0.0, %v3107
      %v3109 = vpop.f32.mrb[0].mxu0
      %3110 = vmatprep.mubr.bf16.mxu0 0
      %3111 = vmatmul.mubr.bf16.gmra.mrb[0].mxu0 %v2983
      %v3112 = vpop.f32.mrb[0].mxu0
      %v3113 = vadd.f32 0.0, %v3112
      %v3114 = vpop.f32.mrb[0].mxu0
      %v3115 = vpop.f32.mrb[0].mxu0
      %v3116 = vadd.f32 0.0, %v3115
      %v3117 = vpop.f32.mrb[0].mxu0
      %3118 = vmatprep.mubr.bf16.mxu0 0
      %3119 = vmatmul.mubr.bf16.gmra.mrb[0].mxu0 %v2986
      %v3120 = vpop.f32.mrb[0].mxu0
      %v3121 = vadd.f32 0.0, %v3120
      %v3122 = vpop.f32.mrb[0].mxu0
      %v3123 = vpop.f32.mrb[0].mxu0
      %v3124 = vadd.f32 0.0, %v3123
      %v3125 = vpop.f32.mrb[0].mxu0
      %3126 = vmatprep.mubr.bf16.mxu0 0
      %3127 = vmatmul.mubr.bf16.gmra.mrb[0].mxu0 %v2989
      %v3128 = vpop.f32.mrb[0].mxu0
      %v3129 = vadd.f32 0.0, %v3128
      %v3130 = vpop.f32.mrb[0].mxu0
      %v3131 = vpop.f32.mrb[0].mxu0
      %v3132 = vadd.f32 0.0, %v3131
      %v3133 = vpop.f32.mrb[0].mxu0
      %3134 = vmatprep.mubr.bf16.mxu0 0
      %3135 = vmatmul.mubr.bf16.gmra.mrb[0].mxu0 %v2992
      %v3136 = vpop.f32.mrb[0].mxu0
      %v3137 = vadd.f32 0.0, %v3136
      %v3138 = vpop.f32.mrb[0].mxu0
      %v3139 = vpop.f32.mrb[0].mxu0
      %v3140 = vadd.f32 0.0, %v3139
      %v3141 = vpop.f32.mrb[0].mxu0
      %3142 = vmatprep.mubr.bf16.mxu0 0
      %3143 = vmatmul.mubr.bf16.gmra.mrb[0].mxu0 %v2995
      %v3144 = vpop.f32.mrb[0].mxu0
      %v3145 = vadd.f32 0.0, %v3144
      %v3146 = vpop.f32.mrb[0].mxu0
      %v3147 = vpop.f32.mrb[0].mxu0
      %v3148 = vadd.f32 0.0, %v3147
      %v3149 = vpop.f32.mrb[0].mxu0
      %3150 = vmatprep.mubr.bf16.mxu0 0
      %3151 = vmatmul.mubr.bf16.gmra.mrb[0].mxu0 %v2998
      %v3152 = vpop.f32.mrb[0].mxu0
      %v3153 = vadd.f32 0.0, %v3152
      %v3154 = vpop.f32.mrb[0].mxu0
      %v3155 = vpop.f32.mrb[0].mxu0
      %v3156 = vadd.f32 0.0, %v3155
      %v3157 = vpop.f32.mrb[0].mxu0
      %3158 = vmatprep.mubr.bf16.mxu0 0
      %3159 = vmatmul.mubr.bf16.gmra.mrb[0].mxu0 %v3001
      %v3160 = vpop.f32.mrb[0].mxu0
      %v3161 = vadd.f32 0.0, %v3160
      %v3162 = vpop.f32.mrb[0].mxu0
      %v3163 = vpop.f32.mrb[0].mxu0
      %v3164 = vadd.f32 0.0, %v3163
      %v3165 = vpop.f32.mrb[0].mxu0
      %3166 = vdwg.mxu0
      %v3167 = vadd.f32 %v2292, %v3041
      %v3168 = vadd.f32 %v2295, %v3044
      %v3169 = vadd.f32 %v2300, %v3049
      %v3170 = vadd.f32 %v2303, %v3052
      %v3171 = vadd.f32 %v2308, %v3057
      %v3172 = vadd.f32 %v2311, %v3060
      %v3173 = vadd.f32 %v2316, %v3065
      %v3174 = vadd.f32 %v2319, %v3068
      %v3175 = vadd.f32 %v2324, %v3073
      %v3176 = vadd.f32 %v2327, %v3076
      %v3177 = vadd.f32 %v2332, %v3081
      %v3178 = vadd.f32 %v2335, %v3084
      %v3179 = vadd.f32 %v2340, %v3089
      %v3180 = vadd.f32 %v2343, %v3092
      %v3181 = vadd.f32 %v2348, %v3097
      %v3182 = vadd.f32 %v2351, %v3100
      %v3183 = vadd.f32 %v2356, %v3105
      %v3184 = vadd.f32 %v2359, %v3108
      %v3185 = vadd.f32 %v2364, %v3113
      %v3186 = vadd.f32 %v2367, %v3116
      %v3187 = vadd.f32 %v2372, %v3121
      %v3188 = vadd.f32 %v2375, %v3124
      %v3189 = vadd.f32 %v2380, %v3129
      %v3190 = vadd.f32 %v2383, %v3132
      %v3191 = vadd.f32 %v2388, %v3137
      %v3192 = vadd.f32 %v2391, %v3140
      %v3193 = vadd.f32 %v2396, %v3145
      %v3194 = vadd.f32 %v2399, %v3148
      %v3195 = vadd.f32 %v2404, %v3153
      %v3196 = vadd.f32 %v2407, %v3156
      %v3197 = vadd.f32 %v2412, %v3161
      %v3198 = vadd.f32 %v2415, %v3164
      %v3199 = vld [vmem:[%s4] sm:$0x1]
      %v3201 = vlaneseq
      %v3202 = vshrl.u32 %v3201, 7
      %v3203 = vsub.s32 0, %v3202
      %v3204 = vrot.slane %v3199, %v3203
      %v3206 = vadd.f32 %v3167, %v3204
      %v3207 = vadd.f32 %v3168, %v3204
      %v3208 = vadd.f32 %v3169, %v3204
      %v3209 = vadd.f32 %v3170, %v3204
      %v3210 = vadd.f32 %v3171, %v3204
      %v3211 = vadd.f32 %v3172, %v3204
      %v3212 = vadd.f32 %v3173, %v3204
      %v3213 = vadd.f32 %v3174, %v3204
      %v3214 = vadd.f32 %v3175, %v3204
      %v3215 = vadd.f32 %v3176, %v3204
      %v3216 = vadd.f32 %v3177, %v3204
      %v3217 = vadd.f32 %v3178, %v3204
      %v3218 = vadd.f32 %v3179, %v3204
      %v3219 = vadd.f32 %v3180, %v3204
      %v3220 = vadd.f32 %v3181, %v3204
      %v3221 = vadd.f32 %v3182, %v3204
      %v3222 = vadd.f32 %v3183, %v3204
      %v3223 = vadd.f32 %v3184, %v3204
      %v3224 = vadd.f32 %v3185, %v3204
      %v3225 = vadd.f32 %v3186, %v3204
      %v3226 = vadd.f32 %v3187, %v3204
      %v3227 = vadd.f32 %v3188, %v3204
      %v3228 = vadd.f32 %v3189, %v3204
      %v3229 = vadd.f32 %v3190, %v3204
      %v3230 = vadd.f32 %v3191, %v3204
      %v3231 = vadd.f32 %v3192, %v3204
      %v3232 = vadd.f32 %v3193, %v3204
      %v3233 = vadd.f32 %v3194, %v3204
      %v3234 = vadd.f32 %v3195, %v3204
      %v3235 = vadd.f32 %v3196, %v3204
      %v3236 = vadd.f32 %v3197, %v3204
      %v3237 = vadd.f32 %v3198, %v3204
      %v3238 = vmin.f32 %v3206, 20.0
      %v3239 = vmin.f32 %v3207, 20.0
      %v3240 = vmin.f32 %v3208, 20.0
      %v3241 = vmin.f32 %v3209, 20.0
      %v3242 = vmin.f32 %v3210, 20.0
      %v3243 = vmin.f32 %v3211, 20.0
      %v3244 = vmin.f32 %v3212, 20.0
      %v3245 = vmin.f32 %v3213, 20.0
      %v3246 = vmin.f32 %v3214, 20.0
      %v3247 = vmin.f32 %v3215, 20.0
      %v3248 = vmin.f32 %v3216, 20.0
      %v3249 = vmin.f32 %v3217, 20.0
      %v3250 = vmin.f32 %v3218, 20.0
      %v3251 = vmin.f32 %v3219, 20.0
      %v3252 = vmin.f32 %v3220, 20.0
      %v3253 = vmin.f32 %v3221, 20.0
      %v3254 = vmin.f32 %v3222, 20.0
      %v3255 = vmin.f32 %v3223, 20.0
      %v3256 = vmin.f32 %v3224, 20.0
      %v3257 = vmin.f32 %v3225, 20.0
      %v3258 = vmin.f32 %v3226, 20.0
      %v3259 = vmin.f32 %v3227, 20.0
      %v3260 = vmin.f32 %v3228, 20.0
      %v3261 = vmin.f32 %v3229, 20.0
      %v3262 = vmin.f32 %v3230, 20.0
      %v3263 = vmin.f32 %v3231, 20.0
      %v3264 = vmin.f32 %v3232, 20.0
      %v3265 = vmin.f32 %v3233, 20.0
      %v3266 = vmin.f32 %v3234, 20.0
      %v3267 = vmin.f32 %v3235, 20.0
      %v3268 = vmin.f32 %v3236, 20.0
      %v3269 = vmin.f32 %v3237, 20.0
      %v3270 = vmul.f32 %v3238, 1.442695
      %v3271 = vpow.pop %v3270
      %v3272 = vmul.f32 %v3239, 1.442695
      %v3273 = vpow.pop %v3272
      %v3274 = vmul.f32 %v3240, 1.442695
      %v3275 = vpow.pop %v3274
      %v3276 = vmul.f32 %v3241, 1.442695
      %v3277 = vpow.pop %v3276
      %v3278 = vmul.f32 %v3242, 1.442695
      %v3279 = vpow.pop %v3278
      %v3280 = vmul.f32 %v3243, 1.442695
      %v3281 = vpow.pop %v3280
      %v3282 = vmul.f32 %v3244, 1.442695
      %v3283 = vpow.pop %v3282
      %v3284 = vmul.f32 %v3245, 1.442695
      %v3285 = vpow.pop %v3284
      %v3286 = vmul.f32 %v3246, 1.442695
      %v3287 = vpow.pop %v3286
      %v3288 = vmul.f32 %v3247, 1.442695
      %v3289 = vpow.pop %v3288
      %v3290 = vmul.f32 %v3248, 1.442695
      %v3291 = vpow.pop %v3290
      %v3292 = vmul.f32 %v3249, 1.442695
      %v3293 = vpow.pop %v3292
      %v3294 = vmul.f32 %v3250, 1.442695
      %v3295 = vpow.pop %v3294
      %v3296 = vmul.f32 %v3251, 1.442695
      %v3297 = vpow.pop %v3296
      %v3298 = vmul.f32 %v3252, 1.442695
      %v3299 = vpow.pop %v3298
      %v3300 = vmul.f32 %v3253, 1.442695
      %v3301 = vpow.pop %v3300
      %v3302 = vmul.f32 %v3254, 1.442695
      %v3303 = vpow.pop %v3302
      %v3304 = vmul.f32 %v3255, 1.442695
      %v3305 = vpow.pop %v3304
      %v3306 = vmul.f32 %v3256, 1.442695
      %v3307 = vpow.pop %v3306
      %v3308 = vmul.f32 %v3257, 1.442695
      %v3309 = vpow.pop %v3308
      %v3310 = vmul.f32 %v3258, 1.442695
      %v3311 = vpow.pop %v3310
      %v3312 = vmul.f32 %v3259, 1.442695
      %v3313 = vpow.pop %v3312
      %v3314 = vmul.f32 %v3260, 1.442695
      %v3315 = vpow.pop %v3314
      %v3316 = vmul.f32 %v3261, 1.442695
      %v3317 = vpow.pop %v3316
      %v3318 = vmul.f32 %v3262, 1.442695
      %v3319 = vpow.pop %v3318
      %v3320 = vmul.f32 %v3263, 1.442695
      %v3321 = vpow.pop %v3320
      %v3322 = vmul.f32 %v3264, 1.442695
      %v3323 = vpow.pop %v3322
      %v3324 = vmul.f32 %v3265, 1.442695
      %v3325 = vpow.pop %v3324
      %v3326 = vmul.f32 %v3266, 1.442695
      %v3327 = vpow.pop %v3326
      %v3328 = vmul.f32 %v3267, 1.442695
      %v3329 = vpow.pop %v3328
      %v3330 = vmul.f32 %v3268, 1.442695
      %v3331 = vpow.pop %v3330
      %v3332 = vmul.f32 %v3269, 1.442695
      %v3333 = vpow.pop %v3332
      %v3334 = vadd.f32 %v3271, 1.0
      %v3335 = vadd.f32 %v3273, 1.0
      %v3336 = vadd.f32 %v3275, 1.0
      %v3337 = vadd.f32 %v3277, 1.0
      %v3338 = vadd.f32 %v3279, 1.0
      %v3339 = vadd.f32 %v3281, 1.0
      %v3340 = vadd.f32 %v3283, 1.0
      %v3341 = vadd.f32 %v3285, 1.0
      %v3342 = vadd.f32 %v3287, 1.0
      %v3343 = vadd.f32 %v3289, 1.0
      %v3344 = vadd.f32 %v3291, 1.0
      %v3345 = vadd.f32 %v3293, 1.0
      %v3346 = vadd.f32 %v3295, 1.0
      %v3347 = vadd.f32 %v3297, 1.0
      %v3348 = vadd.f32 %v3299, 1.0
      %v3349 = vadd.f32 %v3301, 1.0
      %v3350 = vadd.f32 %v3303, 1.0
      %v3351 = vadd.f32 %v3305, 1.0
      %v3352 = vadd.f32 %v3307, 1.0
      %v3353 = vadd.f32 %v3309, 1.0
      %v3354 = vadd.f32 %v3311, 1.0
      %v3355 = vadd.f32 %v3313, 1.0
      %v3356 = vadd.f32 %v3315, 1.0
      %v3357 = vadd.f32 %v3317, 1.0
      %v3358 = vadd.f32 %v3319, 1.0
      %v3359 = vadd.f32 %v3321, 1.0
      %v3360 = vadd.f32 %v3323, 1.0
      %v3361 = vadd.f32 %v3325, 1.0
      %v3362 = vadd.f32 %v3327, 1.0
      %v3363 = vadd.f32 %v3329, 1.0
      %v3364 = vadd.f32 %v3331, 1.0
      %v3365 = vadd.f32 %v3333, 1.0
      %v3366 = vmul.f32 %v3334, %v3334
      %v3367 = vmul.f32 %v3335, %v3335
      %v3368 = vmul.f32 %v3336, %v3336
      %v3369 = vmul.f32 %v3337, %v3337
      %v3370 = vmul.f32 %v3338, %v3338
      %v3371 = vmul.f32 %v3339, %v3339
      %v3372 = vmul.f32 %v3340, %v3340
      %v3373 = vmul.f32 %v3341, %v3341
      %v3374 = vmul.f32 %v3342, %v3342
      %v3375 = vmul.f32 %v3343, %v3343
      %v3376 = vmul.f32 %v3344, %v3344
      %v3377 = vmul.f32 %v3345, %v3345
      %v3378 = vmul.f32 %v3346, %v3346
      %v3379 = vmul.f32 %v3347, %v3347
      %v3380 = vmul.f32 %v3348, %v3348
      %v3381 = vmul.f32 %v3349, %v3349
      %v3382 = vmul.f32 %v3350, %v3350
      %v3383 = vmul.f32 %v3351, %v3351
      %v3384 = vmul.f32 %v3352, %v3352
      %v3385 = vmul.f32 %v3353, %v3353
      %v3386 = vmul.f32 %v3354, %v3354
      %v3387 = vmul.f32 %v3355, %v3355
      %v3388 = vmul.f32 %v3356, %v3356
      %v3389 = vmul.f32 %v3357, %v3357
      %v3390 = vmul.f32 %v3358, %v3358
      %v3391 = vmul.f32 %v3359, %v3359
      %v3392 = vmul.f32 %v3360, %v3360
      %v3393 = vmul.f32 %v3361, %v3361
      %v3394 = vmul.f32 %v3362, %v3362
      %v3395 = vmul.f32 %v3363, %v3363
      %v3396 = vmul.f32 %v3364, %v3364
      %v3397 = vmul.f32 %v3365, %v3365
      %v3398 = vadd.f32 %v3366, 1.0
      %v3399 = vadd.f32 %v3367, 1.0
      %v3400 = vadd.f32 %v3368, 1.0
      %v3401 = vadd.f32 %v3369, 1.0
      %v3402 = vadd.f32 %v3370, 1.0
      %v3403 = vadd.f32 %v3371, 1.0
      %v3404 = vadd.f32 %v3372, 1.0
      %v3405 = vadd.f32 %v3373, 1.0
      %v3406 = vadd.f32 %v3374, 1.0
      %v3407 = vadd.f32 %v3375, 1.0
      %v3408 = vadd.f32 %v3376, 1.0
      %v3409 = vadd.f32 %v3377, 1.0
      %v3410 = vadd.f32 %v3378, 1.0
      %v3411 = vadd.f32 %v3379, 1.0
      %v3412 = vadd.f32 %v3380, 1.0
      %v3413 = vadd.f32 %v3381, 1.0
      %v3414 = vadd.f32 %v3382, 1.0
      %v3415 = vadd.f32 %v3383, 1.0
      %v3416 = vadd.f32 %v3384, 1.0
      %v3417 = vadd.f32 %v3385, 1.0
      %v3418 = vadd.f32 %v3386, 1.0
      %v3419 = vadd.f32 %v3387, 1.0
      %v3420 = vadd.f32 %v3388, 1.0
      %v3421 = vadd.f32 %v3389, 1.0
      %v3422 = vadd.f32 %v3390, 1.0
      %v3423 = vadd.f32 %v3391, 1.0
      %v3424 = vadd.f32 %v3392, 1.0
      %v3425 = vadd.f32 %v3393, 1.0
      %v3426 = vadd.f32 %v3394, 1.0
      %v3427 = vadd.f32 %v3395, 1.0
      %v3428 = vadd.f32 %v3396, 1.0
      %v3429 = vadd.f32 %v3397, 1.0
      %v3430 = vrcp.pop %v3398
      %v3431 = vrcp.pop %v3399
      %v3432 = vrcp.pop %v3400
      %v3433 = vrcp.pop %v3401
      %v3434 = vrcp.pop %v3402
      %v3435 = vrcp.pop %v3403
      %v3436 = vrcp.pop %v3404
      %v3437 = vrcp.pop %v3405
      %v3438 = vrcp.pop %v3406
      %v3439 = vrcp.pop %v3407
      %v3440 = vrcp.pop %v3408
      %v3441 = vrcp.pop %v3409
      %v3442 = vrcp.pop %v3410
      %v3443 = vrcp.pop %v3411
      %v3444 = vrcp.pop %v3412
      %v3445 = vrcp.pop %v3413
      %v3446 = vrcp.pop %v3414
      %v3447 = vrcp.pop %v3415
      %v3448 = vrcp.pop %v3416
      %v3449 = vrcp.pop %v3417
      %v3450 = vrcp.pop %v3418
      %v3451 = vrcp.pop %v3419
      %v3452 = vrcp.pop %v3420
      %v3453 = vrcp.pop %v3421
      %v3454 = vrcp.pop %v3422
      %v3455 = vrcp.pop %v3423
      %v3456 = vrcp.pop %v3424
      %v3457 = vrcp.pop %v3425
      %v3458 = vrcp.pop %v3426
      %v3459 = vrcp.pop %v3427
      %v3460 = vrcp.pop %v3428
      %v3461 = vrcp.pop %v3429
      %v3462 = vmul.f32 %v3430, 2.0
      %v3463 = vmul.f32 %v3431, 2.0
      %v3464 = vmul.f32 %v3432, 2.0
      %v3465 = vmul.f32 %v3433, 2.0
      %v3466 = vmul.f32 %v3434, 2.0
      %v3467 = vmul.f32 %v3435, 2.0
      %v3468 = vmul.f32 %v3436, 2.0
      %v3469 = vmul.f32 %v3437, 2.0
      %v3470 = vmul.f32 %v3438, 2.0
      %v3471 = vmul.f32 %v3439, 2.0
      %v3472 = vmul.f32 %v3440, 2.0
      %v3473 = vmul.f32 %v3441, 2.0
      %v3474 = vmul.f32 %v3442, 2.0
      %v3475 = vmul.f32 %v3443, 2.0
      %v3476 = vmul.f32 %v3444, 2.0
      %v3477 = vmul.f32 %v3445, 2.0
      %v3478 = vmul.f32 %v3446, 2.0
      %v3479 = vmul.f32 %v3447, 2.0
      %v3480 = vmul.f32 %v3448, 2.0
      %v3481 = vmul.f32 %v3449, 2.0
      %v3482 = vmul.f32 %v3450, 2.0
      %v3483 = vmul.f32 %v3451, 2.0
      %v3484 = vmul.f32 %v3452, 2.0
      %v3485 = vmul.f32 %v3453, 2.0
      %v3486 = vmul.f32 %v3454, 2.0
      %v3487 = vmul.f32 %v3455, 2.0
      %v3488 = vmul.f32 %v3456, 2.0
      %v3489 = vmul.f32 %v3457, 2.0
      %v3490 = vmul.f32 %v3458, 2.0
      %v3491 = vmul.f32 %v3459, 2.0
      %v3492 = vmul.f32 %v3460, 2.0
      %v3493 = vmul.f32 %v3461, 2.0
      %v3494 = vsub.f32 1.0, %v3462
      %v3495 = vsub.f32 1.0, %v3463
      %v3496 = vsub.f32 1.0, %v3464
      %v3497 = vsub.f32 1.0, %v3465
      %v3498 = vsub.f32 1.0, %v3466
      %v3499 = vsub.f32 1.0, %v3467
      %v3500 = vsub.f32 1.0, %v3468
      %v3501 = vsub.f32 1.0, %v3469
      %v3502 = vsub.f32 1.0, %v3470
      %v3503 = vsub.f32 1.0, %v3471
      %v3504 = vsub.f32 1.0, %v3472
      %v3505 = vsub.f32 1.0, %v3473
      %v3506 = vsub.f32 1.0, %v3474
      %v3507 = vsub.f32 1.0, %v3475
      %v3508 = vsub.f32 1.0, %v3476
      %v3509 = vsub.f32 1.0, %v3477
      %v3510 = vsub.f32 1.0, %v3478
      %v3511 = vsub.f32 1.0, %v3479
      %v3512 = vsub.f32 1.0, %v3480
      %v3513 = vsub.f32 1.0, %v3481
      %v3514 = vsub.f32 1.0, %v3482
      %v3515 = vsub.f32 1.0, %v3483
      %v3516 = vsub.f32 1.0, %v3484
      %v3517 = vsub.f32 1.0, %v3485
      %v3518 = vsub.f32 1.0, %v3486
      %v3519 = vsub.f32 1.0, %v3487
      %v3520 = vsub.f32 1.0, %v3488
      %v3521 = vsub.f32 1.0, %v3489
      %v3522 = vsub.f32 1.0, %v3490
      %v3523 = vsub.f32 1.0, %v3491
      %v3524 = vsub.f32 1.0, %v3492
      %v3525 = vsub.f32 1.0, %v3493
      %vm3526 = vcmp.gt.f32.partialorder %v3206, 20.0
      %vm3527 = vcmp.gt.f32.partialorder %v3207, 20.0
      %vm3528 = vcmp.gt.f32.partialorder %v3208, 20.0
      %vm3529 = vcmp.gt.f32.partialorder %v3209, 20.0
      %vm3530 = vcmp.gt.f32.partialorder %v3210, 20.0
      %vm3531 = vcmp.gt.f32.partialorder %v3211, 20.0
      %vm3532 = vcmp.gt.f32.partialorder %v3212, 20.0
      %vm3533 = vcmp.gt.f32.partialorder %v3213, 20.0
      %vm3534 = vcmp.gt.f32.partialorder %v3214, 20.0
      %vm3535 = vcmp.gt.f32.partialorder %v3215, 20.0
      %vm3536 = vcmp.gt.f32.partialorder %v3216, 20.0
      %vm3537 = vcmp.gt.f32.partialorder %v3217, 20.0
      %vm3538 = vcmp.gt.f32.partialorder %v3218, 20.0
      %vm3539 = vcmp.gt.f32.partialorder %v3219, 20.0
      %vm3540 = vcmp.gt.f32.partialorder %v3220, 20.0
      %vm3541 = vcmp.gt.f32.partialorder %v3221, 20.0
      %vm3542 = vcmp.gt.f32.partialorder %v3222, 20.0
      %vm3543 = vcmp.gt.f32.partialorder %v3223, 20.0
      %vm3544 = vcmp.gt.f32.partialorder %v3224, 20.0
      %vm3545 = vcmp.gt.f32.partialorder %v3225, 20.0
      %vm3546 = vcmp.gt.f32.partialorder %v3226, 20.0
      %vm3547 = vcmp.gt.f32.partialorder %v3227, 20.0
      %vm3548 = vcmp.gt.f32.partialorder %v3228, 20.0
      %vm3549 = vcmp.gt.f32.partialorder %v3229, 20.0
      %vm3550 = vcmp.gt.f32.partialorder %v3230, 20.0
      %vm3551 = vcmp.gt.f32.partialorder %v3231, 20.0
      %vm3552 = vcmp.gt.f32.partialorder %v3232, 20.0
      %vm3553 = vcmp.gt.f32.partialorder %v3233, 20.0
      %vm3554 = vcmp.gt.f32.partialorder %v3234, 20.0
      %vm3555 = vcmp.gt.f32.partialorder %v3235, 20.0
      %vm3556 = vcmp.gt.f32.partialorder %v3236, 20.0
      %vm3557 = vcmp.gt.f32.partialorder %v3237, 20.0
      %v3558 = vmul.f32 %v3206, %v3494
      %v3559 = vmul.f32 %v3207, %v3495
      %v3560 = vmul.f32 %v3208, %v3496
      %v3561 = vmul.f32 %v3209, %v3497
      %v3562 = vmul.f32 %v3210, %v3498
      %v3563 = vmul.f32 %v3211, %v3499
      %v3564 = vmul.f32 %v3212, %v3500
      %v3565 = vmul.f32 %v3213, %v3501
      %v3566 = vmul.f32 %v3214, %v3502
      %v3567 = vmul.f32 %v3215, %v3503
      %v3568 = vmul.f32 %v3216, %v3504
      %v3569 = vmul.f32 %v3217, %v3505
      %v3570 = vmul.f32 %v3218, %v3506
      %v3571 = vmul.f32 %v3219, %v3507
      %v3572 = vmul.f32 %v3220, %v3508
      %v3573 = vmul.f32 %v3221, %v3509
      %v3574 = vmul.f32 %v3222, %v3510
      %v3575 = vmul.f32 %v3223, %v3511
      %v3576 = vmul.f32 %v3224, %v3512
      %v3577 = vmul.f32 %v3225, %v3513
      %v3578 = vmul.f32 %v3226, %v3514
      %v3579 = vmul.f32 %v3227, %v3515
      %v3580 = vmul.f32 %v3228, %v3516
      %v3581 = vmul.f32 %v3229, %v3517
      %v3582 = vmul.f32 %v3230, %v3518
      %v3583 = vmul.f32 %v3231, %v3519
      %v3584 = vmul.f32 %v3232, %v3520
      %v3585 = vmul.f32 %v3233, %v3521
      %v3586 = vmul.f32 %v3234, %v3522
      %v3587 = vmul.f32 %v3235, %v3523
      %v3588 = vmul.f32 %v3236, %v3524
      %v3589 = vmul.f32 %v3237, %v3525
      %v3590 = vsel %vm3526, %v3206, %v3558
      %v3591 = vsel %vm3527, %v3207, %v3559
      %v3592 = vsel %vm3528, %v3208, %v3560
      %v3593 = vsel %vm3529, %v3209, %v3561
      %v3594 = vsel %vm3530, %v3210, %v3562
      %v3595 = vsel %vm3531, %v3211, %v3563
      %v3596 = vsel %vm3532, %v3212, %v3564
      %v3597 = vsel %vm3533, %v3213, %v3565
      %v3598 = vsel %vm3534, %v3214, %v3566
      %v3599 = vsel %vm3535, %v3215, %v3567
      %v3600 = vsel %vm3536, %v3216, %v3568
      %v3601 = vsel %vm3537, %v3217, %v3569
      %v3602 = vsel %vm3538, %v3218, %v3570
      %v3603 = vsel %vm3539, %v3219, %v3571
      %v3604 = vsel %vm3540, %v3220, %v3572
      %v3605 = vsel %vm3541, %v3221, %v3573
      %v3606 = vsel %vm3542, %v3222, %v3574
      %v3607 = vsel %vm3543, %v3223, %v3575
      %v3608 = vsel %vm3544, %v3224, %v3576
      %v3609 = vsel %vm3545, %v3225, %v3577
      %v3610 = vsel %vm3546, %v3226, %v3578
      %v3611 = vsel %vm3547, %v3227, %v3579
      %v3612 = vsel %vm3548, %v3228, %v3580
      %v3613 = vsel %vm3549, %v3229, %v3581
      %v3614 = vsel %vm3550, %v3230, %v3582
      %v3615 = vsel %vm3551, %v3231, %v3583
      %v3616 = vsel %vm3552, %v3232, %v3584
      %v3617 = vsel %vm3553, %v3233, %v3585
      %v3618 = vsel %vm3554, %v3234, %v3586
      %v3619 = vsel %vm3555, %v3235, %v3587
      %v3620 = vsel %vm3556, %v3236, %v3588
      %v3621 = vsel %vm3557, %v3237, %v3589
      %v3622 = vadd.f32 %v226, %v3590
      %v3623 = vadd.f32 %v227, %v3591
      %v3624 = vadd.f32 %v228, %v3592
      %v3625 = vadd.f32 %v229, %v3593
      %v3626 = vadd.f32 %v230, %v3594
      %v3627 = vadd.f32 %v231, %v3595
      %v3628 = vadd.f32 %v232, %v3596
      %v3629 = vadd.f32 %v233, %v3597
      %v3630 = vadd.f32 %v234, %v3598
      %v3631 = vadd.f32 %v235, %v3599
      %v3632 = vadd.f32 %v236, %v3600
      %v3633 = vadd.f32 %v237, %v3601
      %v3634 = vadd.f32 %v238, %v3602
      %v3635 = vadd.f32 %v239, %v3603
      %v3636 = vadd.f32 %v240, %v3604
      %v3637 = vadd.f32 %v241, %v3605
      %v3638 = vadd.f32 %v242, %v3606
      %v3639 = vadd.f32 %v243, %v3607
      %v3640 = vadd.f32 %v244, %v3608
      %v3641 = vadd.f32 %v245, %v3609
      %v3642 = vadd.f32 %v246, %v3610
      %v3643 = vadd.f32 %v247, %v3611
      %v3644 = vadd.f32 %v248, %v3612
      %v3645 = vadd.f32 %v249, %v3613
      %v3646 = vadd.f32 %v250, %v3614
      %v3647 = vadd.f32 %v251, %v3615
      %v3648 = vadd.f32 %v252, %v3616
      %v3649 = vadd.f32 %v253, %v3617
      %v3650 = vadd.f32 %v254, %v3618
      %v3651 = vadd.f32 %v255, %v3619
      %v3652 = vadd.f32 %v256, %v3620
      %v3653 = vadd.f32 %v257, %v3621
      %3654 = vst.msk [vmem:[%s224] sm:$0xff] %vm258, %v3622
      %3655 = vst.msk [vmem:[%s224 + $0x8] sm:$0xff] %vm258, %v3623
      %3656 = vst.msk [vmem:[%s224 + $0x10] sm:$0xff] %vm258, %v3624
      %3657 = vst.msk [vmem:[%s224 + $0x18] sm:$0xff] %vm258, %v3625
      %3658 = vst.msk [vmem:[%s224 + $0x20] sm:$0xff] %vm258, %v3626
      %3659 = vst.msk [vmem:[%s224 + $0x28] sm:$0xff] %vm258, %v3627
      %3660 = vst.msk [vmem:[%s224 + $0x30] sm:$0xff] %vm258, %v3628
      %3661 = vst.msk [vmem:[%s224 + $0x38] sm:$0xff] %vm258, %v3629
      %3662 = vst.msk [vmem:[%s224 + $0x40] sm:$0xff] %vm258, %v3630
      %3663 = vst.msk [vmem:[%s224 + $0x48] sm:$0xff] %vm258, %v3631
      %3664 = vst.msk [vmem:[%s224 + $0x50] sm:$0xff] %vm258, %v3632
      %3665 = vst.msk [vmem:[%s224 + $0x58] sm:$0xff] %vm258, %v3633
      %3666 = vst.msk [vmem:[%s224 + $0x60] sm:$0xff] %vm258, %v3634
      %3667 = vst.msk [vmem:[%s224 + $0x68] sm:$0xff] %vm258, %v3635
      %3668 = vst.msk [vmem:[%s224 + $0x70] sm:$0xff] %vm258, %v3636
      %3669 = vst.msk [vmem:[%s224 + $0x78] sm:$0xff] %vm258, %v3637
      %3670 = vst.msk [vmem:[%s224 + $0x80] sm:$0xff] %vm258, %v3638
      %3671 = vst.msk [vmem:[%s224 + $0x88] sm:$0xff] %vm258, %v3639
      %3672 = vst.msk [vmem:[%s224 + $0x90] sm:$0xff] %vm258, %v3640
      %3673 = vst.msk [vmem:[%s224 + $0x98] sm:$0xff] %vm258, %v3641
      %3674 = vst.msk [vmem:[%s224 + $0xa0] sm:$0xff] %vm258, %v3642
      %3675 = vst.msk [vmem:[%s224 + $0xa8] sm:$0xff] %vm258, %v3643
      %3676 = vst.msk [vmem:[%s224 + $0xb0] sm:$0xff] %vm258, %v3644
      %3677 = vst.msk [vmem:[%s224 + $0xb8] sm:$0xff] %vm258, %v3645
      %3678 = vst.msk [vmem:[%s224 + $0xc0] sm:$0xff] %vm258, %v3646
      %3679 = vst.msk [vmem:[%s224 + $0xc8] sm:$0xff] %vm258, %v3647
      %3680 = vst.msk [vmem:[%s224 + $0xd0] sm:$0xff] %vm258, %v3648
      %3681 = vst.msk [vmem:[%s224 + $0xd8] sm:$0xff] %vm258, %v3649
      %3682 = vst.msk [vmem:[%s224 + $0xe0] sm:$0xff] %vm258, %v3650
      %3683 = vst.msk [vmem:[%s224 + $0xe8] sm:$0xff] %vm258, %v3651
      %3684 = vst.msk [vmem:[%s224 + $0xf0] sm:$0xff] %vm258, %v3652
      %3685 = vst.msk [vmem:[%s224 + $0xf8] sm:$0xff] %vm258, %v3653
      %p3686 = scmp.lt.s32.totalorder %s16, 1
      %s3687 = scalar_select %p3686, %s16, 1
      %s3688 = smul.addr %s3687, 32
      %s3689 = smul.addr %s3688, 8
      %s3690 = scalar_lea.vmem %s5, %s3689
      // Predicated region
      $region41: #{tpu_custom_call.1} parent=39 // pred_check
        %p3691 = pneg %p144
      $region42: #{tpu_custom_call.1} parent=39 // pred_check_branch
        %3693 = sbr.rel (%p3691) target = $region44
      $region43: #{tpu_custom_call.1} parent=39 // pred_region
        _
      $region44: #{tpu_custom_call.1} parent=39 // pred_fallthru
        _
    $region40: #{tpu_custom_call.1} parent=5 // pred_fallthru
      _
    %p3694 = scmp.le.s32.totalorder 2, %s11
    // Predicated region
    $region45: #{tpu_custom_call.1} parent=5 // pred_check
      %p3695 = pneg %p3694
    $region46: #{tpu_custom_call.1} parent=5 // pred_check_branch
      %3697 = sbr.rel (%p3695) target = $region48
    $region47: #{tpu_custom_call.1} parent=5 // pred_region
      %s3698 = ssub.s32 %s11, 2
      // Predicated region
      $region49: #{tpu_custom_call.1} parent=47 // pred_check
        %p3699 = pneg %p150
      $region50: #{tpu_custom_call.1} parent=47 // pred_check_branch
        %3701 = sbr.rel (%p3699) target = $region52
      $region51: #{tpu_custom_call.1} parent=47 // pred_region
        %p3702 = scmp.lt.s32.totalorder %s17, 1
        %s3703 = scalar_select %p3702, %s17, 1
        %s3704 = smul.addr %s3703, 32
        %s3705 = smul.addr %s3704, 8
        %s3706 = scalar_lea.vmem %s5, %s3705
      $region52: #{tpu_custom_call.1} parent=47 // pred_fallthru
        _
    $region48: #{tpu_custom_call.1} parent=5 // pred_fallthru
      _
  $region6: #{tpu_custom_call.1} parent=0 // loop_footer
    %s15 = sadd.s32 1, %s11
  $region7: #{tpu_custom_call.1} parent=0 // loop_footer_branch
    %10 = sbr.rel target = $region3
  $region8: #{tpu_custom_call.1} parent=0 // loop_exit
    _

</llo_original>
